<compile_context>
chip_gen: v5e
topology: v5e:2x2
jax: 0.10.0
libtpu: 0.0.40
codegen_flags: <defaults>
</compile_context>

<pallas_src>
import numpy as np
import jax
import jax.numpy as jnp
from jax.experimental import pallas as pl
from jax.experimental.pallas import tpu as pltpu

NEG_SLOPE = 0.01      # PyTorch nn.LeakyReLU / F.leaky_relu default
KSIZE = 12
PAD = 4
TILE_N = 512          # fc1 output tile width (lane-dense; 2048 / 512 = 4 steps)


def _leaky(v):
    return jnp.where(v > 0, v, NEG_SLOPE * v)


# ------------------------------ fused kernel -------------------------------

def _fused_forward_kernel(x_ref, m1_ref, b1_ref, m2_ref, b2_ref, m3_ref, b3_ref,
                          w1_ref, c1_ref, w2_ref, c2_ref,
                          out_ref, act_ref, acc_ref):
    t = pl.program_id(0)

    # Step 0: run the (linearised) conv/pool stack once; result stays in VMEM.
    @pl.when(t == 0)
    def _():
        h = jnp.dot(x_ref[...].astype(jnp.bfloat16), m1_ref[...],
                    preferred_element_type=jnp.float32) + b1_ref[...]
        h = _leaky(h)                                   # conv1 + LeakyReLU
        h = jnp.dot(h.astype(jnp.bfloat16), m2_ref[...],
                    preferred_element_type=jnp.float32) + b2_ref[...]
        h = _leaky(h)                                   # conv2 + LeakyReLU
        h = jnp.dot(h.astype(jnp.bfloat16), m3_ref[...],
                    preferred_element_type=jnp.float32) + b3_ref[...]
        h = _leaky(h)                                   # conv3 + AvgPool2d(2,1) + LeakyReLU
        act_ref[...] = h.astype(act_ref.dtype)          # (N, 576) bf16, NCHW-flatten order
        acc_ref[...] = jnp.zeros_like(acc_ref)

    # Every step: one lane-dense fc1 tile + LeakyReLU + partial fc2 accumulate.
    h = jnp.dot(act_ref[...], w1_ref[...],
                preferred_element_type=jnp.float32) + c1_ref[...]
    h = _leaky(h)
    acc_ref[...] += jnp.dot(h.astype(jnp.bfloat16), w2_ref[...],
                            preferred_element_type=jnp.float32)

    # Last step: fc2 bias + softmax epilogue, single (N, 2) store.
    @pl.when(t == pl.num_programs(0) - 1)
    def _():
        # TODO(synk): nn.Dropout(p=0.2) is the identity in eval mode; stochastic
        # training-mode dropout is not implemented here.
        z = acc_ref[...] + c2_ref[...]
        z = z - jnp.max(z, axis=1, keepdims=True)
        e = jnp.exp(z)
        out_ref[...] = (e / jnp.sum(e, axis=1, keepdims=True)).astype(out_ref.dtype)


# --------------------------- forward-pass wrapper ---------------------------

def rawhammer_forward(prep, x):
    n = x.shape[0]
    x2 = x.reshape(n, -1).astype(jnp.float32)     # NCHW flatten of the input
    d_in = prep["m1"].shape[0]
    d1 = prep["m1"].shape[1]
    d2 = prep["m2"].shape[1]
    d3 = prep["m3"].shape[1]
    n_fc1 = prep["fc1_w"].shape[1]
    grid = (n_fc1 // TILE_N,)

    def const2d(shape):
        return pl.BlockSpec(shape, lambda t: (0, 0))

    return pl.pallas_call(
        _fused_forward_kernel,
        out_shape=jax.ShapeDtypeStruct((n, 2), jnp.float32),
        grid_spec=pltpu.PrefetchScalarGridSpec(
            num_scalar_prefetch=0,
            grid=grid,
            in_specs=[
                const2d((n, d_in)),                            # flattened input
                const2d((d_in, d1)), const2d((1, d1)),         # conv1 as matmul + bias
                const2d((d1, d2)), const2d((1, d2)),           # conv2 as matmul + bias
                const2d((d2, d3)), const2d((1, d3)),           # conv3 + avgpool + bias
                pl.BlockSpec((d3, TILE_N), lambda t: (0, t)),  # fc1 weight tile (bf16)
                pl.BlockSpec((1, TILE_N), lambda t: (0, t)),   # fc1 bias tile
                pl.BlockSpec((TILE_N, 2), lambda t: (t, 0)),   # fc2 weight tile (bf16)
                const2d((1, 2)),                               # fc2 bias
            ],
            out_specs=pl.BlockSpec((n, 2), lambda t: (0, 0)),
            scratch_shapes=[
                pltpu.VMEM((n, d3), jnp.bfloat16),  # pooled/flattened activation (fc1 operand)
                pltpu.VMEM((n, 2), jnp.float32),    # fc2 accumulator
            ],
        ),
        compiler_params=pltpu.CompilerParams(
            dimension_semantics=("arbitrary",),     # fc2 accumulates across fc1 tiles
        ),
    )(x2, prep["m1"], prep["b1"], prep["m2"], prep["b2"], prep["m3"], prep["b3"],
      prep["fc1_w"], prep["fc1_b"], prep["fc2_w"], prep["fc2_b"])


# -------------------- offline (init-time) weight preparation ----------------

def _conv_to_matrix(w, h_in, w_in, pad):
    """Dense (Cin*H*W, Cout*Ho*Wo) operator equivalent to Conv2d(stride=1, pad),
    acting on / producing NCHW-flattened vectors."""
    cout, cin, k, _ = w.shape
    h_out = h_in + 2 * pad - k + 1
    w_out = w_in + 2 * pad - k + 1
    m = np.zeros((cin, h_in, w_in, cout, h_out, w_out), dtype=np.float32)
    wt = np.transpose(w, (1, 0, 2, 3))            # (Cin, Cout, k, k)
    for di in range(k):
        i_idx = np.arange(h_out)
        h_idx = i_idx + di - pad
        ok_h = (h_idx >= 0) & (h_idx < h_in)
        ii, hh = i_idx[ok_h], h_idx[ok_h]
        for dj in range(k):
            j_idx = np.arange(w_out)
            w_idx = j_idx + dj - pad
            ok_w = (w_idx >= 0) & (w_idx < w_in)
            jj, ww = j_idx[ok_w], w_idx[ok_w]
            if ii.size == 0 or jj.size == 0:
                continue
            m[:, hh[:, None], ww[None, :], :, ii[:, None], jj[None, :]] += wt[:, :, di, dj]
    return m.reshape(cin * h_in * w_in, cout * h_out * w_out), h_out, w_out


def _avgpool2_s1_matrix(c, h_in, w_in):
    """Dense operator for nn.AvgPool2d(kernel_size=2, stride=1) on NCHW-flattened vectors."""
    h_out, w_out = h_in - 1, w_in - 1
    m = np.zeros((c, h_in, w_in, c, h_out, w_out), dtype=np.float32)
    i_idx = np.arange(h_out)
    j_idx = np.arange(w_out)
    for ci in range(c):
        for pi in range(2):
            for pj in range(2):
                m[ci, (i_idx + pi)[:, None], (j_idx + pj)[None, :], ci,
                  i_idx[:, None], j_idx[None, :]] += 0.25
    return m.reshape(c * h_in * w_in, c * h_out * w_out), h_out, w_out


def init_params(key):
    """Synthetic parameters matching the PyTorch module's tensor shapes.
    With 16x16 inputs: conv1->13, conv2->10, conv3->7, pool->6, so the
    LazyLinear fc1 sees in_features = 16*6*6 = 576."""
    ks = jax.random.split(key, 10)

    def w(k, shape, scale=0.05):
        return (scale * jax.random.normal(k, shape)).astype(jnp.float32)

    return {
        "conv1_w": w(ks[0], (4, 1, KSIZE, KSIZE)),
        "conv1_b": w(ks[1], (4,)),
        "conv2_w": w(ks[2], (8, 4, KSIZE, KSIZE)),
        "conv2_b": w(ks[3], (8,)),
        "conv3_w": w(ks[4], (16, 8, KSIZE, KSIZE)),
        "conv3_b": w(ks[5], (16,)),
        "fc1_w": w(ks[6], (576, 2048), 0.02),
        "fc1_b": w(ks[7], (2048,)),
        "fc2_w": w(ks[8], (2048, 2), 0.02),
        "fc2_b": w(ks[9], (2,)),
    }


def prepare_params(params, h_in=16, w_in=16):
    """One-time offline linearisation of conv1/conv2/(conv3+avgpool) into
    dense matmul operators, bf16 cast of all matmul weights, bias expansion."""
    cw1 = np.asarray(params["conv1_w"]); cb1 = np.asarray(params["conv1_b"])
    cw2 = np.asarray(params["conv2_w"]); cb2 = np.asarray(params["conv2_b"])
    cw3 = np.asarray(params["conv3_w"]); cb3 = np.asarray(params["conv3_b"])

    m1, h1, w1 = _conv_to_matrix(cw1, h_in, w_in, PAD)        # 16 -> 13
    m2, h2, w2 = _conv_to_matrix(cw2, h1, w1, PAD)            # 13 -> 10
    m3c, h3, w3 = _conv_to_matrix(cw3, h2, w2, PAD)           # 10 -> 7
    mp, hp, wp = _avgpool2_s1_matrix(cw3.shape[0], h3, w3)    # 7 -> 6
    m3 = m3c @ mp                                             # conv3 + avgpool fused

    b1v = np.repeat(cb1, h1 * w1)[None, :].astype(np.float32)
    b2v = np.repeat(cb2, h2 * w2)[None, :].astype(np.float32)
    b3v = np.repeat(cb3, hp * wp)[None, :].astype(np.float32)  # pool of constant bias == bias

    assert m3.shape[1] == params["fc1_w"].shape[0]            # LazyLinear in_features

    return {
        "m1": jnp.asarray(m1, jnp.bfloat16),
        "b1": jnp.asarray(b1v, jnp.float32),
        "m2": jnp.asarray(m2, jnp.bfloat16),
        "b2": jnp.asarray(b2v, jnp.float32),
        "m3": jnp.asarray(m3, jnp.bfloat16),
        "b3": jnp.asarray(b3v, jnp.float32),
        "fc1_w": jnp.asarray(params["fc1_w"], jnp.bfloat16),
        "fc1_b": jnp.asarray(np.asarray(params["fc1_b"])[None, :], jnp.float32),
        "fc2_w": jnp.asarray(params["fc2_w"], jnp.bfloat16),
        "fc2_b": jnp.asarray(np.asarray(params["fc2_b"])[None, :], jnp.float32),
    }


# ------------------------- pure-JAX f32 reference ---------------------------

def reference_forward(params, x):
    """Verbatim (f32) implementation of the PyTorch forward for validation."""
    def conv(v, w, b):
        y = jax.lax.conv_general_dilated(
            v, w, window_strides=(1, 1), padding=[(PAD, PAD), (PAD, PAD)],
            dimension_numbers=("NCHW", "OIHW", "NCHW"))
        return y + b.reshape(1, -1, 1, 1)

    y = _leaky(conv(x, params["conv1_w"], params["conv1_b"]))
    y = _leaky(conv(y, params["conv2_w"], params["conv2_b"]))
    y = conv(y, params["conv3_w"], params["conv3_b"])
    y = 0.25 * (y[:, :, :-1, :-1] + y[:, :, 1:, :-1]
                + y[:, :, :-1, 1:] + y[:, :, 1:, 1:])          # AvgPool2d(2, 1)
    y = _leaky(y)
    y = y.reshape(y.shape[0], -1)
    y = _leaky(y @ params["fc1_w"] + params["fc1_b"])
    y = y @ params["fc2_w"] + params["fc2_b"]
    y = y.reshape(-1, 2)
    y = y - jnp.max(y, axis=1, keepdims=True)
    e = jnp.exp(y)
    return e / jnp.sum(e, axis=1, keepdims=True)


# ----------------------------------- main -----------------------------------

if __name__ == "__main__":
    key = jax.random.PRNGKey(0)
    xk, pk = jax.random.split(key)
    x = jax.random.normal(xk, (2, 1, 16, 16), dtype=jnp.float32)   # NCHW input
    params = init_params(pk)
    prep = prepare_params(params)            # one-time offline weight preparation

    fwd = jax.jit(rawhammer_forward)
    out = jax.block_until_ready(fwd(prep, x))

    assert out.shape == (2, 2), out.shape
    assert bool(jnp.all(jnp.isfinite(out)))
    # softmax rows sum to 1 (normalisation done in f32 inside the kernel)
    assert bool(jnp.allclose(jnp.sum(out, axis=1), 1.0, atol=1e-5))

    # Validate against the pure-JAX f32 reference (bf16 matmul operands => loose tol).
    ref = jax.block_until_ready(reference_forward(params, x))
    assert bool(jnp.allclose(out, ref, atol=3e-2)), (np.asarray(out), np.asarray(ref))

    print("KERNEL_OK")
</pallas_src>

<mosaic_0001>
module attributes {stable_mosaic.version = 11 : i64} {
  func.func @_fused_forward_kernel(%arg0: i32, %arg1: memref<2x256xf32, #tpu.memory_space<vmem>>, %arg2: memref<256x676xbf16, #tpu.memory_space<vmem>>, %arg3: memref<1x676xf32, #tpu.memory_space<vmem>>, %arg4: memref<676x800xbf16, #tpu.memory_space<vmem>>, %arg5: memref<1x800xf32, #tpu.memory_space<vmem>>, %arg6: memref<800x576xbf16, #tpu.memory_space<vmem>>, %arg7: memref<1x576xf32, #tpu.memory_space<vmem>>, %arg8: memref<576x512xbf16, #tpu.memory_space<vmem>>, %arg9: memref<1x512xf32, #tpu.memory_space<vmem>>, %arg10: memref<512x2xbf16, #tpu.memory_space<vmem>>, %arg11: memref<1x2xf32, #tpu.memory_space<vmem>>, %arg12: memref<2x2xf32, #tpu.memory_space<vmem>>, %arg13: memref<2x576xbf16, #tpu.memory_space<vmem>>, %arg14: memref<2x2xf32, #tpu.memory_space<vmem>>) attributes {dimension_semantics = [#tpu.dimension_semantics<arbitrary>], iteration_bounds = array<i64: 4>, scalar_prefetch = 0 : i64, scratch_operands = 2 : i64, tpu.core_type = #tpu.core_type<tc>, window_params = [{pipeline_mode = #tpu.pipeline_mode<synchronous>, transform_indices = @transform_0, window_bounds = array<i64: 2, 256>}, {pipeline_mode = #tpu.pipeline_mode<synchronous>, transform_indices = @transform_1, window_bounds = array<i64: 256, 676>}, {pipeline_mode = #tpu.pipeline_mode<synchronous>, transform_indices = @transform_2, window_bounds = array<i64: 1, 676>}, {pipeline_mode = #tpu.pipeline_mode<synchronous>, transform_indices = @transform_3, window_bounds = array<i64: 676, 800>}, {pipeline_mode = #tpu.pipeline_mode<synchronous>, transform_indices = @transform_4, window_bounds = array<i64: 1, 800>}, {pipeline_mode = #tpu.pipeline_mode<synchronous>, transform_indices = @transform_5, window_bounds = array<i64: 800, 576>}, {pipeline_mode = #tpu.pipeline_mode<synchronous>, transform_indices = @transform_6, window_bounds = array<i64: 1, 576>}, {transform_indices = @transform_7, window_bounds = array<i64: 576, 512>}, {transform_indices = @transform_8, window_bounds = array<i64: 1, 512>}, {transform_indices = @transform_9, window_bounds = array<i64: 512, 2>}, {pipeline_mode = #tpu.pipeline_mode<synchronous>, transform_indices = @transform_10, window_bounds = array<i64: 1, 2>}, {pipeline_mode = #tpu.pipeline_mode<synchronous>, transform_indices = @transform_11, window_bounds = array<i64: 2, 2>}]} {
    %c0_i32 = arith.constant 0 : i32
    %0 = arith.cmpi eq, %arg0, %c0_i32 : i32
    %1 = arith.extui %0 : i1 to i32
    %c0_i32_0 = arith.constant 0 : i32
    %2 = arith.cmpi ne, %1, %c0_i32_0 : i32
    scf.if %2 {
      %c0_16 = arith.constant 0 : index
      %c0_17 = arith.constant 0 : index
      %23 = vector.load %arg1[%c0_16, %c0_17] : memref<2x256xf32, #tpu.memory_space<vmem>>, vector<2x256xf32>
      %24 = arith.truncf %23 : vector<2x256xf32> to vector<2x256xbf16>
      %c0_18 = arith.constant 0 : index
      %c0_19 = arith.constant 0 : index
      %25 = vector.load %arg2[%c0_18, %c0_19] : memref<256x676xbf16, #tpu.memory_space<vmem>>, vector<256x676xbf16>
      %cst_20 = arith.constant dense<0.000000e+00> : vector<2x676xf32>
      %26 = tpu.matmul %24, %25, %cst_20 {dimension_numbers = #tpu.dot_dimension_numbers<[1], [0], [0], [1], [0, 0, 1, 1], [], []>} : vector<2x256xbf16>, vector<256x676xbf16>, vector<2x676xf32> -> vector<2x676xf32>
      %c0_21 = arith.constant 0 : index
      %c0_22 = arith.constant 0 : index
      %27 = vector.load %arg3[%c0_21, %c0_22] : memref<1x676xf32, #tpu.memory_space<vmem>>, vector<1x676xf32>
      %28 = vector.broadcast %27 : vector<1x676xf32> to vector<2x676xf32>
      %29 = arith.addf %26, %28 : vector<2x676xf32>
      %cst_23 = arith.constant 0.000000e+00 : f32
      %30 = vector.broadcast %cst_23 : f32 to vector<2x676xf32>
      %31 = arith.cmpf ogt, %29, %30 : vector<2x676xf32>
      %cst_24 = arith.constant 0.00999999977 : f32
      %32 = vector.broadcast %cst_24 : f32 to vector<2x676xf32>
      %33 = arith.mulf %32, %29 : vector<2x676xf32>
      %34 = arith.select %31, %29, %33 : vector<2x676xi1>, vector<2x676xf32>
      %35 = arith.truncf %34 : vector<2x676xf32> to vector<2x676xbf16>
      %c0_25 = arith.constant 0 : index
      %c0_26 = arith.constant 0 : index
      %36 = vector.load %arg4[%c0_25, %c0_26] : memref<676x800xbf16, #tpu.memory_space<vmem>>, vector<676x800xbf16>
      %cst_27 = arith.constant dense<0.000000e+00> : vector<2x800xf32>
      %37 = tpu.matmul %35, %36, %cst_27 {dimension_numbers = #tpu.dot_dimension_numbers<[1], [0], [0], [1], [0, 0, 1, 1], [], []>} : vector<2x676xbf16>, vector<676x800xbf16>, vector<2x800xf32> -> vector<2x800xf32>
      %c0_28 = arith.constant 0 : index
      %c0_29 = arith.constant 0 : index
      %38 = vector.load %arg5[%c0_28, %c0_29] : memref<1x800xf32, #tpu.memory_space<vmem>>, vector<1x800xf32>
      %39 = vector.broadcast %38 : vector<1x800xf32> to vector<2x800xf32>
      %40 = arith.addf %37, %39 : vector<2x800xf32>
      %cst_30 = arith.constant 0.000000e+00 : f32
      %41 = vector.broadcast %cst_30 : f32 to vector<2x800xf32>
      %42 = arith.cmpf ogt, %40, %41 : vector<2x800xf32>
      %cst_31 = arith.constant 0.00999999977 : f32
      %43 = vector.broadcast %cst_31 : f32 to vector<2x800xf32>
      %44 = arith.mulf %43, %40 : vector<2x800xf32>
      %45 = arith.select %42, %40, %44 : vector<2x800xi1>, vector<2x800xf32>
      %46 = arith.truncf %45 : vector<2x800xf32> to vector<2x800xbf16>
      %c0_32 = arith.constant 0 : index
      %c0_33 = arith.constant 0 : index
      %47 = vector.load %arg6[%c0_32, %c0_33] : memref<800x576xbf16, #tpu.memory_space<vmem>>, vector<800x576xbf16>
      %cst_34 = arith.constant dense<0.000000e+00> : vector<2x576xf32>
      %48 = tpu.matmul %46, %47, %cst_34 {dimension_numbers = #tpu.dot_dimension_numbers<[1], [0], [0], [1], [0, 0, 1, 1], [], []>} : vector<2x800xbf16>, vector<800x576xbf16>, vector<2x576xf32> -> vector<2x576xf32>
      %c0_35 = arith.constant 0 : index
      %c0_36 = arith.constant 0 : index
      %49 = vector.load %arg7[%c0_35, %c0_36] : memref<1x576xf32, #tpu.memory_space<vmem>>, vector<1x576xf32>
      %50 = vector.broadcast %49 : vector<1x576xf32> to vector<2x576xf32>
      %51 = arith.addf %48, %50 : vector<2x576xf32>
      %cst_37 = arith.constant 0.000000e+00 : f32
      %52 = vector.broadcast %cst_37 : f32 to vector<2x576xf32>
      %53 = arith.cmpf ogt, %51, %52 : vector<2x576xf32>
      %cst_38 = arith.constant 0.00999999977 : f32
      %54 = vector.broadcast %cst_38 : f32 to vector<2x576xf32>
      %55 = arith.mulf %54, %51 : vector<2x576xf32>
      %56 = arith.select %53, %51, %55 : vector<2x576xi1>, vector<2x576xf32>
      %57 = arith.truncf %56 : vector<2x576xf32> to vector<2x576xbf16>
      %c0_39 = arith.constant 0 : index
      %c0_40 = arith.constant 0 : index
      %58 = vector.load %arg13[%c0_39, %c0_40] : memref<2x576xbf16, #tpu.memory_space<vmem>>, vector<2x576xbf16>
      tpu.vector_store %arg13[%c0_39, %c0_40], %57 {strides = array<i32>} : memref<2x576xbf16, #tpu.memory_space<vmem>>, vector<2x576xbf16>,
      %cst_41 = arith.constant 0.000000e+00 : f32
      %59 = vector.broadcast %cst_41 : f32 to vector<2x2xf32>
      %c0_42 = arith.constant 0 : index
      %c0_43 = arith.constant 0 : index
      %60 = vector.load %arg14[%c0_42, %c0_43] : memref<2x2xf32, #tpu.memory_space<vmem>>, vector<2x2xf32>
      tpu.vector_store %arg14[%c0_42, %c0_43], %59 {strides = array<i32>} : memref<2x2xf32, #tpu.memory_space<vmem>>, vector<2x2xf32>,
    } else {
    }
    %c0 = arith.constant 0 : index
    %c0_1 = arith.constant 0 : index
    %3 = vector.load %arg13[%c0, %c0_1] : memref<2x576xbf16, #tpu.memory_space<vmem>>, vector<2x576xbf16>
    %c0_2 = arith.constant 0 : index
    %c0_3 = arith.constant 0 : index
    %4 = vector.load %arg8[%c0_2, %c0_3] : memref<576x512xbf16, #tpu.memory_space<vmem>>, vector<576x512xbf16>
    %cst = arith.constant dense<0.000000e+00> : vector<2x512xf32>
    %5 = tpu.matmul %3, %4, %cst {dimension_numbers = #tpu.dot_dimension_numbers<[1], [0], [0], [1], [0, 0, 1, 1], [], []>} : vector<2x576xbf16>, vector<576x512xbf16>, vector<2x512xf32> -> vector<2x512xf32>
    %c0_4 = arith.constant 0 : index
    %c0_5 = arith.constant 0 : index
    %6 = vector.load %arg9[%c0_4, %c0_5] : memref<1x512xf32, #tpu.memory_space<vmem>>, vector<1x512xf32>
    %7 = vector.broadcast %6 : vector<1x512xf32> to vector<2x512xf32>
    %8 = arith.addf %5, %7 : vector<2x512xf32>
    %cst_6 = arith.constant 0.000000e+00 : f32
    %9 = vector.broadcast %cst_6 : f32 to vector<2x512xf32>
    %10 = arith.cmpf ogt, %8, %9 : vector<2x512xf32>
    %cst_7 = arith.constant 0.00999999977 : f32
    %11 = vector.broadcast %cst_7 : f32 to vector<2x512xf32>
    %12 = arith.mulf %11, %8 : vector<2x512xf32>
    %13 = arith.select %10, %8, %12 : vector<2x512xi1>, vector<2x512xf32>
    %c0_8 = arith.constant 0 : index
    %c0_9 = arith.constant 0 : index
    %14 = vector.load %arg14[%c0_8, %c0_9] : memref<2x2xf32, #tpu.memory_space<vmem>>, vector<2x2xf32>
    %15 = arith.truncf %13 : vector<2x512xf32> to vector<2x512xbf16>
    %c0_10 = arith.constant 0 : index
    %c0_11 = arith.constant 0 : index
    %16 = vector.load %arg10[%c0_10, %c0_11] : memref<512x2xbf16, #tpu.memory_space<vmem>>, vector<512x2xbf16>
    %cst_12 = arith.constant dense<0.000000e+00> : vector<2x2xf32>
    %17 = tpu.matmul %15, %16, %cst_12 {dimension_numbers = #tpu.dot_dimension_numbers<[1], [0], [0], [1], [0, 0, 1, 1], [], []>} : vector<2x512xbf16>, vector<512x2xbf16>, vector<2x2xf32> -> vector<2x2xf32>
    %18 = arith.addf %14, %17 : vector<2x2xf32>
    %c0_13 = arith.constant 0 : index
    %c0_14 = arith.constant 0 : index
    %19 = vector.load %arg14[%c0_13, %c0_14] : memref<2x2xf32, #tpu.memory_space<vmem>>, vector<2x2xf32>
    tpu.vector_store %arg14[%c0_13, %c0_14], %18 {strides = array<i32>} : memref<2x2xf32, #tpu.memory_space<vmem>>, vector<2x2xf32>,
    %c3_i32 = arith.constant 3 : i32
    %20 = arith.cmpi eq, %arg0, %c3_i32 : i32
    %21 = arith.extui %20 : i1 to i32
    %c0_i32_15 = arith.constant 0 : i32
    %22 = arith.cmpi ne, %21, %c0_i32_15 : i32
    scf.if %22 {
      %c0_16 = arith.constant 0 : index
      %c0_17 = arith.constant 0 : index
      %23 = vector.load %arg14[%c0_16, %c0_17] : memref<2x2xf32, #tpu.memory_space<vmem>>, vector<2x2xf32>
      %c0_18 = arith.constant 0 : index
      %c0_19 = arith.constant 0 : index
      %24 = vector.load %arg11[%c0_18, %c0_19] : memref<1x2xf32, #tpu.memory_space<vmem>>, vector<1x2xf32>
      %25 = vector.broadcast %24 : vector<1x2xf32> to vector<2x2xf32>
      %26 = arith.addf %23, %25 : vector<2x2xf32>
      %cst_20 = arith.constant dense<0xFF800000> : vector<2xf32>
      %27 = vector.multi_reduction <maximumf>, %26, %cst_20 [1] : vector<2x2xf32> to vector<2xf32>
      %28 = vector.shape_cast %27 : vector<2xf32> to vector<2x1xf32>
      %29 = vector.broadcast %28 : vector<2x1xf32> to vector<2x2xf32>
      %30 = arith.subf %26, %29 : vector<2x2xf32>
      %31 = math.exp %30 : vector<2x2xf32>
      %cst_21 = arith.constant dense<0.000000e+00> : vector<2xf32>
      %32 = vector.multi_reduction <add>, %31, %cst_21 [1] : vector<2x2xf32> to vector<2xf32>
      %33 = vector.shape_cast %32 : vector<2xf32> to vector<2x1xf32>
      %34 = vector.broadcast %33 : vector<2x1xf32> to vector<2x2xf32>
      %35 = arith.divf %31, %34 : vector<2x2xf32>
      %c0_22 = arith.constant 0 : index
      %c0_23 = arith.constant 0 : index
      %36 = vector.load %arg12[%c0_22, %c0_23] : memref<2x2xf32, #tpu.memory_space<vmem>>, vector<2x2xf32>
      tpu.vector_store %arg12[%c0_22, %c0_23], %35 {strides = array<i32>} : memref<2x2xf32, #tpu.memory_space<vmem>>, vector<2x2xf32>,
    } else {
    }
    return
  }
  func.func @transform_0(%arg0: i32) -> (i32, i32) {
    %c0_i32 = arith.constant 0 : i32
    %c0_i32_0 = arith.constant 0 : i32
    %c0_i32_1 = arith.constant 0 : i32
    return %c0_i32, %c0_i32_0 : i32, i32
  }
  func.func @transform_1(%arg0: i32) -> (i32, i32) {
    %c0_i32 = arith.constant 0 : i32
    %c0_i32_0 = arith.constant 0 : i32
    %c0_i32_1 = arith.constant 0 : i32
    return %c0_i32, %c0_i32_0 : i32, i32
  }
  func.func @transform_2(%arg0: i32) -> (i32, i32) {
    %c0_i32 = arith.constant 0 : i32
    %c0_i32_0 = arith.constant 0 : i32
    %c0_i32_1 = arith.constant 0 : i32
    return %c0_i32, %c0_i32_0 : i32, i32
  }
  func.func @transform_3(%arg0: i32) -> (i32, i32) {
    %c0_i32 = arith.constant 0 : i32
    %c0_i32_0 = arith.constant 0 : i32
    %c0_i32_1 = arith.constant 0 : i32
    return %c0_i32, %c0_i32_0 : i32, i32
  }
  func.func @transform_4(%arg0: i32) -> (i32, i32) {
    %c0_i32 = arith.constant 0 : i32
    %c0_i32_0 = arith.constant 0 : i32
    %c0_i32_1 = arith.constant 0 : i32
    return %c0_i32, %c0_i32_0 : i32, i32
  }
  func.func @transform_5(%arg0: i32) -> (i32, i32) {
    %c0_i32 = arith.constant 0 : i32
    %c0_i32_0 = arith.constant 0 : i32
    %c0_i32_1 = arith.constant 0 : i32
    return %c0_i32, %c0_i32_0 : i32, i32
  }
  func.func @transform_6(%arg0: i32) -> (i32, i32) {
    %c0_i32 = arith.constant 0 : i32
    %c0_i32_0 = arith.constant 0 : i32
    %c0_i32_1 = arith.constant 0 : i32
    return %c0_i32, %c0_i32_0 : i32, i32
  }
  func.func @transform_7(%arg0: i32) -> (i32, i32) {
    %c0_i32 = arith.constant 0 : i32
    %c0_i32_0 = arith.constant 0 : i32
    return %c0_i32, %arg0 : i32, i32
  }
  func.func @transform_8(%arg0: i32) -> (i32, i32) {
    %c0_i32 = arith.constant 0 : i32
    %c0_i32_0 = arith.constant 0 : i32
    return %c0_i32, %arg0 : i32, i32
  }
  func.func @transform_9(%arg0: i32) -> (i32, i32) {
    %c0_i32 = arith.constant 0 : i32
    %c0_i32_0 = arith.constant 0 : i32
    return %arg0, %c0_i32 : i32, i32
  }
  func.func @transform_10(%arg0: i32) -> (i32, i32) {
    %c0_i32 = arith.constant 0 : i32
    %c0_i32_0 = arith.constant 0 : i32
    %c0_i32_1 = arith.constant 0 : i32
    return %c0_i32, %c0_i32_0 : i32, i32
  }
  func.func @transform_11(%arg0: i32) -> (i32, i32) {
    %c0_i32 = arith.constant 0 : i32
    %c0_i32_0 = arith.constant 0 : i32
    %c0_i32_1 = arith.constant 0 : i32
    return %c0_i32, %c0_i32_0 : i32, i32
  }
}

</mosaic_0001>

<llo_original>
// kernel: rawhammer_forward.1
$region0: #{rawhammer_forward.1}
  #allocation0 [shape = 'u32[]', space=smem, size = 0x4, offset = 0x4, fixed_abs, tag = 'smem constant byte address 0x4 - core index']
  #allocation1 [shape = 'u32[72,128]{1,0:T(1,128)}', space=vmem, size = 0x9000, scoped, tag = 'internal scratch']
  #allocation2 [shape = 'bf16[2,576]{1,0:T(2,128)(2,1)}', space=vmem, size = 0xa00, scoped, tag = 'scratch operand']
  #allocation3 [shape = 'f32[2,2]{1,0:T(2,128)}', space=vmem, size = 0x400, scoped, tag = 'scratch operand']
  %s0 = inlined_call_operand.vmem [shape: f32[2,256], index: 0, kind: input, shape index: {}]
  %s1 = inlined_call_operand.vmem [shape: bf16[256,676], index: 1, kind: input, shape index: {}]
  %s2 = inlined_call_operand.hbm [shape: f32[1,676], index: 2, kind: input, shape index: {}]
  %s3 = inlined_call_operand.hbm [shape: bf16[676,800], index: 3, kind: input, shape index: {}]
  %s4 = inlined_call_operand.hbm [shape: f32[1,800], index: 4, kind: input, shape index: {}]
  %s5 = inlined_call_operand.hbm [shape: bf16[800,576], index: 5, kind: input, shape index: {}]
  %s6 = inlined_call_operand.hbm [shape: f32[1,576], index: 6, kind: input, shape index: {}]
  %s7 = inlined_call_operand.hbm [shape: bf16[576,2048], index: 7, kind: input, shape index: {}]
  %s8 = inlined_call_operand.hbm [shape: f32[1,2048], index: 8, kind: input, shape index: {}]
  %s9 = inlined_call_operand.vmem [shape: bf16[2048,2], index: 9, kind: input, shape index: {}]
  %s10 = inlined_call_operand.hbm [shape: f32[1,2], index: 10, kind: input, shape index: {}]
  %s11 = inlined_call_operand.hbm [shape: f32[2,2], index: 11, kind: output, shape index: {}]
  %s12 = sld [smem:[#allocation0]]
  $region117: #{rawhammer_forward.1} parent=0
    _
  %s14 = ssub.s32 1, %s12
  %s15 = scalar_select 0, %s14, %s12
  $region1: #{rawhammer_forward.1} parent=0
    #allocation4 [shape = 'u8[3072]{0}', space=vmem, size = 0xc00, scoped, tag = 'input window, operand 2, single buffered']
    #allocation5 [shape = 's32[2]{0}', space=sflag, size = 0x8, scoped, tag = 'scoped memory for rawhammer_forward.1']
    #allocation6 [shape = 's32[2]{0}', space=sflag, size = 0x8, scoped, tag = 'scoped memory for rawhammer_forward.1']
    #allocation7 [shape = 'u8[1218560]{0}', space=vmem, size = 0x129800, scoped, tag = 'input window, operand 3, single buffered']
    #allocation8 [shape = 's32[1]{0}', space=sflag, size = 0x4, scoped, tag = 'scoped memory for rawhammer_forward.1']
    #allocation9 [shape = 'u8[3584]{0}', space=vmem, size = 0x1000, scoped, tag = 'input window, operand 4, single buffered']
    #allocation10 [shape = 'u8[1024000]{0}', space=vmem, size = 0xfa000, scoped, tag = 'input window, operand 5, single buffered']
    #allocation11 [shape = 's32[1]{0}', space=sflag, size = 0x4, scoped, tag = 'scoped memory for rawhammer_forward.1']
    #allocation12 [shape = 'u8[2560]{0}', space=vmem, size = 0xc00, scoped, tag = 'input window, operand 6, single buffered']
    #allocation13 [shape = 'u8[1179648]{0}', space=vmem, size = 0x120000, scoped, tag = 'input window, operand 7']
    #allocation14 [shape = 's32[2]{0}', space=sflag, size = 0x8, scoped, tag = 'scoped memory for rawhammer_forward.1']
    #allocation15 [shape = 'u8[4096]{0}', space=vmem, size = 0x1000, scoped, tag = 'input window, operand 8']
    #allocation16 [shape = 'u8[512]{0}', space=vmem, size = 0x400, scoped, tag = 'input window, operand 10, single buffered']
    #allocation17 [shape = 's32[1]{0}', space=sflag, size = 0x4, scoped, tag = 'scoped memory for rawhammer_forward.1']
    #allocation18 [shape = 'u8[1024]{0}', space=vmem, size = 0x400, scoped, tag = 'output window, operand 0, single buffered']
    %16 = vsyncpa [#allocation5], 0
    %17 = vsyncpa [#allocation8], 0
    %18 = vsyncpa [#allocation11], 0
    %19 = vsyncpa [#allocation14], 0
    %s20 = scalar_lea.sflag [#allocation14], 1
    %21 = vsyncpa %s20, 0
    %22 = vsyncpa [#allocation17], 0
    %23 = vsyncpa [#allocation6], 0
    loop: start=0, step=1, limit=6
    $region2: #{rawhammer_forward.1} parent=1 // loop_pre_header
      _
    $region3: #{rawhammer_forward.1} parent=1 // loop_header
      %s25 = sphi 0, %s29
      %p26 = scmp.ge.s32.totalorder %s25, 6
      %s33 = sphi 0, %s33
      %s35 = sphi 0, %s33
      %s36 = sphi 0, %s35
      %s50 = sphi 0, %s36
      %s54 = sphi 0, %s54
      %s56 = sphi 0, %s54
      %s57 = sphi 0, %s56
      %s71 = sphi 0, %s57
      %s75 = sphi 0, %s75
      %s77 = sphi 0, %s75
      %s78 = sphi 0, %s77
      %s92 = sphi 0, %s78
      %s96 = sphi 0, %s96
      %s98 = sphi 0, %s96
      %s99 = sphi 0, %s98
      %s113 = sphi 0, %s99
      %s117 = sphi 0, %s117
      %s119 = sphi 0, %s117
      %s120 = sphi 0, %s119
      %s134 = sphi 0, %s120
      %s138 = sphi 0, %s138
      %s140 = sphi 0, %s138
      %s141 = sphi 0, %s140
      %s155 = sphi 0, %s141
      %s159 = sphi 0, %s159
      %s161 = sphi 0, %s159
      %s162 = sphi 0, %s161
      %s176 = sphi 0, %s162
      %s182 = sphi 0, %s184
      %s185 = sphi 0, %s182
      %s186 = sphi 0, %s185
      %s202 = sphi 0, %s186
      %s208 = sphi 0, %s210
      %s211 = sphi 0, %s208
      %s212 = sphi 0, %s211
      %s228 = sphi 0, %s212
      %s234 = sphi 0, %s236
      %s237 = sphi 0, %s234
      %s238 = sphi 0, %s237
      %s254 = sphi 0, %s238
      %s258 = sphi 0, %s258
      %s260 = sphi 0, %s258
      %s261 = sphi 0, %s260
      %s275 = sphi 0, %s261
      %s279 = sphi 0, %s279
      %s281 = sphi 0, %s279
      %s282 = sphi 0, %s281
      %s296 = sphi 0, %s282
    $region4: #{rawhammer_forward.1} parent=1 // loop_header_branch
      %28 = sbr.rel (%p26) target = $region8
    $region5: #{rawhammer_forward.1} parent=1 // loop_body
      %s30 = ssub.s32 %s25, 1
      %s31 = ssub.s32 %s25, 2
      %s32 = sadd.s32 %s25, 1
      %s34 = sadd.s32 %s33, 1
      %p37 = scmp.eq.s32.totalorder %s25, 3
      %p38 = scmp.ne.s32.totalorder %s33, %s35
      %p39 = scmp.eq.s32.totalorder %s25, 0
      %p40 = por %p38, %p39
      %p41 = scmp.ne.s32.totalorder %s33, %s35
      %p42 = scmp.eq.s32.totalorder %s30, 3
      %p43 = por %p41, %p42
      %p44 = scmp.ne.s32.totalorder %s35, %s36
      %p45 = scmp.eq.s32.totalorder %s30, 0
      %p46 = por %p44, %p45
      %p47 = scmp.ne.s32.totalorder %s35, %s36
      %p48 = scmp.eq.s32.totalorder %s31, 3
      %p49 = por %p47, %p48
      %p51 = scmp.ne.s32.totalorder %s36, %s50
      %p52 = scmp.eq.s32.totalorder %s31, 0
      %p53 = por %p51, %p52
      %s55 = sadd.s32 %s54, 1
      %p58 = scmp.eq.s32.totalorder %s25, 3
      %p59 = scmp.ne.s32.totalorder %s54, %s56
      %p60 = scmp.eq.s32.totalorder %s25, 0
      %p61 = por %p59, %p60
      %p62 = scmp.ne.s32.totalorder %s54, %s56
      %p63 = scmp.eq.s32.totalorder %s30, 3
      %p64 = por %p62, %p63
      %p65 = scmp.ne.s32.totalorder %s56, %s57
      %p66 = scmp.eq.s32.totalorder %s30, 0
      %p67 = por %p65, %p66
      %p68 = scmp.ne.s32.totalorder %s56, %s57
      %p69 = scmp.eq.s32.totalorder %s31, 3
      %p70 = por %p68, %p69
      %p72 = scmp.ne.s32.totalorder %s57, %s71
      %p73 = scmp.eq.s32.totalorder %s31, 0
      %p74 = por %p72, %p73
      %s76 = sadd.s32 %s75, 1
      %p79 = scmp.eq.s32.totalorder %s25, 3
      %p80 = scmp.ne.s32.totalorder %s75, %s77
      %p81 = scmp.eq.s32.totalorder %s25, 0
      %p82 = por %p80, %p81
      %p83 = scmp.ne.s32.totalorder %s75, %s77
      %p84 = scmp.eq.s32.totalorder %s30, 3
      %p85 = por %p83, %p84
      %p86 = scmp.ne.s32.totalorder %s77, %s78
      %p87 = scmp.eq.s32.totalorder %s30, 0
      %p88 = por %p86, %p87
      %p89 = scmp.ne.s32.totalorder %s77, %s78
      %p90 = scmp.eq.s32.totalorder %s31, 3
      %p91 = por %p89, %p90
      %p93 = scmp.ne.s32.totalorder %s78, %s92
      %p94 = scmp.eq.s32.totalorder %s31, 0
      %p95 = por %p93, %p94
      %s97 = sadd.s32 %s96, 1
      %p100 = scmp.eq.s32.totalorder %s25, 3
      %p101 = scmp.ne.s32.totalorder %s96, %s98
      %p102 = scmp.eq.s32.totalorder %s25, 0
      %p103 = por %p101, %p102
      %p104 = scmp.ne.s32.totalorder %s96, %s98
      %p105 = scmp.eq.s32.totalorder %s30, 3
      %p106 = por %p104, %p105
      %p107 = scmp.ne.s32.totalorder %s98, %s99
      %p108 = scmp.eq.s32.totalorder %s30, 0
      %p109 = por %p107, %p108
      %p110 = scmp.ne.s32.totalorder %s98, %s99
      %p111 = scmp.eq.s32.totalorder %s31, 3
      %p112 = por %p110, %p111
      %p114 = scmp.ne.s32.totalorder %s99, %s113
      %p115 = scmp.eq.s32.totalorder %s31, 0
      %p116 = por %p114, %p115
      %s118 = sadd.s32 %s117, 1
      %p121 = scmp.eq.s32.totalorder %s25, 3
      %p122 = scmp.ne.s32.totalorder %s117, %s119
      %p123 = scmp.eq.s32.totalorder %s25, 0
      %p124 = por %p122, %p123
      %p125 = scmp.ne.s32.totalorder %s117, %s119
      %p126 = scmp.eq.s32.totalorder %s30, 3
      %p127 = por %p125, %p126
      %p128 = scmp.ne.s32.totalorder %s119, %s120
      %p129 = scmp.eq.s32.totalorder %s30, 0
      %p130 = por %p128, %p129
      %p131 = scmp.ne.s32.totalorder %s119, %s120
      %p132 = scmp.eq.s32.totalorder %s31, 3
      %p133 = por %p131, %p132
      %p135 = scmp.ne.s32.totalorder %s120, %s134
      %p136 = scmp.eq.s32.totalorder %s31, 0
      %p137 = por %p135, %p136
      %s139 = sadd.s32 %s138, 1
      %p142 = scmp.eq.s32.totalorder %s25, 3
      %p143 = scmp.ne.s32.totalorder %s138, %s140
      %p144 = scmp.eq.s32.totalorder %s25, 0
      %p145 = por %p143, %p144
      %p146 = scmp.ne.s32.totalorder %s138, %s140
      %p147 = scmp.eq.s32.totalorder %s30, 3
      %p148 = por %p146, %p147
      %p149 = scmp.ne.s32.totalorder %s140, %s141
      %p150 = scmp.eq.s32.totalorder %s30, 0
      %p151 = por %p149, %p150
      %p152 = scmp.ne.s32.totalorder %s140, %s141
      %p153 = scmp.eq.s32.totalorder %s31, 3
      %p154 = por %p152, %p153
      %p156 = scmp.ne.s32.totalorder %s141, %s155
      %p157 = scmp.eq.s32.totalorder %s31, 0
      %p158 = por %p156, %p157
      %s160 = sadd.s32 %s159, 1
      %p163 = scmp.eq.s32.totalorder %s25, 3
      %p164 = scmp.ne.s32.totalorder %s159, %s161
      %p165 = scmp.eq.s32.totalorder %s25, 0
      %p166 = por %p164, %p165
      %p167 = scmp.ne.s32.totalorder %s159, %s161
      %p168 = scmp.eq.s32.totalorder %s30, 3
      %p169 = por %p167, %p168
      %p170 = scmp.ne.s32.totalorder %s161, %s162
      %p171 = scmp.eq.s32.totalorder %s30, 0
      %p172 = por %p170, %p171
      %p173 = scmp.ne.s32.totalorder %s161, %s162
      %p174 = scmp.eq.s32.totalorder %s31, 3
      %p175 = por %p173, %p174
      %p177 = scmp.ne.s32.totalorder %s162, %s176
      %p178 = scmp.eq.s32.totalorder %s31, 0
      %p179 = por %p177, %p178
      %s180 = ssub.s32 %s25, %s32
      %p181 = scmp.eq.s32.totalorder %s180, 0
      %s183 = sadd.s32 %s182, 1
      %s184 = scalar_select %p181, %s182, %s183
      %p187 = pneg %p181
      %p188 = scmp.eq.s32.totalorder %s25, 3
      %p189 = por %p187, %p188
      %p190 = scmp.ne.s32.totalorder %s182, %s185
      %p191 = scmp.eq.s32.totalorder %s25, 0
      %p192 = por %p190, %p191
      %p193 = scmp.ne.s32.totalorder %s182, %s185
      %p194 = scmp.eq.s32.totalorder %s30, 3
      %p195 = por %p193, %p194
      %p196 = scmp.ne.s32.totalorder %s185, %s186
      %p197 = scmp.eq.s32.totalorder %s30, 0
      %p198 = por %p196, %p197
      %p199 = scmp.ne.s32.totalorder %s185, %s186
      %p200 = scmp.eq.s32.totalorder %s31, 3
      %p201 = por %p199, %p200
      %p203 = scmp.ne.s32.totalorder %s186, %s202
      %p204 = scmp.eq.s32.totalorder %s31, 0
      %p205 = por %p203, %p204
      %s206 = ssub.s32 %s25, %s32
      %p207 = scmp.eq.s32.totalorder %s206, 0
      %s209 = sadd.s32 %s208, 1
      %s210 = scalar_select %p207, %s208, %s209
      %p213 = pneg %p207
      %p214 = scmp.eq.s32.totalorder %s25, 3
      %p215 = por %p213, %p214
      %p216 = scmp.ne.s32.totalorder %s208, %s211
      %p217 = scmp.eq.s32.totalorder %s25, 0
      %p218 = por %p216, %p217
      %p219 = scmp.ne.s32.totalorder %s208, %s211
      %p220 = scmp.eq.s32.totalorder %s30, 3
      %p221 = por %p219, %p220
      %p222 = scmp.ne.s32.totalorder %s211, %s212
      %p223 = scmp.eq.s32.totalorder %s30, 0
      %p224 = por %p222, %p223
      %p225 = scmp.ne.s32.totalorder %s211, %s212
      %p226 = scmp.eq.s32.totalorder %s31, 3
      %p227 = por %p225, %p226
      %p229 = scmp.ne.s32.totalorder %s212, %s228
      %p230 = scmp.eq.s32.totalorder %s31, 0
      %p231 = por %p229, %p230
      %s232 = ssub.s32 %s25, %s32
      %p233 = scmp.eq.s32.totalorder %s232, 0
      %s235 = sadd.s32 %s234, 1
      %s236 = scalar_select %p233, %s234, %s235
      %p239 = pneg %p233
      %p240 = scmp.eq.s32.totalorder %s25, 3
      %p241 = por %p239, %p240
      %p242 = scmp.ne.s32.totalorder %s234, %s237
      %p243 = scmp.eq.s32.totalorder %s25, 0
      %p244 = por %p242, %p243
      %p245 = scmp.ne.s32.totalorder %s234, %s237
      %p246 = scmp.eq.s32.totalorder %s30, 3
      %p247 = por %p245, %p246
      %p248 = scmp.ne.s32.totalorder %s237, %s238
      %p249 = scmp.eq.s32.totalorder %s30, 0
      %p250 = por %p248, %p249
      %p251 = scmp.ne.s32.totalorder %s237, %s238
      %p252 = scmp.eq.s32.totalorder %s31, 3
      %p253 = por %p251, %p252
      %p255 = scmp.ne.s32.totalorder %s238, %s254
      %p256 = scmp.eq.s32.totalorder %s31, 0
      %p257 = por %p255, %p256
      %s259 = sadd.s32 %s258, 1
      %p262 = scmp.eq.s32.totalorder %s25, 3
      %p263 = scmp.ne.s32.totalorder %s258, %s260
      %p264 = scmp.eq.s32.totalorder %s25, 0
      %p265 = por %p263, %p264
      %p266 = scmp.ne.s32.totalorder %s258, %s260
      %p267 = scmp.eq.s32.totalorder %s30, 3
      %p268 = por %p266, %p267
      %p269 = scmp.ne.s32.totalorder %s260, %s261
      %p270 = scmp.eq.s32.totalorder %s30, 0
      %p271 = por %p269, %p270
      %p272 = scmp.ne.s32.totalorder %s260, %s261
      %p273 = scmp.eq.s32.totalorder %s31, 3
      %p274 = por %p272, %p273
      %p276 = scmp.ne.s32.totalorder %s261, %s275
      %p277 = scmp.eq.s32.totalorder %s31, 0
      %p278 = por %p276, %p277
      %s280 = sadd.s32 %s279, 1
      %p283 = scmp.eq.s32.totalorder %s25, 3
      %p284 = scmp.ne.s32.totalorder %s279, %s281
      %p285 = scmp.eq.s32.totalorder %s25, 0
      %p286 = por %p284, %p285
      %p287 = scmp.ne.s32.totalorder %s279, %s281
      %p288 = scmp.eq.s32.totalorder %s30, 3
      %p289 = por %p287, %p288
      %p290 = scmp.ne.s32.totalorder %s281, %s282
      %p291 = scmp.eq.s32.totalorder %s30, 0
      %p292 = por %p290, %p291
      %p293 = scmp.ne.s32.totalorder %s281, %s282
      %p294 = scmp.eq.s32.totalorder %s31, 3
      %p295 = por %p293, %p294
      %p297 = scmp.ne.s32.totalorder %s282, %s296
      %p298 = scmp.eq.s32.totalorder %s31, 0
      %p299 = por %p297, %p298
      %p300 = scmp.le.s32.totalorder 1, %s25
      %p301 = scmp.lt.s32.totalorder %s25, 5
      %p302 = pnand %p300, %p301
      %p303 = pneg %p302
      // Predicated region
      $region9: #{rawhammer_forward.1} parent=5 // pred_check
        _
      $region10: #{rawhammer_forward.1} parent=5 // pred_check_branch
        %305 = sbr.rel (%p302) target = $region12
      $region11: #{rawhammer_forward.1} parent=5 // pred_region
        %s306 = ssub.s32 %s25, 1
        // Predicated region
        $region13: #{rawhammer_forward.1} parent=11 // pred_check
          %p307 = pneg %p46
        $region14: #{rawhammer_forward.1} parent=11 // pred_check_branch
          %309 = sbr.rel (%p307) target = $region16
        $region15: #{rawhammer_forward.1} parent=11 // pred_region
          _
        $region16: #{rawhammer_forward.1} parent=11 // pred_fallthru
          _
        // Predicated region
        $region17: #{rawhammer_forward.1} parent=11 // pred_check
          %p310 = pneg %p67
        $region18: #{rawhammer_forward.1} parent=11 // pred_check_branch
          %312 = sbr.rel (%p310) target = $region20
        $region19: #{rawhammer_forward.1} parent=11 // pred_region
          _
        $region20: #{rawhammer_forward.1} parent=11 // pred_fallthru
          _
        // Predicated region
        $region21: #{rawhammer_forward.1} parent=11 // pred_check
          %p313 = pneg %p88
        $region22: #{rawhammer_forward.1} parent=11 // pred_check_branch
          %315 = sbr.rel (%p313) target = $region24
        $region23: #{rawhammer_forward.1} parent=11 // pred_region
          %317 = vsyncadd [#allocation5], 0
          %s319 = sshll.u32 %s2, 4
          %s320 = int_to_ptr.hbm [resolvable:$true] %s319
          %s321 = sshll.u32 [#allocation4], 4
          %s322 = int_to_ptr.vmem [resolvable:$true] %s321
          %324 = dma.hbm_to_vmem [thread:$0]  %s320, 96, %s322, [#allocation5]
        $region24: #{rawhammer_forward.1} parent=11 // pred_fallthru
          _
        // Predicated region
        $region25: #{rawhammer_forward.1} parent=11 // pred_check
          %p325 = pneg %p109
        $region26: #{rawhammer_forward.1} parent=11 // pred_check_branch
          %327 = sbr.rel (%p325) target = $region28
        $region27: #{rawhammer_forward.1} parent=11 // pred_region
          %329 = vsyncadd [#allocation8], 0
          %s330 = sshll.u32 %s3, 4
          %s331 = int_to_ptr.hbm [resolvable:$true] %s330
          %s332 = sshll.u32 [#allocation7], 4
          %s333 = int_to_ptr.vmem [resolvable:$true] %s332
          %338 = dma.hbm_to_vmem [thread:$0]  %s331, 38080, %s333, [#allocation8], 448, 448, 28
        $region28: #{rawhammer_forward.1} parent=11 // pred_fallthru
          _
        // Predicated region
        $region29: #{rawhammer_forward.1} parent=11 // pred_check
          %p339 = pneg %p130
        $region30: #{rawhammer_forward.1} parent=11 // pred_check_branch
          %341 = sbr.rel (%p339) target = $region32
        $region31: #{rawhammer_forward.1} parent=11 // pred_region
          %343 = vsyncadd [#allocation8], 0
          %s345 = sshll.u32 %s4, 4
          %s346 = int_to_ptr.hbm [resolvable:$true] %s345
          %s347 = sshll.u32 [#allocation9], 4
          %s348 = int_to_ptr.vmem [resolvable:$true] %s347
          %350 = dma.hbm_to_vmem [thread:$0]  %s346, 112, %s348, [#allocation8]
        $region32: #{rawhammer_forward.1} parent=11 // pred_fallthru
          _
        // Predicated region
        $region33: #{rawhammer_forward.1} parent=11 // pred_check
          %p351 = pneg %p151
        $region34: #{rawhammer_forward.1} parent=11 // pred_check_branch
          %353 = sbr.rel (%p351) target = $region36
        $region35: #{rawhammer_forward.1} parent=11 // pred_region
          %355 = vsyncadd [#allocation11], 0
          %s356 = sshll.u32 %s5, 4
          %s357 = int_to_ptr.hbm [resolvable:$true] %s356
          %s358 = sshll.u32 [#allocation10], 4
          %s359 = int_to_ptr.vmem [resolvable:$true] %s358
          %364 = dma.hbm_to_vmem [thread:$0]  %s357, 32000, %s359, [#allocation11], 320, 320, 20
        $region36: #{rawhammer_forward.1} parent=11 // pred_fallthru
          _
        // Predicated region
        $region37: #{rawhammer_forward.1} parent=11 // pred_check
          %p365 = pneg %p172
        $region38: #{rawhammer_forward.1} parent=11 // pred_check_branch
          %367 = sbr.rel (%p365) target = $region40
        $region39: #{rawhammer_forward.1} parent=11 // pred_region
          %369 = vsyncadd [#allocation11], 0
          %s371 = sshll.u32 %s6, 4
          %s372 = int_to_ptr.hbm [resolvable:$true] %s371
          %s373 = sshll.u32 [#allocation12], 4
          %s374 = int_to_ptr.vmem [resolvable:$true] %s373
          %376 = dma.hbm_to_vmem [thread:$0]  %s372, 80, %s374, [#allocation11]
        $region40: #{rawhammer_forward.1} parent=11 // pred_fallthru
          _
        // Predicated region
        $region41: #{rawhammer_forward.1} parent=11 // pred_check
          %p377 = pneg %p271
        $region42: #{rawhammer_forward.1} parent=11 // pred_check_branch
          %379 = sbr.rel (%p377) target = $region44
        $region43: #{rawhammer_forward.1} parent=11 // pred_region
          %381 = vsyncadd [#allocation17], 0
          %s383 = sshll.u32 %s10, 4
          %s384 = int_to_ptr.hbm [resolvable:$true] %s383
          %s385 = sshll.u32 [#allocation16], 4
          %s386 = int_to_ptr.vmem [resolvable:$true] %s385
          %388 = dma.hbm_to_vmem [thread:$0]  %s384, 16, %s386, [#allocation17]
        $region44: #{rawhammer_forward.1} parent=11 // pred_fallthru
          _
      $region12: #{rawhammer_forward.1} parent=5 // pred_fallthru
        _
      %p389 = scmp.lt.s32.totalorder %s25, 4
      // Predicated region
      $region45: #{rawhammer_forward.1} parent=5 // pred_check
        %p390 = pneg %p389
      $region46: #{rawhammer_forward.1} parent=5 // pred_check_branch
        %392 = sbr.rel (%p390) target = $region48
      $region47: #{rawhammer_forward.1} parent=5 // pred_region
        // Predicated region
        $region49: #{rawhammer_forward.1} parent=47 // pred_check
          %p393 = pneg %p192
        $region50: #{rawhammer_forward.1} parent=47 // pred_check_branch
          %395 = sbr.rel (%p393) target = $region52
        $region51: #{rawhammer_forward.1} parent=47 // pred_region
          %s396 = sand.u32 %s25, 1
          %s397 = scalar_lea.sflag [#allocation14], %s396
          %s398 = sand.u32 %s182, 1
          %s399 = smul.addr %s398, 1152
          %s400 = scalar_lea.vmem [#allocation13], %s399
          %s401 = smul.u32 4, %s25
          %403 = vsyncadd %s397, 0
          %s404 = smul.addr %s401, 4
          %s405 = scalar_lea.hbm %s7, %s404
          %s406 = sshll.u32 %s405, 4
          %s407 = int_to_ptr.hbm [resolvable:$true] %s406
          %s408 = sshll.u32 %s400, 4
          %s409 = int_to_ptr.vmem [resolvable:$true] %s408
          %414 = dma.hbm_to_vmem [thread:$0]  %s407, 18432, %s409, %s397, 1024, 256, 16
        $region52: #{rawhammer_forward.1} parent=47 // pred_fallthru
          _
        // Predicated region
        $region53: #{rawhammer_forward.1} parent=47 // pred_check
          %p415 = pneg %p218
        $region54: #{rawhammer_forward.1} parent=47 // pred_check_branch
          %417 = sbr.rel (%p415) target = $region56
        $region55: #{rawhammer_forward.1} parent=47 // pred_region
          %s418 = sand.u32 %s25, 1
          %s419 = scalar_lea.sflag [#allocation14], %s418
          %s420 = sand.u32 %s208, 1
          %s421 = smul.addr %s420, 4
          %s422 = scalar_lea.vmem [#allocation15], %s421
          %s423 = smul.u32 4, %s25
          %425 = vsyncadd %s419, 0
          %s426 = scalar_lea.hbm %s8, %s423
          %s428 = sshll.u32 %s426, 4
          %s429 = int_to_ptr.hbm [resolvable:$true] %s428
          %s430 = sshll.u32 %s422, 4
          %s431 = int_to_ptr.vmem [resolvable:$true] %s430
          %433 = dma.hbm_to_vmem [thread:$0]  %s429, 64, %s431, %s419
        $region56: #{rawhammer_forward.1} parent=47 // pred_fallthru
          _
        // Predicated region
        $region57: #{rawhammer_forward.1} parent=47 // pred_check
          %p434 = pneg %p244
        $region58: #{rawhammer_forward.1} parent=47 // pred_check_branch
          %436 = sbr.rel (%p434) target = $region60
        $region59: #{rawhammer_forward.1} parent=47 // pred_region
          %s437 = smul.u32 64, %s25
          %p438 = scmp.lt.s32.totalorder %s437, 255
          %s439 = scalar_select %p438, %s437, 255
          %s440 = smul.addr %s439, 4
          %s441 = scalar_lea.vmem %s9, %s440
          %s442 = smul.u32 64, %s25
        $region60: #{rawhammer_forward.1} parent=47 // pred_fallthru
          _
      $region48: #{rawhammer_forward.1} parent=5 // pred_fallthru
        _
      %p443 = scmp.le.s32.totalorder 1, %s25
      %p444 = scmp.lt.s32.totalorder %s25, 5
      %p445 = pnand %p443, %p444
      %p446 = pneg %p445
      // Predicated region
      $region61: #{rawhammer_forward.1} parent=5 // pred_check
        _
      $region62: #{rawhammer_forward.1} parent=5 // pred_check_branch
        %448 = sbr.rel (%p445) target = $region64
      $region63: #{rawhammer_forward.1} parent=5 // pred_region
        %s449 = ssub.s32 %s25, 1
        // Predicated region
        $region65: #{rawhammer_forward.1} parent=63 // pred_check
          %p450 = pneg %p88
        $region66: #{rawhammer_forward.1} parent=63 // pred_check_branch
          %452 = sbr.rel (%p450) target = $region68
        $region67: #{rawhammer_forward.1} parent=63 // pred_region
          %454 = dma.done [#allocation5], 96
        $region68: #{rawhammer_forward.1} parent=63 // pred_fallthru
          _
        // Predicated region
        $region69: #{rawhammer_forward.1} parent=63 // pred_check
          %p455 = pneg %p109
        $region70: #{rawhammer_forward.1} parent=63 // pred_check_branch
          %457 = sbr.rel (%p455) target = $region72
        $region71: #{rawhammer_forward.1} parent=63 // pred_region
          %459 = dma.done [#allocation8], 38080
        $region72: #{rawhammer_forward.1} parent=63 // pred_fallthru
          _
        // Predicated region
        $region73: #{rawhammer_forward.1} parent=63 // pred_check
          %p460 = pneg %p130
        $region74: #{rawhammer_forward.1} parent=63 // pred_check_branch
          %462 = sbr.rel (%p460) target = $region76
        $region75: #{rawhammer_forward.1} parent=63 // pred_region
          %464 = dma.done [#allocation8], 112
        $region76: #{rawhammer_forward.1} parent=63 // pred_fallthru
          _
        // Predicated region
        $region77: #{rawhammer_forward.1} parent=63 // pred_check
          %p465 = pneg %p151
        $region78: #{rawhammer_forward.1} parent=63 // pred_check_branch
          %467 = sbr.rel (%p465) target = $region80
        $region79: #{rawhammer_forward.1} parent=63 // pred_region
          %469 = dma.done [#allocation11], 32000
        $region80: #{rawhammer_forward.1} parent=63 // pred_fallthru
          _
        // Predicated region
        $region81: #{rawhammer_forward.1} parent=63 // pred_check
          %p470 = pneg %p172
        $region82: #{rawhammer_forward.1} parent=63 // pred_check_branch
          %472 = sbr.rel (%p470) target = $region84
        $region83: #{rawhammer_forward.1} parent=63 // pred_region
          %474 = dma.done [#allocation11], 80
        $region84: #{rawhammer_forward.1} parent=63 // pred_fallthru
          _
        %s475 = sand.u32 %s30, 1
        %s476 = scalar_lea.sflag [#allocation14], %s475
        %s477 = sand.u32 %s185, 1
        %s478 = smul.addr %s477, 1152
        %s479 = scalar_lea.vmem [#allocation13], %s478
        // Predicated region
        $region85: #{rawhammer_forward.1} parent=63 // pred_check
          %p480 = pneg %p198
        $region86: #{rawhammer_forward.1} parent=63 // pred_check_branch
          %482 = sbr.rel (%p480) target = $region88
        $region87: #{rawhammer_forward.1} parent=63 // pred_region
          %484 = dma.done %s476, 18432
        $region88: #{rawhammer_forward.1} parent=63 // pred_fallthru
          _
        %s485 = sand.u32 %s30, 1
        %s486 = scalar_lea.sflag [#allocation14], %s485
        %s487 = sand.u32 %s211, 1
        %s488 = smul.addr %s487, 4
        %s489 = scalar_lea.vmem [#allocation15], %s488
        // Predicated region
        $region89: #{rawhammer_forward.1} parent=63 // pred_check
          %p490 = pneg %p224
        $region90: #{rawhammer_forward.1} parent=63 // pred_check_branch
          %492 = sbr.rel (%p490) target = $region92
        $region91: #{rawhammer_forward.1} parent=63 // pred_region
          %494 = dma.done %s486, 64
        $region92: #{rawhammer_forward.1} parent=63 // pred_fallthru
          _
        // Predicated region
        $region93: #{rawhammer_forward.1} parent=63 // pred_check
          %p495 = pneg %p271
        $region94: #{rawhammer_forward.1} parent=63 // pred_check_branch
          %497 = sbr.rel (%p495) target = $region96
        $region95: #{rawhammer_forward.1} parent=63 // pred_region
          %499 = dma.done [#allocation17], 16
        $region96: #{rawhammer_forward.1} parent=63 // pred_fallthru
          _
        %p500 = pneg %p46
        %p501 = pneg %p43
        %p502 = pneg %p67
        %p503 = pneg %p64
        %p504 = pneg %p88
        %p505 = pneg %p85
        %p506 = pneg %p109
        %p507 = pneg %p106
        %p508 = pneg %p130
        %p509 = pneg %p127
        %p510 = pneg %p151
        %p511 = pneg %p148
        %p512 = pneg %p172
        %p513 = pneg %p169
        %s514 = sand.u32 %s30, 1
        %s515 = scalar_lea.sflag [#allocation14], %s514
        %s516 = sand.u32 %s185, 1
        %s517 = smul.addr %s516, 1152
        %s518 = scalar_lea.vmem [#allocation13], %s517
        %p519 = pneg %p198
        %p520 = pneg %p195
        %s521 = sand.u32 %s30, 1
        %s522 = scalar_lea.sflag [#allocation14], %s521
        %s523 = sand.u32 %s211, 1
        %s524 = smul.addr %s523, 4
        %s525 = scalar_lea.vmem [#allocation15], %s524
        %p526 = pneg %p224
        %p527 = pneg %p221
        %s528 = smul.u32 64, %s30
        %p529 = scmp.lt.s32.totalorder %s528, 255
        %s530 = scalar_select %p529, %s528, 255
        %s531 = smul.addr %s530, 4
        %s532 = scalar_lea.vmem %s9, %s531
        %p533 = pneg %p250
        %p534 = pneg %p247
        %p535 = pneg %p271
        %p536 = pneg %p268
        %p537 = pneg %p292
        %p538 = pneg %p289
        %s539 = smul.u32 4, %s30
        %s540 = smul.u32 4, %s30
        %s541 = smul.u32 64, %s30
        %p542 = scmp.lt.s32.totalorder %s541, 255
        %s543 = scalar_select %p542, %s541, 255
        %s544 = smul.addr %s543, 4
        %s545 = scalar_lea.vmem %s9, %s544
        %s546 = smul.u32 64, %s30
        %p548 = scmp.eq.s32.totalorder %s30, 0
        // Predicated region
        $region97: #{rawhammer_forward.1} parent=63 // pred_check
          %p549 = pneg %p548
        $region98: #{rawhammer_forward.1} parent=63 // pred_check_branch
          %551 = sbr.rel (%p549) target = $region100
        $region99: #{rawhammer_forward.1} parent=63 // pred_region
          %v552 = vld [vmem:[%s0] sm:$0xf]
          %554 = vst [vmem:[#allocation1] ss:$4 sm:$0xff] %v552
          %v555 = vld.sshfl [vmem:[#allocation1] sm:$0xff pattern:$0x73625140]
          %v556 = vld.sshfl [vmem:[#allocation1 + $0x8] sm:$0xff pattern:$0x73625140]
          %v559 = vpack.c.bf16 %v555, %v555
          %v560 = vpack.c.bf16 %v556, %v556
          %v561 = vld [vmem:[%s1] sm:$0xff]
          %v562 = vld [vmem:[%s1 + $0x8] sm:$0xff]
          %v563 = vld [vmem:[%s1 + $0x10] sm:$0xff]
          %v564 = vld [vmem:[%s1 + $0x18] sm:$0xff]
          %v565 = vld [vmem:[%s1 + $0x20] sm:$0xff]
          %v566 = vld [vmem:[%s1 + $0x28] sm:$0xff]
          %v567 = vld [vmem:[%s1 + $0x30] sm:$0xff]
          %v568 = vld [vmem:[%s1 + $0x38] sm:$0xff]
          %v569 = vld [vmem:[%s1 + $0x40] sm:$0xff]
          %v570 = vld [vmem:[%s1 + $0x48] sm:$0xff]
          %v571 = vld [vmem:[%s1 + $0x50] sm:$0xff]
          %v572 = vld [vmem:[%s1 + $0x58] sm:$0xff]
          %v573 = vld [vmem:[%s1 + $0x60] sm:$0xff]
          %v574 = vld [vmem:[%s1 + $0x68] sm:$0xff]
          %v575 = vld [vmem:[%s1 + $0x70] sm:$0xff]
          %v576 = vld [vmem:[%s1 + $0x78] sm:$0xff]
          %v577 = vld [vmem:[%s1 + $0x80] sm:$0xff]
          %v578 = vld [vmem:[%s1 + $0x88] sm:$0xff]
          %v579 = vld [vmem:[%s1 + $0x90] sm:$0xff]
          %v580 = vld [vmem:[%s1 + $0x98] sm:$0xff]
          %v581 = vld [vmem:[%s1 + $0xa0] sm:$0xff]
          %v582 = vld [vmem:[%s1 + $0xa8] sm:$0xff]
          %v583 = vld [vmem:[%s1 + $0xb0] sm:$0xff]
          %v584 = vld [vmem:[%s1 + $0xb8] sm:$0xff]
          %v585 = vld [vmem:[%s1 + $0xc0] sm:$0xff]
          %v586 = vld [vmem:[%s1 + $0xc8] sm:$0xff]
          %v587 = vld [vmem:[%s1 + $0xd0] sm:$0xff]
          %v588 = vld [vmem:[%s1 + $0xd8] sm:$0xff]
          %v589 = vld [vmem:[%s1 + $0xe0] sm:$0xff]
          %v590 = vld [vmem:[%s1 + $0xe8] sm:$0xff]
          %v591 = vld [vmem:[%s1 + $0xf0] sm:$0xff]
          %v592 = vld [vmem:[%s1 + $0xf8] sm:$0xff]
          %v593 = vld [vmem:[%s1 + $0x100] sm:$0xff]
          %v594 = vld [vmem:[%s1 + $0x108] sm:$0xff]
          %v595 = vld [vmem:[%s1 + $0x110] sm:$0xff]
          %v596 = vld [vmem:[%s1 + $0x118] sm:$0xff]
          %v597 = vld [vmem:[%s1 + $0x120] sm:$0xff]
          %v598 = vld [vmem:[%s1 + $0x128] sm:$0xff]
          %v599 = vld [vmem:[%s1 + $0x130] sm:$0xff]
          %v600 = vld [vmem:[%s1 + $0x138] sm:$0xff]
          %v601 = vld [vmem:[%s1 + $0x140] sm:$0xff]
          %v602 = vld [vmem:[%s1 + $0x148] sm:$0xff]
          %v603 = vld [vmem:[%s1 + $0x150] sm:$0xff]
          %v604 = vld [vmem:[%s1 + $0x158] sm:$0xff]
          %v605 = vld [vmem:[%s1 + $0x160] sm:$0xff]
          %v606 = vld [vmem:[%s1 + $0x168] sm:$0xff]
          %v607 = vld [vmem:[%s1 + $0x170] sm:$0xff]
          %v608 = vld [vmem:[%s1 + $0x178] sm:$0xff]
          %v609 = vld [vmem:[%s1 + $0x180] sm:$0xff]
          %v610 = vld [vmem:[%s1 + $0x188] sm:$0xff]
          %v611 = vld [vmem:[%s1 + $0x190] sm:$0xff]
          %v612 = vld [vmem:[%s1 + $0x198] sm:$0xff]
          %v613 = vld [vmem:[%s1 + $0x1a0] sm:$0xff]
          %v614 = vld [vmem:[%s1 + $0x1a8] sm:$0xff]
          %v615 = vld [vmem:[%s1 + $0x1b0] sm:$0xff]
          %v616 = vld [vmem:[%s1 + $0x1b8] sm:$0xff]
          %v617 = vld [vmem:[%s1 + $0x1c0] sm:$0xff]
          %v618 = vld [vmem:[%s1 + $0x1c8] sm:$0xff]
          %v619 = vld [vmem:[%s1 + $0x1d0] sm:$0xff]
          %v620 = vld [vmem:[%s1 + $0x1d8] sm:$0xff]
          %v621 = vld [vmem:[%s1 + $0x1e0] sm:$0xff]
          %v622 = vld [vmem:[%s1 + $0x1e8] sm:$0xff]
          %v623 = vld [vmem:[%s1 + $0x1f0] sm:$0xff]
          %v624 = vld [vmem:[%s1 + $0x1f8] sm:$0xff]
          %v625 = vld [vmem:[%s1 + $0x200] sm:$0xff]
          %v626 = vld [vmem:[%s1 + $0x208] sm:$0xff]
          %v627 = vld [vmem:[%s1 + $0x210] sm:$0xff]
          %v628 = vld [vmem:[%s1 + $0x218] sm:$0xff]
          %v629 = vld [vmem:[%s1 + $0x220] sm:$0xff]
          %v630 = vld [vmem:[%s1 + $0x228] sm:$0xff]
          %v631 = vld [vmem:[%s1 + $0x230] sm:$0xff]
          %v632 = vld [vmem:[%s1 + $0x238] sm:$0xff]
          %v633 = vld [vmem:[%s1 + $0x240] sm:$0xff]
          %v634 = vld [vmem:[%s1 + $0x248] sm:$0xff]
          %v635 = vld [vmem:[%s1 + $0x250] sm:$0xff]
          %v636 = vld [vmem:[%s1 + $0x258] sm:$0xff]
          %v637 = vld [vmem:[%s1 + $0x260] sm:$0xff]
          %v638 = vld [vmem:[%s1 + $0x268] sm:$0xff]
          %v639 = vld [vmem:[%s1 + $0x270] sm:$0xff]
          %v640 = vld [vmem:[%s1 + $0x278] sm:$0xff]
          %v641 = vld [vmem:[%s1 + $0x280] sm:$0xff]
          %v642 = vld [vmem:[%s1 + $0x288] sm:$0xff]
          %v643 = vld [vmem:[%s1 + $0x290] sm:$0xff]
          %v644 = vld [vmem:[%s1 + $0x298] sm:$0xff]
          %v645 = vld [vmem:[%s1 + $0x2a0] sm:$0xff]
          %v646 = vld [vmem:[%s1 + $0x2a8] sm:$0xff]
          %v647 = vld [vmem:[%s1 + $0x2b0] sm:$0xff]
          %v648 = vld [vmem:[%s1 + $0x2b8] sm:$0xff]
          %v649 = vld [vmem:[%s1 + $0x2c0] sm:$0xff]
          %v650 = vld [vmem:[%s1 + $0x2c8] sm:$0xff]
          %v651 = vld [vmem:[%s1 + $0x2d0] sm:$0xff]
          %v652 = vld [vmem:[%s1 + $0x2d8] sm:$0xff]
          %v653 = vld [vmem:[%s1 + $0x2e0] sm:$0xff]
          %v654 = vld [vmem:[%s1 + $0x2e8] sm:$0xff]
          %v655 = vld [vmem:[%s1 + $0x2f0] sm:$0xff]
          %v656 = vld [vmem:[%s1 + $0x2f8] sm:$0xff]
          %v657 = vld [vmem:[#allocation4] sm:$0x3f]
          %v659 = vperm.slane %v657, 0
          %v660 = vperm.slane %v657, 1
          %v661 = vperm.slane %v657, 2
          %v662 = vperm.slane %v657, 3
          %v663 = vperm.slane %v657, 4
          %v664 = vperm.slane %v657, 5
          %v767 = vunpack.c.l.b16 %v561
          %v768 = vunpack.c.h.b16 %v561
          %v769 = vunpack.c.l.b16 %v562
          %v770 = vunpack.c.h.b16 %v562
          %v771 = vunpack.c.l.b16 %v563
          %v772 = vunpack.c.h.b16 %v563
          %v773 = vunpack.c.l.b16 %v564
          %v774 = vunpack.c.h.b16 %v564
          %v775 = vunpack.c.l.b16 %v565
          %v776 = vunpack.c.h.b16 %v565
          %v777 = vunpack.c.l.b16 %v566
          %v778 = vunpack.c.h.b16 %v566
          %v779 = vunpack.c.l.b16 %v567
          %v780 = vunpack.c.h.b16 %v567
          %v781 = vunpack.c.l.b16 %v568
          %v782 = vunpack.c.h.b16 %v568
          %v783 = vunpack.c.l.b16 %v569
          %v784 = vunpack.c.h.b16 %v569
          %v785 = vunpack.c.l.b16 %v570
          %v786 = vunpack.c.h.b16 %v570
          %v787 = vunpack.c.l.b16 %v571
          %v788 = vunpack.c.h.b16 %v571
          %v789 = vunpack.c.l.b16 %v572
          %v790 = vunpack.c.h.b16 %v572
          %v791 = vunpack.c.l.b16 %v573
          %v792 = vunpack.c.h.b16 %v573
          %v793 = vunpack.c.l.b16 %v574
          %v794 = vunpack.c.h.b16 %v574
          %v795 = vunpack.c.l.b16 %v575
          %v796 = vunpack.c.h.b16 %v575
          %v797 = vunpack.c.l.b16 %v576
          %v798 = vunpack.c.h.b16 %v576
          %v799 = vunpack.c.l.b16 %v577
          %v800 = vunpack.c.h.b16 %v577
          %v801 = vunpack.c.l.b16 %v578
          %v802 = vunpack.c.h.b16 %v578
          %v803 = vunpack.c.l.b16 %v579
          %v804 = vunpack.c.h.b16 %v579
          %v805 = vunpack.c.l.b16 %v580
          %v806 = vunpack.c.h.b16 %v580
          %v807 = vunpack.c.l.b16 %v581
          %v808 = vunpack.c.h.b16 %v581
          %v809 = vunpack.c.l.b16 %v582
          %v810 = vunpack.c.h.b16 %v582
          %v811 = vunpack.c.l.b16 %v583
          %v812 = vunpack.c.h.b16 %v583
          %v813 = vunpack.c.l.b16 %v584
          %v814 = vunpack.c.h.b16 %v584
          %v815 = vunpack.c.l.b16 %v585
          %v816 = vunpack.c.h.b16 %v585
          %v817 = vunpack.c.l.b16 %v586
          %v818 = vunpack.c.h.b16 %v586
          %v819 = vunpack.c.l.b16 %v587
          %v820 = vunpack.c.h.b16 %v587
          %v821 = vunpack.c.l.b16 %v588
          %v822 = vunpack.c.h.b16 %v588
          %v823 = vunpack.c.l.b16 %v589
          %v824 = vunpack.c.h.b16 %v589
          %v825 = vunpack.c.l.b16 %v590
          %v826 = vunpack.c.h.b16 %v590
          %v827 = vunpack.c.l.b16 %v591
          %v828 = vunpack.c.h.b16 %v591
          %v829 = vunpack.c.l.b16 %v592
          %v830 = vunpack.c.h.b16 %v592
          %v831 = vunpack.c.l.b16 %v593
          %v832 = vunpack.c.h.b16 %v593
          %v833 = vunpack.c.l.b16 %v594
          %v834 = vunpack.c.h.b16 %v594
          %v835 = vunpack.c.l.b16 %v595
          %v836 = vunpack.c.h.b16 %v595
          %v837 = vunpack.c.l.b16 %v596
          %v838 = vunpack.c.h.b16 %v596
          %v839 = vunpack.c.l.b16 %v597
          %v840 = vunpack.c.h.b16 %v597
          %v841 = vunpack.c.l.b16 %v598
          %v842 = vunpack.c.h.b16 %v598
          %v843 = vunpack.c.l.b16 %v599
          %v844 = vunpack.c.h.b16 %v599
          %v845 = vunpack.c.l.b16 %v600
          %v846 = vunpack.c.h.b16 %v600
          %v847 = vunpack.c.l.b16 %v601
          %v848 = vunpack.c.h.b16 %v601
          %v849 = vunpack.c.l.b16 %v602
          %v850 = vunpack.c.h.b16 %v602
          %v851 = vunpack.c.l.b16 %v603
          %v852 = vunpack.c.h.b16 %v603
          %v853 = vunpack.c.l.b16 %v604
          %v854 = vunpack.c.h.b16 %v604
          %v855 = vunpack.c.l.b16 %v605
          %v856 = vunpack.c.h.b16 %v605
          %v857 = vunpack.c.l.b16 %v606
          %v858 = vunpack.c.h.b16 %v606
          %v859 = vunpack.c.l.b16 %v607
          %v860 = vunpack.c.h.b16 %v607
          %v861 = vunpack.c.l.b16 %v608
          %v862 = vunpack.c.h.b16 %v608
          %v863 = vunpack.c.l.b16 %v609
          %v864 = vunpack.c.h.b16 %v609
          %v865 = vunpack.c.l.b16 %v610
          %v866 = vunpack.c.h.b16 %v610
          %v867 = vunpack.c.l.b16 %v611
          %v868 = vunpack.c.h.b16 %v611
          %v869 = vunpack.c.l.b16 %v612
          %v870 = vunpack.c.h.b16 %v612
          %v871 = vunpack.c.l.b16 %v613
          %v872 = vunpack.c.h.b16 %v613
          %v873 = vunpack.c.l.b16 %v614
          %v874 = vunpack.c.h.b16 %v614
          %v875 = vunpack.c.l.b16 %v615
          %v876 = vunpack.c.h.b16 %v615
          %v877 = vunpack.c.l.b16 %v616
          %v878 = vunpack.c.h.b16 %v616
          %v879 = vunpack.c.l.b16 %v617
          %v880 = vunpack.c.h.b16 %v617
          %v881 = vunpack.c.l.b16 %v618
          %v882 = vunpack.c.h.b16 %v618
          %v883 = vunpack.c.l.b16 %v619
          %v884 = vunpack.c.h.b16 %v619
          %v885 = vunpack.c.l.b16 %v620
          %v886 = vunpack.c.h.b16 %v620
          %v887 = vunpack.c.l.b16 %v621
          %v888 = vunpack.c.h.b16 %v621
          %v889 = vunpack.c.l.b16 %v622
          %v890 = vunpack.c.h.b16 %v622
          %v891 = vunpack.c.l.b16 %v623
          %v892 = vunpack.c.h.b16 %v623
          %v893 = vunpack.c.l.b16 %v624
          %v894 = vunpack.c.h.b16 %v624
          %v895 = vunpack.c.l.b16 %v625
          %v896 = vunpack.c.h.b16 %v625
          %v897 = vunpack.c.l.b16 %v626
          %v898 = vunpack.c.h.b16 %v626
          %v899 = vunpack.c.l.b16 %v627
          %v900 = vunpack.c.h.b16 %v627
          %v901 = vunpack.c.l.b16 %v628
          %v902 = vunpack.c.h.b16 %v628
          %v903 = vunpack.c.l.b16 %v629
          %v904 = vunpack.c.h.b16 %v629
          %v905 = vunpack.c.l.b16 %v630
          %v906 = vunpack.c.h.b16 %v630
          %v907 = vunpack.c.l.b16 %v631
          %v908 = vunpack.c.h.b16 %v631
          %v909 = vunpack.c.l.b16 %v632
          %v910 = vunpack.c.h.b16 %v632
          %v911 = vunpack.c.l.b16 %v633
          %v912 = vunpack.c.h.b16 %v633
          %v913 = vunpack.c.l.b16 %v634
          %v914 = vunpack.c.h.b16 %v634
          %v915 = vunpack.c.l.b16 %v635
          %v916 = vunpack.c.h.b16 %v635
          %v917 = vunpack.c.l.b16 %v636
          %v918 = vunpack.c.h.b16 %v636
          %v919 = vunpack.c.l.b16 %v637
          %v920 = vunpack.c.h.b16 %v637
          %v921 = vunpack.c.l.b16 %v638
          %v922 = vunpack.c.h.b16 %v638
          %v923 = vunpack.c.l.b16 %v639
          %v924 = vunpack.c.h.b16 %v639
          %v925 = vunpack.c.l.b16 %v640
          %v926 = vunpack.c.h.b16 %v640
          %v927 = vunpack.c.l.b16 %v641
          %v928 = vunpack.c.h.b16 %v641
          %v929 = vunpack.c.l.b16 %v642
          %v930 = vunpack.c.h.b16 %v642
          %v931 = vunpack.c.l.b16 %v643
          %v932 = vunpack.c.h.b16 %v643
          %v933 = vunpack.c.l.b16 %v644
          %v934 = vunpack.c.h.b16 %v644
          %v935 = vunpack.c.l.b16 %v645
          %v936 = vunpack.c.h.b16 %v645
          %v937 = vunpack.c.l.b16 %v646
          %v938 = vunpack.c.h.b16 %v646
          %v939 = vunpack.c.l.b16 %v647
          %v940 = vunpack.c.h.b16 %v647
          %v941 = vunpack.c.l.b16 %v648
          %v942 = vunpack.c.h.b16 %v648
          %v943 = vunpack.c.l.b16 %v649
          %v944 = vunpack.c.h.b16 %v649
          %v945 = vunpack.c.l.b16 %v650
          %v946 = vunpack.c.h.b16 %v650
          %v947 = vunpack.c.l.b16 %v651
          %v948 = vunpack.c.h.b16 %v651
          %v949 = vunpack.c.l.b16 %v652
          %v950 = vunpack.c.h.b16 %v652
          %v951 = vunpack.c.l.b16 %v653
          %v952 = vunpack.c.h.b16 %v653
          %v953 = vunpack.c.l.b16 %v654
          %v954 = vunpack.c.h.b16 %v654
          %v955 = vunpack.c.l.b16 %v655
          %v956 = vunpack.c.h.b16 %v655
          %v957 = vunpack.c.l.b16 %v656
          %v958 = vunpack.c.h.b16 %v656
          %v959 = vpack.c.b16 %v773, %v767
          %v960 = vpack.c.b16 %v774, %v768
          %v961 = vpack.c.b16 %v775, %v769
          %v962 = vpack.c.b16 %v776, %v770
          %v963 = vpack.c.b16 %v777, %v771
          %v964 = vpack.c.b16 %v778, %v772
          %v965 = vpack.c.b16 %v785, %v779
          %v966 = vpack.c.b16 %v786, %v780
          %v967 = vpack.c.b16 %v787, %v781
          %v968 = vpack.c.b16 %v788, %v782
          %v969 = vpack.c.b16 %v789, %v783
          %v970 = vpack.c.b16 %v790, %v784
          %v971 = vpack.c.b16 %v797, %v791
          %v972 = vpack.c.b16 %v798, %v792
          %v973 = vpack.c.b16 %v799, %v793
          %v974 = vpack.c.b16 %v800, %v794
          %v975 = vpack.c.b16 %v801, %v795
          %v976 = vpack.c.b16 %v802, %v796
          %v977 = vpack.c.b16 %v809, %v803
          %v978 = vpack.c.b16 %v810, %v804
          %v979 = vpack.c.b16 %v811, %v805
          %v980 = vpack.c.b16 %v812, %v806
          %v981 = vpack.c.b16 %v813, %v807
          %v982 = vpack.c.b16 %v814, %v808
          %v983 = vpack.c.b16 %v821, %v815
          %v984 = vpack.c.b16 %v822, %v816
          %v985 = vpack.c.b16 %v823, %v817
          %v986 = vpack.c.b16 %v824, %v818
          %v987 = vpack.c.b16 %v825, %v819
          %v988 = vpack.c.b16 %v826, %v820
          %v989 = vpack.c.b16 %v833, %v827
          %v990 = vpack.c.b16 %v834, %v828
          %v991 = vpack.c.b16 %v835, %v829
          %v992 = vpack.c.b16 %v836, %v830
          %v993 = vpack.c.b16 %v837, %v831
          %v994 = vpack.c.b16 %v838, %v832
          %v995 = vpack.c.b16 %v845, %v839
          %v996 = vpack.c.b16 %v846, %v840
          %v997 = vpack.c.b16 %v847, %v841
          %v998 = vpack.c.b16 %v848, %v842
          %v999 = vpack.c.b16 %v849, %v843
          %v1000 = vpack.c.b16 %v850, %v844
          %v1001 = vpack.c.b16 %v857, %v851
          %v1002 = vpack.c.b16 %v858, %v852
          %v1003 = vpack.c.b16 %v859, %v853
          %v1004 = vpack.c.b16 %v860, %v854
          %v1005 = vpack.c.b16 %v861, %v855
          %v1006 = vpack.c.b16 %v862, %v856
          %v1007 = vpack.c.b16 %v869, %v863
          %v1008 = vpack.c.b16 %v870, %v864
          %v1009 = vpack.c.b16 %v871, %v865
          %v1010 = vpack.c.b16 %v872, %v866
          %v1011 = vpack.c.b16 %v873, %v867
          %v1012 = vpack.c.b16 %v874, %v868
          %v1013 = vpack.c.b16 %v881, %v875
          %v1014 = vpack.c.b16 %v882, %v876
          %v1015 = vpack.c.b16 %v883, %v877
          %v1016 = vpack.c.b16 %v884, %v878
          %v1017 = vpack.c.b16 %v885, %v879
          %v1018 = vpack.c.b16 %v886, %v880
          %v1019 = vpack.c.b16 %v893, %v887
          %v1020 = vpack.c.b16 %v894, %v888
          %v1021 = vpack.c.b16 %v895, %v889
          %v1022 = vpack.c.b16 %v896, %v890
          %v1023 = vpack.c.b16 %v897, %v891
          %v1024 = vpack.c.b16 %v898, %v892
          %v1025 = vpack.c.b16 %v905, %v899
          %v1026 = vpack.c.b16 %v906, %v900
          %v1027 = vpack.c.b16 %v907, %v901
          %v1028 = vpack.c.b16 %v908, %v902
          %v1029 = vpack.c.b16 %v909, %v903
          %v1030 = vpack.c.b16 %v910, %v904
          %v1031 = vpack.c.b16 %v917, %v911
          %v1032 = vpack.c.b16 %v918, %v912
          %v1033 = vpack.c.b16 %v919, %v913
          %v1034 = vpack.c.b16 %v920, %v914
          %v1035 = vpack.c.b16 %v921, %v915
          %v1036 = vpack.c.b16 %v922, %v916
          %v1037 = vpack.c.b16 %v929, %v923
          %v1038 = vpack.c.b16 %v930, %v924
          %v1039 = vpack.c.b16 %v931, %v925
          %v1040 = vpack.c.b16 %v932, %v926
          %v1041 = vpack.c.b16 %v933, %v927
          %v1042 = vpack.c.b16 %v934, %v928
          %v1043 = vpack.c.b16 %v941, %v935
          %v1044 = vpack.c.b16 %v942, %v936
          %v1045 = vpack.c.b16 %v943, %v937
          %v1046 = vpack.c.b16 %v944, %v938
          %v1047 = vpack.c.b16 %v945, %v939
          %v1048 = vpack.c.b16 %v946, %v940
          %v1049 = vpack.c.b16 %v953, %v947
          %v1050 = vpack.c.b16 %v954, %v948
          %v1051 = vpack.c.b16 %v955, %v949
          %v1052 = vpack.c.b16 %v956, %v950
          %v1053 = vpack.c.b16 %v957, %v951
          %v1054 = vpack.c.b16 %v958, %v952
          %1151 = vmatpush.bf16.msra.mxu0 %v1001
          %1152 = vmatpush.bf16.msra.mxu0 %v995
          %1153 = vmatpush.bf16.msra.mxu0 %v989
          %1154 = vmatpush.bf16.msra.mxu0 %v983
          %1155 = vmatpush.bf16.msra.mxu0 %v977
          %1156 = vmatpush.bf16.msra.mxu0 %v971
          %1157 = vmatpush.bf16.msra.mxu0 %v965
          %1158 = vmatpush.bf16.msra.mxu0 %v959
          %1159 = vmatmul.bf16.gmra.mxu0 %v559
          %v1160 = vpop.f32.mrf.mxu0
          %v1161 = vadd.f32 %v659, %v1160
          %v1162 = vpop.f32.mrf.mxu0
          %1163 = vdwg.mxu0
          %1164 = vmatpush.bf16.msra.mxu0 %v1049
          %1165 = vmatpush.bf16.msra.mxu0 %v1043
          %1166 = vmatpush.bf16.msra.mxu0 %v1037
          %1167 = vmatpush.bf16.msra.mxu0 %v1031
          %1168 = vmatpush.bf16.msra.mxu0 %v1025
          %1169 = vmatpush.bf16.msra.mxu0 %v1019
          %1170 = vmatpush.bf16.msra.mxu0 %v1013
          %1171 = vmatpush.bf16.msra.mxu0 %v1007
          %1172 = vmatmul.bf16.gmra.mxu0 %v560
          %v1173 = vpop.f32.mrf.mxu0
          %v1174 = vadd.f32 %v1161, %v1173
          %v1175 = vpop.f32.mrf.mxu0
          %1176 = vdwg.mxu0
          %1177 = vmatpush.bf16.msra.mxu0 %v1002
          %1178 = vmatpush.bf16.msra.mxu0 %v996
          %1179 = vmatpush.bf16.msra.mxu0 %v990
          %1180 = vmatpush.bf16.msra.mxu0 %v984
          %1181 = vmatpush.bf16.msra.mxu0 %v978
          %1182 = vmatpush.bf16.msra.mxu0 %v972
          %1183 = vmatpush.bf16.msra.mxu0 %v966
          %1184 = vmatpush.bf16.msra.mxu0 %v960
          %1185 = vmatmul.bf16.gmra.mxu0 %v559
          %v1186 = vpop.f32.mrf.mxu0
          %v1187 = vadd.f32 %v660, %v1186
          %v1188 = vpop.f32.mrf.mxu0
          %1189 = vdwg.mxu0
          %1190 = vmatpush.bf16.msra.mxu0 %v1050
          %1191 = vmatpush.bf16.msra.mxu0 %v1044
          %1192 = vmatpush.bf16.msra.mxu0 %v1038
          %1193 = vmatpush.bf16.msra.mxu0 %v1032
          %1194 = vmatpush.bf16.msra.mxu0 %v1026
          %1195 = vmatpush.bf16.msra.mxu0 %v1020
          %1196 = vmatpush.bf16.msra.mxu0 %v1014
          %1197 = vmatpush.bf16.msra.mxu0 %v1008
          %1198 = vmatmul.bf16.gmra.mxu0 %v560
          %v1199 = vpop.f32.mrf.mxu0
          %v1200 = vadd.f32 %v1187, %v1199
          %v1201 = vpop.f32.mrf.mxu0
          %1202 = vdwg.mxu0
          %1203 = vmatpush.bf16.msra.mxu0 %v1003
          %1204 = vmatpush.bf16.msra.mxu0 %v997
          %1205 = vmatpush.bf16.msra.mxu0 %v991
          %1206 = vmatpush.bf16.msra.mxu0 %v985
          %1207 = vmatpush.bf16.msra.mxu0 %v979
          %1208 = vmatpush.bf16.msra.mxu0 %v973
          %1209 = vmatpush.bf16.msra.mxu0 %v967
          %1210 = vmatpush.bf16.msra.mxu0 %v961
          %1211 = vmatmul.bf16.gmra.mxu0 %v559
          %v1212 = vpop.f32.mrf.mxu0
          %v1213 = vadd.f32 %v661, %v1212
          %v1214 = vpop.f32.mrf.mxu0
          %1215 = vdwg.mxu0
          %1216 = vmatpush.bf16.msra.mxu0 %v1051
          %1217 = vmatpush.bf16.msra.mxu0 %v1045
          %1218 = vmatpush.bf16.msra.mxu0 %v1039
          %1219 = vmatpush.bf16.msra.mxu0 %v1033
          %1220 = vmatpush.bf16.msra.mxu0 %v1027
          %1221 = vmatpush.bf16.msra.mxu0 %v1021
          %1222 = vmatpush.bf16.msra.mxu0 %v1015
          %1223 = vmatpush.bf16.msra.mxu0 %v1009
          %1224 = vmatmul.bf16.gmra.mxu0 %v560
          %v1225 = vpop.f32.mrf.mxu0
          %v1226 = vadd.f32 %v1213, %v1225
          %v1227 = vpop.f32.mrf.mxu0
          %1228 = vdwg.mxu0
          %1229 = vmatpush.bf16.msra.mxu0 %v1004
          %1230 = vmatpush.bf16.msra.mxu0 %v998
          %1231 = vmatpush.bf16.msra.mxu0 %v992
          %1232 = vmatpush.bf16.msra.mxu0 %v986
          %1233 = vmatpush.bf16.msra.mxu0 %v980
          %1234 = vmatpush.bf16.msra.mxu0 %v974
          %1235 = vmatpush.bf16.msra.mxu0 %v968
          %1236 = vmatpush.bf16.msra.mxu0 %v962
          %1237 = vmatmul.bf16.gmra.mxu0 %v559
          %v1238 = vpop.f32.mrf.mxu0
          %v1239 = vadd.f32 %v662, %v1238
          %v1240 = vpop.f32.mrf.mxu0
          %1241 = vdwg.mxu0
          %1242 = vmatpush.bf16.msra.mxu0 %v1052
          %1243 = vmatpush.bf16.msra.mxu0 %v1046
          %1244 = vmatpush.bf16.msra.mxu0 %v1040
          %1245 = vmatpush.bf16.msra.mxu0 %v1034
          %1246 = vmatpush.bf16.msra.mxu0 %v1028
          %1247 = vmatpush.bf16.msra.mxu0 %v1022
          %1248 = vmatpush.bf16.msra.mxu0 %v1016
          %1249 = vmatpush.bf16.msra.mxu0 %v1010
          %1250 = vmatmul.bf16.gmra.mxu0 %v560
          %v1251 = vpop.f32.mrf.mxu0
          %v1252 = vadd.f32 %v1239, %v1251
          %v1253 = vpop.f32.mrf.mxu0
          %1254 = vdwg.mxu0
          %1255 = vmatpush.bf16.msra.mxu0 %v1005
          %1256 = vmatpush.bf16.msra.mxu0 %v999
          %1257 = vmatpush.bf16.msra.mxu0 %v993
          %1258 = vmatpush.bf16.msra.mxu0 %v987
          %1259 = vmatpush.bf16.msra.mxu0 %v981
          %1260 = vmatpush.bf16.msra.mxu0 %v975
          %1261 = vmatpush.bf16.msra.mxu0 %v969
          %1262 = vmatpush.bf16.msra.mxu0 %v963
          %1263 = vmatmul.bf16.gmra.mxu0 %v559
          %v1264 = vpop.f32.mrf.mxu0
          %v1265 = vadd.f32 %v663, %v1264
          %v1266 = vpop.f32.mrf.mxu0
          %1267 = vdwg.mxu0
          %1268 = vmatpush.bf16.msra.mxu0 %v1053
          %1269 = vmatpush.bf16.msra.mxu0 %v1047
          %1270 = vmatpush.bf16.msra.mxu0 %v1041
          %1271 = vmatpush.bf16.msra.mxu0 %v1035
          %1272 = vmatpush.bf16.msra.mxu0 %v1029
          %1273 = vmatpush.bf16.msra.mxu0 %v1023
          %1274 = vmatpush.bf16.msra.mxu0 %v1017
          %1275 = vmatpush.bf16.msra.mxu0 %v1011
          %1276 = vmatmul.bf16.gmra.mxu0 %v560
          %v1277 = vpop.f32.mrf.mxu0
          %v1278 = vadd.f32 %v1265, %v1277
          %v1279 = vpop.f32.mrf.mxu0
          %1280 = vdwg.mxu0
          %1281 = vmatpush.bf16.msra.mxu0 %v1006
          %1282 = vmatpush.bf16.msra.mxu0 %v1000
          %1283 = vmatpush.bf16.msra.mxu0 %v994
          %1284 = vmatpush.bf16.msra.mxu0 %v988
          %1285 = vmatpush.bf16.msra.mxu0 %v982
          %1286 = vmatpush.bf16.msra.mxu0 %v976
          %1287 = vmatpush.bf16.msra.mxu0 %v970
          %1288 = vmatpush.bf16.msra.mxu0 %v964
          %1289 = vmatmul.bf16.gmra.mxu0 %v559
          %v1290 = vpop.f32.mrf.mxu0
          %v1291 = vadd.f32 %v664, %v1290
          %v1292 = vpop.f32.mrf.mxu0
          %1293 = vdwg.mxu0
          %1294 = vmatpush.bf16.msra.mxu0 %v1054
          %1295 = vmatpush.bf16.msra.mxu0 %v1048
          %1296 = vmatpush.bf16.msra.mxu0 %v1042
          %1297 = vmatpush.bf16.msra.mxu0 %v1036
          %1298 = vmatpush.bf16.msra.mxu0 %v1030
          %1299 = vmatpush.bf16.msra.mxu0 %v1024
          %1300 = vmatpush.bf16.msra.mxu0 %v1018
          %1301 = vmatpush.bf16.msra.mxu0 %v1012
          %1302 = vmatmul.bf16.gmra.mxu0 %v560
          %v1303 = vpop.f32.mrf.mxu0
          %v1304 = vadd.f32 %v1291, %v1303
          %v1305 = vpop.f32.mrf.mxu0
          %1306 = vdwg.mxu0
          %vm1307 = vcmp.gt.f32.partialorder %v1174, 0.0
          %vm1308 = vcmp.gt.f32.partialorder %v1200, 0.0
          %vm1309 = vcmp.gt.f32.partialorder %v1226, 0.0
          %vm1310 = vcmp.gt.f32.partialorder %v1252, 0.0
          %vm1311 = vcmp.gt.f32.partialorder %v1278, 0.0
          %vm1312 = vcmp.gt.f32.partialorder %v1304, 0.0
          %v1313 = vmul.f32 %v1174, 0.01
          %v1314 = vmul.f32 %v1200, 0.01
          %v1315 = vmul.f32 %v1226, 0.01
          %v1316 = vmul.f32 %v1252, 0.01
          %v1317 = vmul.f32 %v1278, 0.01
          %v1318 = vmul.f32 %v1304, 0.01
          %v1319 = vsel %vm1307, %v1174, %v1313
          %v1320 = vsel %vm1308, %v1200, %v1314
          %v1321 = vsel %vm1309, %v1226, %v1315
          %v1322 = vsel %vm1310, %v1252, %v1316
          %v1323 = vsel %vm1311, %v1278, %v1317
          %v1324 = vsel %vm1312, %v1304, %v1318
          %v1325 = vpack.c.bf16 %v1319, %v1319
          %v1326 = vpack.c.bf16 %v1320, %v1320
          %v1327 = vpack.c.bf16 %v1321, %v1321
          %v1328 = vpack.c.bf16 %v1322, %v1322
          %v1329 = vpack.c.bf16 %v1323, %v1323
          %v1330 = vpack.c.bf16 %v1324, %v1324
          %v1331 = vld [vmem:[#allocation7] sm:$0xff]
          %v1332 = vld [vmem:[#allocation7 + $0x8] sm:$0xff]
          %v1333 = vld [vmem:[#allocation7 + $0x10] sm:$0xff]
          %v1334 = vld [vmem:[#allocation7 + $0x18] sm:$0xf]
          %v1335 = vld [vmem:[#allocation7 + $0x1c] sm:$0xff]
          %v1336 = vld [vmem:[#allocation7 + $0x24] sm:$0xff]
          %v1337 = vld [vmem:[#allocation7 + $0x2c] sm:$0xff]
          %v1338 = vld [vmem:[#allocation7 + $0x34] sm:$0xf]
          %v1339 = vld [vmem:[#allocation7 + $0x38] sm:$0xff]
          %v1340 = vld [vmem:[#allocation7 + $0x40] sm:$0xff]
          %v1341 = vld [vmem:[#allocation7 + $0x48] sm:$0xff]
          %v1342 = vld [vmem:[#allocation7 + $0x50] sm:$0xf]
          %v1343 = vld [vmem:[#allocation7 + $0x54] sm:$0xff]
          %v1344 = vld [vmem:[#allocation7 + $0x5c] sm:$0xff]
          %v1345 = vld [vmem:[#allocation7 + $0x64] sm:$0xff]
          %v1346 = vld [vmem:[#allocation7 + $0x6c] sm:$0xf]
          %v1347 = vld [vmem:[#allocation7 + $0x70] sm:$0xff]
          %v1348 = vld [vmem:[#allocation7 + $0x78] sm:$0xff]
          %v1349 = vld [vmem:[#allocation7 + $0x80] sm:$0xff]
          %v1350 = vld [vmem:[#allocation7 + $0x88] sm:$0xf]
          %v1351 = vld [vmem:[#allocation7 + $0x8c] sm:$0xff]
          %v1352 = vld [vmem:[#allocation7 + $0x94] sm:$0xff]
          %v1353 = vld [vmem:[#allocation7 + $0x9c] sm:$0xff]
          %v1354 = vld [vmem:[#allocation7 + $0xa4] sm:$0xf]
          %v1355 = vld [vmem:[#allocation7 + $0xa8] sm:$0xff]
          %v1356 = vld [vmem:[#allocation7 + $0xb0] sm:$0xff]
          %v1357 = vld [vmem:[#allocation7 + $0xb8] sm:$0xff]
          %v1358 = vld [vmem:[#allocation7 + $0xc0] sm:$0xf]
          %v1359 = vld [vmem:[#allocation7 + $0xc4] sm:$0xff]
          %v1360 = vld [vmem:[#allocation7 + $0xcc] sm:$0xff]
          %v1361 = vld [vmem:[#allocation7 + $0xd4] sm:$0xff]
          %v1362 = vld [vmem:[#allocation7 + $0xdc] sm:$0xf]
          %v1363 = vld [vmem:[#allocation7 + $0xe0] sm:$0xff]
          %v1364 = vld [vmem:[#allocation7 + $0xe8] sm:$0xff]
          %v1365 = vld [vmem:[#allocation7 + $0xf0] sm:$0xff]
          %v1366 = vld [vmem:[#allocation7 + $0xf8] sm:$0xf]
          %v1367 = vld [vmem:[#allocation7 + $0xfc] sm:$0xff]
          %v1368 = vld [vmem:[#allocation7 + $0x104] sm:$0xff]
          %v1369 = vld [vmem:[#allocation7 + $0x10c] sm:$0xff]
          %v1370 = vld [vmem:[#allocation7 + $0x114] sm:$0xf]
          %v1371 = vld [vmem:[#allocation7 + $0x118] sm:$0xff]
          %v1372 = vld [vmem:[#allocation7 + $0x120] sm:$0xff]
          %v1373 = vld [vmem:[#allocation7 + $0x128] sm:$0xff]
          %v1374 = vld [vmem:[#allocation7 + $0x130] sm:$0xf]
          %v1375 = vld [vmem:[#allocation7 + $0x134] sm:$0xff]
          %v1376 = vld [vmem:[#allocation7 + $0x13c] sm:$0xff]
          %v1377 = vld [vmem:[#allocation7 + $0x144] sm:$0xff]
          %v1378 = vld [vmem:[#allocation7 + $0x14c] sm:$0xf]
          %v1379 = vld [vmem:[#allocation7 + $0x150] sm:$0xff]
          %v1380 = vld [vmem:[#allocation7 + $0x158] sm:$0xff]
          %v1381 = vld [vmem:[#allocation7 + $0x160] sm:$0xff]
          %v1382 = vld [vmem:[#allocation7 + $0x168] sm:$0xf]
          %v1383 = vld [vmem:[#allocation7 + $0x16c] sm:$0xff]
          %v1384 = vld [vmem:[#allocation7 + $0x174] sm:$0xff]
          %v1385 = vld [vmem:[#allocation7 + $0x17c] sm:$0xff]
          %v1386 = vld [vmem:[#allocation7 + $0x184] sm:$0xf]
          %v1387 = vld [vmem:[#allocation7 + $0x188] sm:$0xff]
          %v1388 = vld [vmem:[#allocation7 + $0x190] sm:$0xff]
          %v1389 = vld [vmem:[#allocation7 + $0x198] sm:$0xff]
          %v1390 = vld [vmem:[#allocation7 + $0x1a0] sm:$0xf]
          %v1391 = vld [vmem:[#allocation7 + $0x1a4] sm:$0xff]
          %v1392 = vld [vmem:[#allocation7 + $0x1ac] sm:$0xff]
          %v1393 = vld [vmem:[#allocation7 + $0x1b4] sm:$0xff]
          %v1394 = vld [vmem:[#allocation7 + $0x1bc] sm:$0xf]
          %v1395 = vld [vmem:[#allocation7 + $0x1c0] sm:$0xff]
          %v1396 = vld [vmem:[#allocation7 + $0x1c8] sm:$0xff]
          %v1397 = vld [vmem:[#allocation7 + $0x1d0] sm:$0xff]
          %v1398 = vld [vmem:[#allocation7 + $0x1d8] sm:$0xf]
          %v1399 = vld [vmem:[#allocation7 + $0x1dc] sm:$0xff]
          %v1400 = vld [vmem:[#allocation7 + $0x1e4] sm:$0xff]
          %v1401 = vld [vmem:[#allocation7 + $0x1ec] sm:$0xff]
          %v1402 = vld [vmem:[#allocation7 + $0x1f4] sm:$0xf]
          %v1403 = vld [vmem:[#allocation7 + $0x1f8] sm:$0xff]
          %v1404 = vld [vmem:[#allocation7 + $0x200] sm:$0xff]
          %v1405 = vld [vmem:[#allocation7 + $0x208] sm:$0xff]
          %v1406 = vld [vmem:[#allocation7 + $0x210] sm:$0xf]
          %v1407 = vld [vmem:[#allocation7 + $0x214] sm:$0xff]
          %v1408 = vld [vmem:[#allocation7 + $0x21c] sm:$0xff]
          %v1409 = vld [vmem:[#allocation7 + $0x224] sm:$0xff]
          %v1410 = vld [vmem:[#allocation7 + $0x22c] sm:$0xf]
          %v1411 = vld [vmem:[#allocation7 + $0x230] sm:$0xff]
          %v1412 = vld [vmem:[#allocation7 + $0x238] sm:$0xff]
          %v1413 = vld [vmem:[#allocation7 + $0x240] sm:$0xff]
          %v1414 = vld [vmem:[#allocation7 + $0x248] sm:$0xf]
          %v1415 = vld [vmem:[#allocation7 + $0x24c] sm:$0xff]
          %v1416 = vld [vmem:[#allocation7 + $0x254] sm:$0xff]
          %v1417 = vld [vmem:[#allocation7 + $0x25c] sm:$0xff]
          %v1418 = vld [vmem:[#allocation7 + $0x264] sm:$0xf]
          %v1419 = vld [vmem:[#allocation7 + $0x268] sm:$0xff]
          %v1420 = vld [vmem:[#allocation7 + $0x270] sm:$0xff]
          %v1421 = vld [vmem:[#allocation7 + $0x278] sm:$0xff]
          %v1422 = vld [vmem:[#allocation7 + $0x280] sm:$0xf]
          %v1423 = vld [vmem:[#allocation7 + $0x284] sm:$0xff]
          %v1424 = vld [vmem:[#allocation7 + $0x28c] sm:$0xff]
          %v1425 = vld [vmem:[#allocation7 + $0x294] sm:$0xff]
          %v1426 = vld [vmem:[#allocation7 + $0x29c] sm:$0xf]
          %v1427 = vld [vmem:[#allocation7 + $0x2a0] sm:$0xff]
          %v1428 = vld [vmem:[#allocation7 + $0x2a8] sm:$0xff]
          %v1429 = vld [vmem:[#allocation7 + $0x2b0] sm:$0xff]
          %v1430 = vld [vmem:[#allocation7 + $0x2b8] sm:$0xf]
          %v1431 = vld [vmem:[#allocation7 + $0x2bc] sm:$0xff]
          %v1432 = vld [vmem:[#allocation7 + $0x2c4] sm:$0xff]
          %v1433 = vld [vmem:[#allocation7 + $0x2cc] sm:$0xff]
          %v1434 = vld [vmem:[#allocation7 + $0x2d4] sm:$0xf]
          %v1435 = vld [vmem:[#allocation7 + $0x2d8] sm:$0xff]
          %v1436 = vld [vmem:[#allocation7 + $0x2e0] sm:$0xff]
          %v1437 = vld [vmem:[#allocation7 + $0x2e8] sm:$0xff]
          %v1438 = vld [vmem:[#allocation7 + $0x2f0] sm:$0xf]
          %v1439 = vld [vmem:[#allocation7 + $0x2f4] sm:$0xff]
          %v1440 = vld [vmem:[#allocation7 + $0x2fc] sm:$0xff]
          %v1441 = vld [vmem:[#allocation7 + $0x304] sm:$0xff]
          %v1442 = vld [vmem:[#allocation7 + $0x30c] sm:$0xf]
          %v1443 = vld [vmem:[#allocation7 + $0x310] sm:$0xff]
          %v1444 = vld [vmem:[#allocation7 + $0x318] sm:$0xff]
          %v1445 = vld [vmem:[#allocation7 + $0x320] sm:$0xff]
          %v1446 = vld [vmem:[#allocation7 + $0x328] sm:$0xf]
          %v1447 = vld [vmem:[#allocation7 + $0x32c] sm:$0xff]
          %v1448 = vld [vmem:[#allocation7 + $0x334] sm:$0xff]
          %v1449 = vld [vmem:[#allocation7 + $0x33c] sm:$0xff]
          %v1450 = vld [vmem:[#allocation7 + $0x344] sm:$0xf]
          %v1451 = vld [vmem:[#allocation7 + $0x348] sm:$0xff]
          %v1452 = vld [vmem:[#allocation7 + $0x350] sm:$0xff]
          %v1453 = vld [vmem:[#allocation7 + $0x358] sm:$0xff]
          %v1454 = vld [vmem:[#allocation7 + $0x360] sm:$0xf]
          %v1455 = vld [vmem:[#allocation7 + $0x364] sm:$0xff]
          %v1456 = vld [vmem:[#allocation7 + $0x36c] sm:$0xff]
          %v1457 = vld [vmem:[#allocation7 + $0x374] sm:$0xff]
          %v1458 = vld [vmem:[#allocation7 + $0x37c] sm:$0xf]
          %v1459 = vld [vmem:[#allocation7 + $0x380] sm:$0xff]
          %v1460 = vld [vmem:[#allocation7 + $0x388] sm:$0xff]
          %v1461 = vld [vmem:[#allocation7 + $0x390] sm:$0xff]
          %v1462 = vld [vmem:[#allocation7 + $0x398] sm:$0xf]
          %v1463 = vld [vmem:[#allocation7 + $0x39c] sm:$0xff]
          %v1464 = vld [vmem:[#allocation7 + $0x3a4] sm:$0xff]
          %v1465 = vld [vmem:[#allocation7 + $0x3ac] sm:$0xff]
          %v1466 = vld [vmem:[#allocation7 + $0x3b4] sm:$0xf]
          %v1467 = vld [vmem:[#allocation7 + $0x3b8] sm:$0xff]
          %v1468 = vld [vmem:[#allocation7 + $0x3c0] sm:$0xff]
          %v1469 = vld [vmem:[#allocation7 + $0x3c8] sm:$0xff]
          %v1470 = vld [vmem:[#allocation7 + $0x3d0] sm:$0xf]
          %v1471 = vld [vmem:[#allocation7 + $0x3d4] sm:$0xff]
          %v1472 = vld [vmem:[#allocation7 + $0x3dc] sm:$0xff]
          %v1473 = vld [vmem:[#allocation7 + $0x3e4] sm:$0xff]
          %v1474 = vld [vmem:[#allocation7 + $0x3ec] sm:$0xf]
          %v1475 = vld [vmem:[#allocation7 + $0x3f0] sm:$0xff]
          %v1476 = vld [vmem:[#allocation7 + $0x3f8] sm:$0xff]
          %v1477 = vld [vmem:[#allocation7 + $0x400] sm:$0xff]
          %v1478 = vld [vmem:[#allocation7 + $0x408] sm:$0xf]
          %v1479 = vld [vmem:[#allocation7 + $0x40c] sm:$0xff]
          %v1480 = vld [vmem:[#allocation7 + $0x414] sm:$0xff]
          %v1481 = vld [vmem:[#allocation7 + $0x41c] sm:$0xff]
          %v1482 = vld [vmem:[#allocation7 + $0x424] sm:$0xf]
          %v1483 = vld [vmem:[#allocation7 + $0x428] sm:$0xff]
          %v1484 = vld [vmem:[#allocation7 + $0x430] sm:$0xff]
          %v1485 = vld [vmem:[#allocation7 + $0x438] sm:$0xff]
          %v1486 = vld [vmem:[#allocation7 + $0x440] sm:$0xf]
          %v1487 = vld [vmem:[#allocation7 + $0x444] sm:$0xff]
          %v1488 = vld [vmem:[#allocation7 + $0x44c] sm:$0xff]
          %v1489 = vld [vmem:[#allocation7 + $0x454] sm:$0xff]
          %v1490 = vld [vmem:[#allocation7 + $0x45c] sm:$0xf]
          %v1491 = vld [vmem:[#allocation7 + $0x460] sm:$0xff]
          %v1492 = vld [vmem:[#allocation7 + $0x468] sm:$0xff]
          %v1493 = vld [vmem:[#allocation7 + $0x470] sm:$0xff]
          %v1494 = vld [vmem:[#allocation7 + $0x478] sm:$0xf]
          %v1495 = vld [vmem:[#allocation7 + $0x47c] sm:$0xff]
          %v1496 = vld [vmem:[#allocation7 + $0x484] sm:$0xff]
          %v1497 = vld [vmem:[#allocation7 + $0x48c] sm:$0xff]
          %v1498 = vld [vmem:[#allocation7 + $0x494] sm:$0xf]
          %v1499 = vld [vmem:[#allocation7 + $0x498] sm:$0xff]
          %v1500 = vld [vmem:[#allocation7 + $0x4a0] sm:$0xff]
          %v1501 = vld [vmem:[#allocation7 + $0x4a8] sm:$0xff]
          %v1502 = vld [vmem:[#allocation7 + $0x4b0] sm:$0xf]
          %v1503 = vld [vmem:[#allocation7 + $0x4b4] sm:$0xff]
          %v1504 = vld [vmem:[#allocation7 + $0x4bc] sm:$0xff]
          %v1505 = vld [vmem:[#allocation7 + $0x4c4] sm:$0xff]
          %v1506 = vld [vmem:[#allocation7 + $0x4cc] sm:$0xf]
          %v1507 = vld [vmem:[#allocation7 + $0x4d0] sm:$0xff]
          %v1508 = vld [vmem:[#allocation7 + $0x4d8] sm:$0xff]
          %v1509 = vld [vmem:[#allocation7 + $0x4e0] sm:$0xff]
          %v1510 = vld [vmem:[#allocation7 + $0x4e8] sm:$0xf]
          %v1511 = vld [vmem:[#allocation7 + $0x4ec] sm:$0xff]
          %v1512 = vld [vmem:[#allocation7 + $0x4f4] sm:$0xff]
          %v1513 = vld [vmem:[#allocation7 + $0x4fc] sm:$0xff]
          %v1514 = vld [vmem:[#allocation7 + $0x504] sm:$0xf]
          %v1515 = vld [vmem:[#allocation7 + $0x508] sm:$0xff]
          %v1516 = vld [vmem:[#allocation7 + $0x510] sm:$0xff]
          %v1517 = vld [vmem:[#allocation7 + $0x518] sm:$0xff]
          %v1518 = vld [vmem:[#allocation7 + $0x520] sm:$0xf]
          %v1519 = vld [vmem:[#allocation7 + $0x524] sm:$0xff]
          %v1520 = vld [vmem:[#allocation7 + $0x52c] sm:$0xff]
          %v1521 = vld [vmem:[#allocation7 + $0x534] sm:$0xff]
          %v1522 = vld [vmem:[#allocation7 + $0x53c] sm:$0xf]
          %v1523 = vld [vmem:[#allocation7 + $0x540] sm:$0xff]
          %v1524 = vld [vmem:[#allocation7 + $0x548] sm:$0xff]
          %v1525 = vld [vmem:[#allocation7 + $0x550] sm:$0xff]
          %v1526 = vld [vmem:[#allocation7 + $0x558] sm:$0xf]
          %v1527 = vld [vmem:[#allocation7 + $0x55c] sm:$0xff]
          %v1528 = vld [vmem:[#allocation7 + $0x564] sm:$0xff]
          %v1529 = vld [vmem:[#allocation7 + $0x56c] sm:$0xff]
          %v1530 = vld [vmem:[#allocation7 + $0x574] sm:$0xf]
          %v1531 = vld [vmem:[#allocation7 + $0x578] sm:$0xff]
          %v1532 = vld [vmem:[#allocation7 + $0x580] sm:$0xff]
          %v1533 = vld [vmem:[#allocation7 + $0x588] sm:$0xff]
          %v1534 = vld [vmem:[#allocation7 + $0x590] sm:$0xf]
          %v1535 = vld [vmem:[#allocation7 + $0x594] sm:$0xff]
          %v1536 = vld [vmem:[#allocation7 + $0x59c] sm:$0xff]
          %v1537 = vld [vmem:[#allocation7 + $0x5a4] sm:$0xff]
          %v1538 = vld [vmem:[#allocation7 + $0x5ac] sm:$0xf]
          %v1539 = vld [vmem:[#allocation7 + $0x5b0] sm:$0xff]
          %v1540 = vld [vmem:[#allocation7 + $0x5b8] sm:$0xff]
          %v1541 = vld [vmem:[#allocation7 + $0x5c0] sm:$0xff]
          %v1542 = vld [vmem:[#allocation7 + $0x5c8] sm:$0xf]
          %v1543 = vld [vmem:[#allocation7 + $0x5cc] sm:$0xff]
          %v1544 = vld [vmem:[#allocation7 + $0x5d4] sm:$0xff]
          %v1545 = vld [vmem:[#allocation7 + $0x5dc] sm:$0xff]
          %v1546 = vld [vmem:[#allocation7 + $0x5e4] sm:$0xf]
          %v1547 = vld [vmem:[#allocation7 + $0x5e8] sm:$0xff]
          %v1548 = vld [vmem:[#allocation7 + $0x5f0] sm:$0xff]
          %v1549 = vld [vmem:[#allocation7 + $0x5f8] sm:$0xff]
          %v1550 = vld [vmem:[#allocation7 + $0x600] sm:$0xf]
          %v1551 = vld [vmem:[#allocation7 + $0x604] sm:$0xff]
          %v1552 = vld [vmem:[#allocation7 + $0x60c] sm:$0xff]
          %v1553 = vld [vmem:[#allocation7 + $0x614] sm:$0xff]
          %v1554 = vld [vmem:[#allocation7 + $0x61c] sm:$0xf]
          %v1555 = vld [vmem:[#allocation7 + $0x620] sm:$0xff]
          %v1556 = vld [vmem:[#allocation7 + $0x628] sm:$0xff]
          %v1557 = vld [vmem:[#allocation7 + $0x630] sm:$0xff]
          %v1558 = vld [vmem:[#allocation7 + $0x638] sm:$0xf]
          %v1559 = vld [vmem:[#allocation7 + $0x63c] sm:$0xff]
          %v1560 = vld [vmem:[#allocation7 + $0x644] sm:$0xff]
          %v1561 = vld [vmem:[#allocation7 + $0x64c] sm:$0xff]
          %v1562 = vld [vmem:[#allocation7 + $0x654] sm:$0xf]
          %v1563 = vld [vmem:[#allocation7 + $0x658] sm:$0xff]
          %v1564 = vld [vmem:[#allocation7 + $0x660] sm:$0xff]
          %v1565 = vld [vmem:[#allocation7 + $0x668] sm:$0xff]
          %v1566 = vld [vmem:[#allocation7 + $0x670] sm:$0xf]
          %v1567 = vld [vmem:[#allocation7 + $0x674] sm:$0xff]
          %v1568 = vld [vmem:[#allocation7 + $0x67c] sm:$0xff]
          %v1569 = vld [vmem:[#allocation7 + $0x684] sm:$0xff]
          %v1570 = vld [vmem:[#allocation7 + $0x68c] sm:$0xf]
          %v1571 = vld [vmem:[#allocation7 + $0x690] sm:$0xff]
          %v1572 = vld [vmem:[#allocation7 + $0x698] sm:$0xff]
          %v1573 = vld [vmem:[#allocation7 + $0x6a0] sm:$0xff]
          %v1574 = vld [vmem:[#allocation7 + $0x6a8] sm:$0xf]
          %v1575 = vld [vmem:[#allocation7 + $0x6ac] sm:$0xff]
          %v1576 = vld [vmem:[#allocation7 + $0x6b4] sm:$0xff]
          %v1577 = vld [vmem:[#allocation7 + $0x6bc] sm:$0xff]
          %v1578 = vld [vmem:[#allocation7 + $0x6c4] sm:$0xf]
          %v1579 = vld [vmem:[#allocation7 + $0x6c8] sm:$0xff]
          %v1580 = vld [vmem:[#allocation7 + $0x6d0] sm:$0xff]
          %v1581 = vld [vmem:[#allocation7 + $0x6d8] sm:$0xff]
          %v1582 = vld [vmem:[#allocation7 + $0x6e0] sm:$0xf]
          %v1583 = vld [vmem:[#allocation7 + $0x6e4] sm:$0xff]
          %v1584 = vld [vmem:[#allocation7 + $0x6ec] sm:$0xff]
          %v1585 = vld [vmem:[#allocation7 + $0x6f4] sm:$0xff]
          %v1586 = vld [vmem:[#allocation7 + $0x6fc] sm:$0xf]
          %v1587 = vld [vmem:[#allocation7 + $0x700] sm:$0xff]
          %v1588 = vld [vmem:[#allocation7 + $0x708] sm:$0xff]
          %v1589 = vld [vmem:[#allocation7 + $0x710] sm:$0xff]
          %v1590 = vld [vmem:[#allocation7 + $0x718] sm:$0xf]
          %v1591 = vld [vmem:[#allocation7 + $0x71c] sm:$0xff]
          %v1592 = vld [vmem:[#allocation7 + $0x724] sm:$0xff]
          %v1593 = vld [vmem:[#allocation7 + $0x72c] sm:$0xff]
          %v1594 = vld [vmem:[#allocation7 + $0x734] sm:$0xf]
          %v1595 = vld [vmem:[#allocation7 + $0x738] sm:$0xff]
          %v1596 = vld [vmem:[#allocation7 + $0x740] sm:$0xff]
          %v1597 = vld [vmem:[#allocation7 + $0x748] sm:$0xff]
          %v1598 = vld [vmem:[#allocation7 + $0x750] sm:$0xf]
          %v1599 = vld [vmem:[#allocation7 + $0x754] sm:$0xff]
          %v1600 = vld [vmem:[#allocation7 + $0x75c] sm:$0xff]
          %v1601 = vld [vmem:[#allocation7 + $0x764] sm:$0xff]
          %v1602 = vld [vmem:[#allocation7 + $0x76c] sm:$0xf]
          %v1603 = vld [vmem:[#allocation7 + $0x770] sm:$0xff]
          %v1604 = vld [vmem:[#allocation7 + $0x778] sm:$0xff]
          %v1605 = vld [vmem:[#allocation7 + $0x780] sm:$0xff]
          %v1606 = vld [vmem:[#allocation7 + $0x788] sm:$0xf]
          %v1607 = vld [vmem:[#allocation7 + $0x78c] sm:$0xff]
          %v1608 = vld [vmem:[#allocation7 + $0x794] sm:$0xff]
          %v1609 = vld [vmem:[#allocation7 + $0x79c] sm:$0xff]
          %v1610 = vld [vmem:[#allocation7 + $0x7a4] sm:$0xf]
          %v1611 = vld [vmem:[#allocation7 + $0x7a8] sm:$0xff]
          %v1612 = vld [vmem:[#allocation7 + $0x7b0] sm:$0xff]
          %v1613 = vld [vmem:[#allocation7 + $0x7b8] sm:$0xff]
          %v1614 = vld [vmem:[#allocation7 + $0x7c0] sm:$0xf]
          %v1615 = vld [vmem:[#allocation7 + $0x7c4] sm:$0xff]
          %v1616 = vld [vmem:[#allocation7 + $0x7cc] sm:$0xff]
          %v1617 = vld [vmem:[#allocation7 + $0x7d4] sm:$0xff]
          %v1618 = vld [vmem:[#allocation7 + $0x7dc] sm:$0xf]
          %v1619 = vld [vmem:[#allocation7 + $0x7e0] sm:$0xff]
          %v1620 = vld [vmem:[#allocation7 + $0x7e8] sm:$0xff]
          %v1621 = vld [vmem:[#allocation7 + $0x7f0] sm:$0xff]
          %v1622 = vld [vmem:[#allocation7 + $0x7f8] sm:$0xf]
          %v1623 = vld [vmem:[#allocation7 + $0x7fc] sm:$0xff]
          %v1624 = vld [vmem:[#allocation7 + $0x804] sm:$0xff]
          %v1625 = vld [vmem:[#allocation7 + $0x80c] sm:$0xff]
          %v1626 = vld [vmem:[#allocation7 + $0x814] sm:$0xf]
          %v1627 = vld [vmem:[#allocation7 + $0x818] sm:$0xff]
          %v1628 = vld [vmem:[#allocation7 + $0x820] sm:$0xff]
          %v1629 = vld [vmem:[#allocation7 + $0x828] sm:$0xff]
          %v1630 = vld [vmem:[#allocation7 + $0x830] sm:$0xf]
          %v1631 = vld [vmem:[#allocation7 + $0x834] sm:$0xff]
          %v1632 = vld [vmem:[#allocation7 + $0x83c] sm:$0xff]
          %v1633 = vld [vmem:[#allocation7 + $0x844] sm:$0xff]
          %v1634 = vld [vmem:[#allocation7 + $0x84c] sm:$0xf]
          %v1635 = vld [vmem:[#allocation7 + $0x850] sm:$0xff]
          %v1636 = vld [vmem:[#allocation7 + $0x858] sm:$0xff]
          %v1637 = vld [vmem:[#allocation7 + $0x860] sm:$0xff]
          %v1638 = vld [vmem:[#allocation7 + $0x868] sm:$0xf]
          %v1639 = vld [vmem:[#allocation7 + $0x86c] sm:$0xff]
          %v1640 = vld [vmem:[#allocation7 + $0x874] sm:$0xff]
          %v1641 = vld [vmem:[#allocation7 + $0x87c] sm:$0xff]
          %v1642 = vld [vmem:[#allocation7 + $0x884] sm:$0xf]
          %v1643 = vld [vmem:[#allocation7 + $0x888] sm:$0xff]
          %v1644 = vld [vmem:[#allocation7 + $0x890] sm:$0xff]
          %v1645 = vld [vmem:[#allocation7 + $0x898] sm:$0xff]
          %v1646 = vld [vmem:[#allocation7 + $0x8a0] sm:$0xf]
          %v1647 = vld [vmem:[#allocation7 + $0x8a4] sm:$0xff]
          %v1648 = vld [vmem:[#allocation7 + $0x8ac] sm:$0xff]
          %v1649 = vld [vmem:[#allocation7 + $0x8b4] sm:$0xff]
          %v1650 = vld [vmem:[#allocation7 + $0x8bc] sm:$0xf]
          %v1651 = vld [vmem:[#allocation7 + $0x8c0] sm:$0xff]
          %v1652 = vld [vmem:[#allocation7 + $0x8c8] sm:$0xff]
          %v1653 = vld [vmem:[#allocation7 + $0x8d0] sm:$0xff]
          %v1654 = vld [vmem:[#allocation7 + $0x8d8] sm:$0xf]
          %v1655 = vld [vmem:[#allocation7 + $0x8dc] sm:$0xff]
          %v1656 = vld [vmem:[#allocation7 + $0x8e4] sm:$0xff]
          %v1657 = vld [vmem:[#allocation7 + $0x8ec] sm:$0xff]
          %v1658 = vld [vmem:[#allocation7 + $0x8f4] sm:$0xf]
          %v1659 = vld [vmem:[#allocation7 + $0x8f8] sm:$0xff]
          %v1660 = vld [vmem:[#allocation7 + $0x900] sm:$0xff]
          %v1661 = vld [vmem:[#allocation7 + $0x908] sm:$0xff]
          %v1662 = vld [vmem:[#allocation7 + $0x910] sm:$0xf]
          %v1663 = vld [vmem:[#allocation7 + $0x914] sm:$0xff]
          %v1664 = vld [vmem:[#allocation7 + $0x91c] sm:$0xff]
          %v1665 = vld [vmem:[#allocation7 + $0x924] sm:$0xff]
          %v1666 = vld [vmem:[#allocation7 + $0x92c] sm:$0xf]
          %v1667 = vld [vmem:[#allocation7 + $0x930] sm:$0x33]
          %v1668 = vld [vmem:[#allocation7 + $0x938] sm:$0x33]
          %v1669 = vld [vmem:[#allocation7 + $0x940] sm:$0x33]
          %v1670 = vld [vmem:[#allocation7 + $0x948] sm:$0x3]
          %v1671 = vld [vmem:[#allocation9] sm:$0x7f]
          %v1673 = vperm.slane %v1671, 0
          %v1674 = vperm.slane %v1671, 1
          %v1675 = vperm.slane %v1671, 2
          %v1676 = vperm.slane %v1671, 3
          %v1677 = vperm.slane %v1671, 4
          %v1678 = vperm.slane %v1671, 5
          %v1679 = vperm.slane %v1671, 6
          %v2027 = vunpack.c.l.b16 %v1331
          %v2028 = vunpack.c.h.b16 %v1331
          %v2029 = vunpack.c.l.b16 %v1332
          %v2030 = vunpack.c.h.b16 %v1332
          %v2031 = vunpack.c.l.b16 %v1333
          %v2032 = vunpack.c.h.b16 %v1333
          %v2033 = vunpack.c.l.b16 %v1334
          %v2034 = vunpack.c.l.b16 %v1335
          %v2035 = vunpack.c.h.b16 %v1335
          %v2036 = vunpack.c.l.b16 %v1336
          %v2037 = vunpack.c.h.b16 %v1336
          %v2038 = vunpack.c.l.b16 %v1337
          %v2039 = vunpack.c.h.b16 %v1337
          %v2040 = vunpack.c.l.b16 %v1338
          %v2041 = vunpack.c.l.b16 %v1339
          %v2042 = vunpack.c.h.b16 %v1339
          %v2043 = vunpack.c.l.b16 %v1340
          %v2044 = vunpack.c.h.b16 %v1340
          %v2045 = vunpack.c.l.b16 %v1341
          %v2046 = vunpack.c.h.b16 %v1341
          %v2047 = vunpack.c.l.b16 %v1342
          %v2048 = vunpack.c.l.b16 %v1343
          %v2049 = vunpack.c.h.b16 %v1343
          %v2050 = vunpack.c.l.b16 %v1344
          %v2051 = vunpack.c.h.b16 %v1344
          %v2052 = vunpack.c.l.b16 %v1345
          %v2053 = vunpack.c.h.b16 %v1345
          %v2054 = vunpack.c.l.b16 %v1346
          %v2055 = vunpack.c.l.b16 %v1347
          %v2056 = vunpack.c.h.b16 %v1347
          %v2057 = vunpack.c.l.b16 %v1348
          %v2058 = vunpack.c.h.b16 %v1348
          %v2059 = vunpack.c.l.b16 %v1349
          %v2060 = vunpack.c.h.b16 %v1349
          %v2061 = vunpack.c.l.b16 %v1350
          %v2062 = vunpack.c.l.b16 %v1351
          %v2063 = vunpack.c.h.b16 %v1351
          %v2064 = vunpack.c.l.b16 %v1352
          %v2065 = vunpack.c.h.b16 %v1352
          %v2066 = vunpack.c.l.b16 %v1353
          %v2067 = vunpack.c.h.b16 %v1353
          %v2068 = vunpack.c.l.b16 %v1354
          %v2069 = vunpack.c.l.b16 %v1355
          %v2070 = vunpack.c.h.b16 %v1355
          %v2071 = vunpack.c.l.b16 %v1356
          %v2072 = vunpack.c.h.b16 %v1356
          %v2073 = vunpack.c.l.b16 %v1357
          %v2074 = vunpack.c.h.b16 %v1357
          %v2075 = vunpack.c.l.b16 %v1358
          %v2076 = vunpack.c.l.b16 %v1359
          %v2077 = vunpack.c.h.b16 %v1359
          %v2078 = vunpack.c.l.b16 %v1360
          %v2079 = vunpack.c.h.b16 %v1360
          %v2080 = vunpack.c.l.b16 %v1361
          %v2081 = vunpack.c.h.b16 %v1361
          %v2082 = vunpack.c.l.b16 %v1362
          %v2083 = vunpack.c.l.b16 %v1363
          %v2084 = vunpack.c.h.b16 %v1363
          %v2085 = vunpack.c.l.b16 %v1364
          %v2086 = vunpack.c.h.b16 %v1364
          %v2087 = vunpack.c.l.b16 %v1365
          %v2088 = vunpack.c.h.b16 %v1365
          %v2089 = vunpack.c.l.b16 %v1366
          %v2090 = vunpack.c.l.b16 %v1367
          %v2091 = vunpack.c.h.b16 %v1367
          %v2092 = vunpack.c.l.b16 %v1368
          %v2093 = vunpack.c.h.b16 %v1368
          %v2094 = vunpack.c.l.b16 %v1369
          %v2095 = vunpack.c.h.b16 %v1369
          %v2096 = vunpack.c.l.b16 %v1370
          %v2097 = vunpack.c.l.b16 %v1371
          %v2098 = vunpack.c.h.b16 %v1371
          %v2099 = vunpack.c.l.b16 %v1372
          %v2100 = vunpack.c.h.b16 %v1372
          %v2101 = vunpack.c.l.b16 %v1373
          %v2102 = vunpack.c.h.b16 %v1373
          %v2103 = vunpack.c.l.b16 %v1374
          %v2104 = vunpack.c.l.b16 %v1375
          %v2105 = vunpack.c.h.b16 %v1375
          %v2106 = vunpack.c.l.b16 %v1376
          %v2107 = vunpack.c.h.b16 %v1376
          %v2108 = vunpack.c.l.b16 %v1377
          %v2109 = vunpack.c.h.b16 %v1377
          %v2110 = vunpack.c.l.b16 %v1378
          %v2111 = vunpack.c.l.b16 %v1379
          %v2112 = vunpack.c.h.b16 %v1379
          %v2113 = vunpack.c.l.b16 %v1380
          %v2114 = vunpack.c.h.b16 %v1380
          %v2115 = vunpack.c.l.b16 %v1381
          %v2116 = vunpack.c.h.b16 %v1381
          %v2117 = vunpack.c.l.b16 %v1382
          %v2118 = vunpack.c.l.b16 %v1383
          %v2119 = vunpack.c.h.b16 %v1383
          %v2120 = vunpack.c.l.b16 %v1384
          %v2121 = vunpack.c.h.b16 %v1384
          %v2122 = vunpack.c.l.b16 %v1385
          %v2123 = vunpack.c.h.b16 %v1385
          %v2124 = vunpack.c.l.b16 %v1386
          %v2125 = vunpack.c.l.b16 %v1387
          %v2126 = vunpack.c.h.b16 %v1387
          %v2127 = vunpack.c.l.b16 %v1388
          %v2128 = vunpack.c.h.b16 %v1388
          %v2129 = vunpack.c.l.b16 %v1389
          %v2130 = vunpack.c.h.b16 %v1389
          %v2131 = vunpack.c.l.b16 %v1390
          %v2132 = vunpack.c.l.b16 %v1391
          %v2133 = vunpack.c.h.b16 %v1391
          %v2134 = vunpack.c.l.b16 %v1392
          %v2135 = vunpack.c.h.b16 %v1392
          %v2136 = vunpack.c.l.b16 %v1393
          %v2137 = vunpack.c.h.b16 %v1393
          %v2138 = vunpack.c.l.b16 %v1394
          %v2139 = vunpack.c.l.b16 %v1395
          %v2140 = vunpack.c.h.b16 %v1395
          %v2141 = vunpack.c.l.b16 %v1396
          %v2142 = vunpack.c.h.b16 %v1396
          %v2143 = vunpack.c.l.b16 %v1397
          %v2144 = vunpack.c.h.b16 %v1397
          %v2145 = vunpack.c.l.b16 %v1398
          %v2146 = vunpack.c.l.b16 %v1399
          %v2147 = vunpack.c.h.b16 %v1399
          %v2148 = vunpack.c.l.b16 %v1400
          %v2149 = vunpack.c.h.b16 %v1400
          %v2150 = vunpack.c.l.b16 %v1401
          %v2151 = vunpack.c.h.b16 %v1401
          %v2152 = vunpack.c.l.b16 %v1402
          %v2153 = vunpack.c.l.b16 %v1403
          %v2154 = vunpack.c.h.b16 %v1403
          %v2155 = vunpack.c.l.b16 %v1404
          %v2156 = vunpack.c.h.b16 %v1404
          %v2157 = vunpack.c.l.b16 %v1405
          %v2158 = vunpack.c.h.b16 %v1405
          %v2159 = vunpack.c.l.b16 %v1406
          %v2160 = vunpack.c.l.b16 %v1407
          %v2161 = vunpack.c.h.b16 %v1407
          %v2162 = vunpack.c.l.b16 %v1408
          %v2163 = vunpack.c.h.b16 %v1408
          %v2164 = vunpack.c.l.b16 %v1409
          %v2165 = vunpack.c.h.b16 %v1409
          %v2166 = vunpack.c.l.b16 %v1410
          %v2167 = vunpack.c.l.b16 %v1411
          %v2168 = vunpack.c.h.b16 %v1411
          %v2169 = vunpack.c.l.b16 %v1412
          %v2170 = vunpack.c.h.b16 %v1412
          %v2171 = vunpack.c.l.b16 %v1413
          %v2172 = vunpack.c.h.b16 %v1413
          %v2173 = vunpack.c.l.b16 %v1414
          %v2174 = vunpack.c.l.b16 %v1415
          %v2175 = vunpack.c.h.b16 %v1415
          %v2176 = vunpack.c.l.b16 %v1416
          %v2177 = vunpack.c.h.b16 %v1416
          %v2178 = vunpack.c.l.b16 %v1417
          %v2179 = vunpack.c.h.b16 %v1417
          %v2180 = vunpack.c.l.b16 %v1418
          %v2181 = vunpack.c.l.b16 %v1419
          %v2182 = vunpack.c.h.b16 %v1419
          %v2183 = vunpack.c.l.b16 %v1420
          %v2184 = vunpack.c.h.b16 %v1420
          %v2185 = vunpack.c.l.b16 %v1421
          %v2186 = vunpack.c.h.b16 %v1421
          %v2187 = vunpack.c.l.b16 %v1422
          %v2188 = vunpack.c.l.b16 %v1423
          %v2189 = vunpack.c.h.b16 %v1423
          %v2190 = vunpack.c.l.b16 %v1424
          %v2191 = vunpack.c.h.b16 %v1424
          %v2192 = vunpack.c.l.b16 %v1425
          %v2193 = vunpack.c.h.b16 %v1425
          %v2194 = vunpack.c.l.b16 %v1426
          %v2195 = vunpack.c.l.b16 %v1427
          %v2196 = vunpack.c.h.b16 %v1427
          %v2197 = vunpack.c.l.b16 %v1428
          %v2198 = vunpack.c.h.b16 %v1428
          %v2199 = vunpack.c.l.b16 %v1429
          %v2200 = vunpack.c.h.b16 %v1429
          %v2201 = vunpack.c.l.b16 %v1430
          %v2202 = vunpack.c.l.b16 %v1431
          %v2203 = vunpack.c.h.b16 %v1431
          %v2204 = vunpack.c.l.b16 %v1432
          %v2205 = vunpack.c.h.b16 %v1432
          %v2206 = vunpack.c.l.b16 %v1433
          %v2207 = vunpack.c.h.b16 %v1433
          %v2208 = vunpack.c.l.b16 %v1434
          %v2209 = vunpack.c.l.b16 %v1435
          %v2210 = vunpack.c.h.b16 %v1435
          %v2211 = vunpack.c.l.b16 %v1436
          %v2212 = vunpack.c.h.b16 %v1436
          %v2213 = vunpack.c.l.b16 %v1437
          %v2214 = vunpack.c.h.b16 %v1437
          %v2215 = vunpack.c.l.b16 %v1438
          %v2216 = vunpack.c.l.b16 %v1439
          %v2217 = vunpack.c.h.b16 %v1439
          %v2218 = vunpack.c.l.b16 %v1440
          %v2219 = vunpack.c.h.b16 %v1440
          %v2220 = vunpack.c.l.b16 %v1441
          %v2221 = vunpack.c.h.b16 %v1441
          %v2222 = vunpack.c.l.b16 %v1442
          %v2223 = vunpack.c.l.b16 %v1443
          %v2224 = vunpack.c.h.b16 %v1443
          %v2225 = vunpack.c.l.b16 %v1444
          %v2226 = vunpack.c.h.b16 %v1444
          %v2227 = vunpack.c.l.b16 %v1445
          %v2228 = vunpack.c.h.b16 %v1445
          %v2229 = vunpack.c.l.b16 %v1446
          %v2230 = vunpack.c.l.b16 %v1447
          %v2231 = vunpack.c.h.b16 %v1447
          %v2232 = vunpack.c.l.b16 %v1448
          %v2233 = vunpack.c.h.b16 %v1448
          %v2234 = vunpack.c.l.b16 %v1449
          %v2235 = vunpack.c.h.b16 %v1449
          %v2236 = vunpack.c.l.b16 %v1450
          %v2237 = vunpack.c.l.b16 %v1451
          %v2238 = vunpack.c.h.b16 %v1451
          %v2239 = vunpack.c.l.b16 %v1452
          %v2240 = vunpack.c.h.b16 %v1452
          %v2241 = vunpack.c.l.b16 %v1453
          %v2242 = vunpack.c.h.b16 %v1453
          %v2243 = vunpack.c.l.b16 %v1454
          %v2244 = vunpack.c.l.b16 %v1455
          %v2245 = vunpack.c.h.b16 %v1455
          %v2246 = vunpack.c.l.b16 %v1456
          %v2247 = vunpack.c.h.b16 %v1456
          %v2248 = vunpack.c.l.b16 %v1457
          %v2249 = vunpack.c.h.b16 %v1457
          %v2250 = vunpack.c.l.b16 %v1458
          %v2251 = vunpack.c.l.b16 %v1459
          %v2252 = vunpack.c.h.b16 %v1459
          %v2253 = vunpack.c.l.b16 %v1460
          %v2254 = vunpack.c.h.b16 %v1460
          %v2255 = vunpack.c.l.b16 %v1461
          %v2256 = vunpack.c.h.b16 %v1461
          %v2257 = vunpack.c.l.b16 %v1462
          %v2258 = vunpack.c.l.b16 %v1463
          %v2259 = vunpack.c.h.b16 %v1463
          %v2260 = vunpack.c.l.b16 %v1464
          %v2261 = vunpack.c.h.b16 %v1464
          %v2262 = vunpack.c.l.b16 %v1465
          %v2263 = vunpack.c.h.b16 %v1465
          %v2264 = vunpack.c.l.b16 %v1466
          %v2265 = vunpack.c.l.b16 %v1467
          %v2266 = vunpack.c.h.b16 %v1467
          %v2267 = vunpack.c.l.b16 %v1468
          %v2268 = vunpack.c.h.b16 %v1468
          %v2269 = vunpack.c.l.b16 %v1469
          %v2270 = vunpack.c.h.b16 %v1469
          %v2271 = vunpack.c.l.b16 %v1470
          %v2272 = vunpack.c.l.b16 %v1471
          %v2273 = vunpack.c.h.b16 %v1471
          %v2274 = vunpack.c.l.b16 %v1472
          %v2275 = vunpack.c.h.b16 %v1472
          %v2276 = vunpack.c.l.b16 %v1473
          %v2277 = vunpack.c.h.b16 %v1473
          %v2278 = vunpack.c.l.b16 %v1474
          %v2279 = vunpack.c.l.b16 %v1475
          %v2280 = vunpack.c.h.b16 %v1475
          %v2281 = vunpack.c.l.b16 %v1476
          %v2282 = vunpack.c.h.b16 %v1476
          %v2283 = vunpack.c.l.b16 %v1477
          %v2284 = vunpack.c.h.b16 %v1477
          %v2285 = vunpack.c.l.b16 %v1478
          %v2286 = vunpack.c.l.b16 %v1479
          %v2287 = vunpack.c.h.b16 %v1479
          %v2288 = vunpack.c.l.b16 %v1480
          %v2289 = vunpack.c.h.b16 %v1480
          %v2290 = vunpack.c.l.b16 %v1481
          %v2291 = vunpack.c.h.b16 %v1481
          %v2292 = vunpack.c.l.b16 %v1482
          %v2293 = vunpack.c.l.b16 %v1483
          %v2294 = vunpack.c.h.b16 %v1483
          %v2295 = vunpack.c.l.b16 %v1484
          %v2296 = vunpack.c.h.b16 %v1484
          %v2297 = vunpack.c.l.b16 %v1485
          %v2298 = vunpack.c.h.b16 %v1485
          %v2299 = vunpack.c.l.b16 %v1486
          %v2300 = vunpack.c.l.b16 %v1487
          %v2301 = vunpack.c.h.b16 %v1487
          %v2302 = vunpack.c.l.b16 %v1488
          %v2303 = vunpack.c.h.b16 %v1488
          %v2304 = vunpack.c.l.b16 %v1489
          %v2305 = vunpack.c.h.b16 %v1489
          %v2306 = vunpack.c.l.b16 %v1490
          %v2307 = vunpack.c.l.b16 %v1491
          %v2308 = vunpack.c.h.b16 %v1491
          %v2309 = vunpack.c.l.b16 %v1492
          %v2310 = vunpack.c.h.b16 %v1492
          %v2311 = vunpack.c.l.b16 %v1493
          %v2312 = vunpack.c.h.b16 %v1493
          %v2313 = vunpack.c.l.b16 %v1494
          %v2314 = vunpack.c.l.b16 %v1495
          %v2315 = vunpack.c.h.b16 %v1495
          %v2316 = vunpack.c.l.b16 %v1496
          %v2317 = vunpack.c.h.b16 %v1496
          %v2318 = vunpack.c.l.b16 %v1497
          %v2319 = vunpack.c.h.b16 %v1497
          %v2320 = vunpack.c.l.b16 %v1498
          %v2321 = vunpack.c.l.b16 %v1499
          %v2322 = vunpack.c.h.b16 %v1499
          %v2323 = vunpack.c.l.b16 %v1500
          %v2324 = vunpack.c.h.b16 %v1500
          %v2325 = vunpack.c.l.b16 %v1501
          %v2326 = vunpack.c.h.b16 %v1501
          %v2327 = vunpack.c.l.b16 %v1502
          %v2328 = vunpack.c.l.b16 %v1503
          %v2329 = vunpack.c.h.b16 %v1503
          %v2330 = vunpack.c.l.b16 %v1504
          %v2331 = vunpack.c.h.b16 %v1504
          %v2332 = vunpack.c.l.b16 %v1505
          %v2333 = vunpack.c.h.b16 %v1505
          %v2334 = vunpack.c.l.b16 %v1506
          %v2335 = vunpack.c.l.b16 %v1507
          %v2336 = vunpack.c.h.b16 %v1507
          %v2337 = vunpack.c.l.b16 %v1508
          %v2338 = vunpack.c.h.b16 %v1508
          %v2339 = vunpack.c.l.b16 %v1509
          %v2340 = vunpack.c.h.b16 %v1509
          %v2341 = vunpack.c.l.b16 %v1510
          %v2342 = vunpack.c.l.b16 %v1511
          %v2343 = vunpack.c.h.b16 %v1511
          %v2344 = vunpack.c.l.b16 %v1512
          %v2345 = vunpack.c.h.b16 %v1512
          %v2346 = vunpack.c.l.b16 %v1513
          %v2347 = vunpack.c.h.b16 %v1513
          %v2348 = vunpack.c.l.b16 %v1514
          %v2349 = vunpack.c.l.b16 %v1515
          %v2350 = vunpack.c.h.b16 %v1515
          %v2351 = vunpack.c.l.b16 %v1516
          %v2352 = vunpack.c.h.b16 %v1516
          %v2353 = vunpack.c.l.b16 %v1517
          %v2354 = vunpack.c.h.b16 %v1517
          %v2355 = vunpack.c.l.b16 %v1518
          %v2356 = vunpack.c.l.b16 %v1519
          %v2357 = vunpack.c.h.b16 %v1519
          %v2358 = vunpack.c.l.b16 %v1520
          %v2359 = vunpack.c.h.b16 %v1520
          %v2360 = vunpack.c.l.b16 %v1521
          %v2361 = vunpack.c.h.b16 %v1521
          %v2362 = vunpack.c.l.b16 %v1522
          %v2363 = vunpack.c.l.b16 %v1523
          %v2364 = vunpack.c.h.b16 %v1523
          %v2365 = vunpack.c.l.b16 %v1524
          %v2366 = vunpack.c.h.b16 %v1524
          %v2367 = vunpack.c.l.b16 %v1525
          %v2368 = vunpack.c.h.b16 %v1525
          %v2369 = vunpack.c.l.b16 %v1526
          %v2370 = vunpack.c.l.b16 %v1527
          %v2371 = vunpack.c.h.b16 %v1527
          %v2372 = vunpack.c.l.b16 %v1528
          %v2373 = vunpack.c.h.b16 %v1528
          %v2374 = vunpack.c.l.b16 %v1529
          %v2375 = vunpack.c.h.b16 %v1529
          %v2376 = vunpack.c.l.b16 %v1530
          %v2377 = vunpack.c.l.b16 %v1531
          %v2378 = vunpack.c.h.b16 %v1531
          %v2379 = vunpack.c.l.b16 %v1532
          %v2380 = vunpack.c.h.b16 %v1532
          %v2381 = vunpack.c.l.b16 %v1533
          %v2382 = vunpack.c.h.b16 %v1533
          %v2383 = vunpack.c.l.b16 %v1534
          %v2384 = vunpack.c.l.b16 %v1535
          %v2385 = vunpack.c.h.b16 %v1535
          %v2386 = vunpack.c.l.b16 %v1536
          %v2387 = vunpack.c.h.b16 %v1536
          %v2388 = vunpack.c.l.b16 %v1537
          %v2389 = vunpack.c.h.b16 %v1537
          %v2390 = vunpack.c.l.b16 %v1538
          %v2391 = vunpack.c.l.b16 %v1539
          %v2392 = vunpack.c.h.b16 %v1539
          %v2393 = vunpack.c.l.b16 %v1540
          %v2394 = vunpack.c.h.b16 %v1540
          %v2395 = vunpack.c.l.b16 %v1541
          %v2396 = vunpack.c.h.b16 %v1541
          %v2397 = vunpack.c.l.b16 %v1542
          %v2398 = vunpack.c.l.b16 %v1543
          %v2399 = vunpack.c.h.b16 %v1543
          %v2400 = vunpack.c.l.b16 %v1544
          %v2401 = vunpack.c.h.b16 %v1544
          %v2402 = vunpack.c.l.b16 %v1545
          %v2403 = vunpack.c.h.b16 %v1545
          %v2404 = vunpack.c.l.b16 %v1546
          %v2405 = vunpack.c.l.b16 %v1547
          %v2406 = vunpack.c.h.b16 %v1547
          %v2407 = vunpack.c.l.b16 %v1548
          %v2408 = vunpack.c.h.b16 %v1548
          %v2409 = vunpack.c.l.b16 %v1549
          %v2410 = vunpack.c.h.b16 %v1549
          %v2411 = vunpack.c.l.b16 %v1550
          %v2412 = vunpack.c.l.b16 %v1551
          %v2413 = vunpack.c.h.b16 %v1551
          %v2414 = vunpack.c.l.b16 %v1552
          %v2415 = vunpack.c.h.b16 %v1552
          %v2416 = vunpack.c.l.b16 %v1553
          %v2417 = vunpack.c.h.b16 %v1553
          %v2418 = vunpack.c.l.b16 %v1554
          %v2419 = vunpack.c.l.b16 %v1555
          %v2420 = vunpack.c.h.b16 %v1555
          %v2421 = vunpack.c.l.b16 %v1556
          %v2422 = vunpack.c.h.b16 %v1556
          %v2423 = vunpack.c.l.b16 %v1557
          %v2424 = vunpack.c.h.b16 %v1557
          %v2425 = vunpack.c.l.b16 %v1558
          %v2426 = vunpack.c.l.b16 %v1559
          %v2427 = vunpack.c.h.b16 %v1559
          %v2428 = vunpack.c.l.b16 %v1560
          %v2429 = vunpack.c.h.b16 %v1560
          %v2430 = vunpack.c.l.b16 %v1561
          %v2431 = vunpack.c.h.b16 %v1561
          %v2432 = vunpack.c.l.b16 %v1562
          %v2433 = vunpack.c.l.b16 %v1563
          %v2434 = vunpack.c.h.b16 %v1563
          %v2435 = vunpack.c.l.b16 %v1564
          %v2436 = vunpack.c.h.b16 %v1564
          %v2437 = vunpack.c.l.b16 %v1565
          %v2438 = vunpack.c.h.b16 %v1565
          %v2439 = vunpack.c.l.b16 %v1566
          %v2440 = vunpack.c.l.b16 %v1567
          %v2441 = vunpack.c.h.b16 %v1567
          %v2442 = vunpack.c.l.b16 %v1568
          %v2443 = vunpack.c.h.b16 %v1568
          %v2444 = vunpack.c.l.b16 %v1569
          %v2445 = vunpack.c.h.b16 %v1569
          %v2446 = vunpack.c.l.b16 %v1570
          %v2447 = vunpack.c.l.b16 %v1571
          %v2448 = vunpack.c.h.b16 %v1571
          %v2449 = vunpack.c.l.b16 %v1572
          %v2450 = vunpack.c.h.b16 %v1572
          %v2451 = vunpack.c.l.b16 %v1573
          %v2452 = vunpack.c.h.b16 %v1573
          %v2453 = vunpack.c.l.b16 %v1574
          %v2454 = vunpack.c.l.b16 %v1575
          %v2455 = vunpack.c.h.b16 %v1575
          %v2456 = vunpack.c.l.b16 %v1576
          %v2457 = vunpack.c.h.b16 %v1576
          %v2458 = vunpack.c.l.b16 %v1577
          %v2459 = vunpack.c.h.b16 %v1577
          %v2460 = vunpack.c.l.b16 %v1578
          %v2461 = vunpack.c.l.b16 %v1579
          %v2462 = vunpack.c.h.b16 %v1579
          %v2463 = vunpack.c.l.b16 %v1580
          %v2464 = vunpack.c.h.b16 %v1580
          %v2465 = vunpack.c.l.b16 %v1581
          %v2466 = vunpack.c.h.b16 %v1581
          %v2467 = vunpack.c.l.b16 %v1582
          %v2468 = vunpack.c.l.b16 %v1583
          %v2469 = vunpack.c.h.b16 %v1583
          %v2470 = vunpack.c.l.b16 %v1584
          %v2471 = vunpack.c.h.b16 %v1584
          %v2472 = vunpack.c.l.b16 %v1585
          %v2473 = vunpack.c.h.b16 %v1585
          %v2474 = vunpack.c.l.b16 %v1586
          %v2475 = vunpack.c.l.b16 %v1587
          %v2476 = vunpack.c.h.b16 %v1587
          %v2477 = vunpack.c.l.b16 %v1588
          %v2478 = vunpack.c.h.b16 %v1588
          %v2479 = vunpack.c.l.b16 %v1589
          %v2480 = vunpack.c.h.b16 %v1589
          %v2481 = vunpack.c.l.b16 %v1590
          %v2482 = vunpack.c.l.b16 %v1591
          %v2483 = vunpack.c.h.b16 %v1591
          %v2484 = vunpack.c.l.b16 %v1592
          %v2485 = vunpack.c.h.b16 %v1592
          %v2486 = vunpack.c.l.b16 %v1593
          %v2487 = vunpack.c.h.b16 %v1593
          %v2488 = vunpack.c.l.b16 %v1594
          %v2489 = vunpack.c.l.b16 %v1595
          %v2490 = vunpack.c.h.b16 %v1595
          %v2491 = vunpack.c.l.b16 %v1596
          %v2492 = vunpack.c.h.b16 %v1596
          %v2493 = vunpack.c.l.b16 %v1597
          %v2494 = vunpack.c.h.b16 %v1597
          %v2495 = vunpack.c.l.b16 %v1598
          %v2496 = vunpack.c.l.b16 %v1599
          %v2497 = vunpack.c.h.b16 %v1599
          %v2498 = vunpack.c.l.b16 %v1600
          %v2499 = vunpack.c.h.b16 %v1600
          %v2500 = vunpack.c.l.b16 %v1601
          %v2501 = vunpack.c.h.b16 %v1601
          %v2502 = vunpack.c.l.b16 %v1602
          %v2503 = vunpack.c.l.b16 %v1603
          %v2504 = vunpack.c.h.b16 %v1603
          %v2505 = vunpack.c.l.b16 %v1604
          %v2506 = vunpack.c.h.b16 %v1604
          %v2507 = vunpack.c.l.b16 %v1605
          %v2508 = vunpack.c.h.b16 %v1605
          %v2509 = vunpack.c.l.b16 %v1606
          %v2510 = vunpack.c.l.b16 %v1607
          %v2511 = vunpack.c.h.b16 %v1607
          %v2512 = vunpack.c.l.b16 %v1608
          %v2513 = vunpack.c.h.b16 %v1608
          %v2514 = vunpack.c.l.b16 %v1609
          %v2515 = vunpack.c.h.b16 %v1609
          %v2516 = vunpack.c.l.b16 %v1610
          %v2517 = vunpack.c.l.b16 %v1611
          %v2518 = vunpack.c.h.b16 %v1611
          %v2519 = vunpack.c.l.b16 %v1612
          %v2520 = vunpack.c.h.b16 %v1612
          %v2521 = vunpack.c.l.b16 %v1613
          %v2522 = vunpack.c.h.b16 %v1613
          %v2523 = vunpack.c.l.b16 %v1614
          %v2524 = vunpack.c.l.b16 %v1615
          %v2525 = vunpack.c.h.b16 %v1615
          %v2526 = vunpack.c.l.b16 %v1616
          %v2527 = vunpack.c.h.b16 %v1616
          %v2528 = vunpack.c.l.b16 %v1617
          %v2529 = vunpack.c.h.b16 %v1617
          %v2530 = vunpack.c.l.b16 %v1618
          %v2531 = vunpack.c.l.b16 %v1619
          %v2532 = vunpack.c.h.b16 %v1619
          %v2533 = vunpack.c.l.b16 %v1620
          %v2534 = vunpack.c.h.b16 %v1620
          %v2535 = vunpack.c.l.b16 %v1621
          %v2536 = vunpack.c.h.b16 %v1621
          %v2537 = vunpack.c.l.b16 %v1622
          %v2538 = vunpack.c.l.b16 %v1623
          %v2539 = vunpack.c.h.b16 %v1623
          %v2540 = vunpack.c.l.b16 %v1624
          %v2541 = vunpack.c.h.b16 %v1624
          %v2542 = vunpack.c.l.b16 %v1625
          %v2543 = vunpack.c.h.b16 %v1625
          %v2544 = vunpack.c.l.b16 %v1626
          %v2545 = vunpack.c.l.b16 %v1627
          %v2546 = vunpack.c.h.b16 %v1627
          %v2547 = vunpack.c.l.b16 %v1628
          %v2548 = vunpack.c.h.b16 %v1628
          %v2549 = vunpack.c.l.b16 %v1629
          %v2550 = vunpack.c.h.b16 %v1629
          %v2551 = vunpack.c.l.b16 %v1630
          %v2552 = vunpack.c.l.b16 %v1631
          %v2553 = vunpack.c.h.b16 %v1631
          %v2554 = vunpack.c.l.b16 %v1632
          %v2555 = vunpack.c.h.b16 %v1632
          %v2556 = vunpack.c.l.b16 %v1633
          %v2557 = vunpack.c.h.b16 %v1633
          %v2558 = vunpack.c.l.b16 %v1634
          %v2559 = vunpack.c.l.b16 %v1635
          %v2560 = vunpack.c.h.b16 %v1635
          %v2561 = vunpack.c.l.b16 %v1636
          %v2562 = vunpack.c.h.b16 %v1636
          %v2563 = vunpack.c.l.b16 %v1637
          %v2564 = vunpack.c.h.b16 %v1637
          %v2565 = vunpack.c.l.b16 %v1638
          %v2566 = vunpack.c.l.b16 %v1639
          %v2567 = vunpack.c.h.b16 %v1639
          %v2568 = vunpack.c.l.b16 %v1640
          %v2569 = vunpack.c.h.b16 %v1640
          %v2570 = vunpack.c.l.b16 %v1641
          %v2571 = vunpack.c.h.b16 %v1641
          %v2572 = vunpack.c.l.b16 %v1642
          %v2573 = vunpack.c.l.b16 %v1643
          %v2574 = vunpack.c.h.b16 %v1643
          %v2575 = vunpack.c.l.b16 %v1644
          %v2576 = vunpack.c.h.b16 %v1644
          %v2577 = vunpack.c.l.b16 %v1645
          %v2578 = vunpack.c.h.b16 %v1645
          %v2579 = vunpack.c.l.b16 %v1646
          %v2580 = vunpack.c.l.b16 %v1647
          %v2581 = vunpack.c.h.b16 %v1647
          %v2582 = vunpack.c.l.b16 %v1648
          %v2583 = vunpack.c.h.b16 %v1648
          %v2584 = vunpack.c.l.b16 %v1649
          %v2585 = vunpack.c.h.b16 %v1649
          %v2586 = vunpack.c.l.b16 %v1650
          %v2587 = vunpack.c.l.b16 %v1651
          %v2588 = vunpack.c.h.b16 %v1651
          %v2589 = vunpack.c.l.b16 %v1652
          %v2590 = vunpack.c.h.b16 %v1652
          %v2591 = vunpack.c.l.b16 %v1653
          %v2592 = vunpack.c.h.b16 %v1653
          %v2593 = vunpack.c.l.b16 %v1654
          %v2594 = vunpack.c.l.b16 %v1655
          %v2595 = vunpack.c.h.b16 %v1655
          %v2596 = vunpack.c.l.b16 %v1656
          %v2597 = vunpack.c.h.b16 %v1656
          %v2598 = vunpack.c.l.b16 %v1657
          %v2599 = vunpack.c.h.b16 %v1657
          %v2600 = vunpack.c.l.b16 %v1658
          %v2601 = vunpack.c.l.b16 %v1659
          %v2602 = vunpack.c.h.b16 %v1659
          %v2603 = vunpack.c.l.b16 %v1660
          %v2604 = vunpack.c.h.b16 %v1660
          %v2605 = vunpack.c.l.b16 %v1661
          %v2606 = vunpack.c.h.b16 %v1661
          %v2607 = vunpack.c.l.b16 %v1662
          %v2608 = vunpack.c.l.b16 %v1663
          %v2609 = vunpack.c.h.b16 %v1663
          %v2610 = vunpack.c.l.b16 %v1664
          %v2611 = vunpack.c.h.b16 %v1664
          %v2612 = vunpack.c.l.b16 %v1665
          %v2613 = vunpack.c.h.b16 %v1665
          %v2614 = vunpack.c.l.b16 %v1666
          %v2615 = vunpack.c.l.b16 %v1667
          %v2616 = vunpack.c.h.b16 %v1667
          %v2617 = vunpack.c.l.b16 %v1668
          %v2618 = vunpack.c.h.b16 %v1668
          %v2619 = vunpack.c.l.b16 %v1669
          %v2620 = vunpack.c.h.b16 %v1669
          %v2621 = vunpack.c.l.b16 %v1670
          %v2622 = vpack.c.b16 %v2034, %v2027
          %v2623 = vpack.c.b16 %v2035, %v2028
          %v2624 = vpack.c.b16 %v2036, %v2029
          %v2625 = vpack.c.b16 %v2037, %v2030
          %v2626 = vpack.c.b16 %v2038, %v2031
          %v2627 = vpack.c.b16 %v2039, %v2032
          %v2628 = vpack.c.b16 %v2040, %v2033
          %v2629 = vpack.c.b16 %v2048, %v2041
          %v2630 = vpack.c.b16 %v2049, %v2042
          %v2631 = vpack.c.b16 %v2050, %v2043
          %v2632 = vpack.c.b16 %v2051, %v2044
          %v2633 = vpack.c.b16 %v2052, %v2045
          %v2634 = vpack.c.b16 %v2053, %v2046
          %v2635 = vpack.c.b16 %v2054, %v2047
          %v2636 = vpack.c.b16 %v2062, %v2055
          %v2637 = vpack.c.b16 %v2063, %v2056
          %v2638 = vpack.c.b16 %v2064, %v2057
          %v2639 = vpack.c.b16 %v2065, %v2058
          %v2640 = vpack.c.b16 %v2066, %v2059
          %v2641 = vpack.c.b16 %v2067, %v2060
          %v2642 = vpack.c.b16 %v2068, %v2061
          %v2643 = vpack.c.b16 %v2076, %v2069
          %v2644 = vpack.c.b16 %v2077, %v2070
          %v2645 = vpack.c.b16 %v2078, %v2071
          %v2646 = vpack.c.b16 %v2079, %v2072
          %v2647 = vpack.c.b16 %v2080, %v2073
          %v2648 = vpack.c.b16 %v2081, %v2074
          %v2649 = vpack.c.b16 %v2082, %v2075
          %v2650 = vpack.c.b16 %v2090, %v2083
          %v2651 = vpack.c.b16 %v2091, %v2084
          %v2652 = vpack.c.b16 %v2092, %v2085
          %v2653 = vpack.c.b16 %v2093, %v2086
          %v2654 = vpack.c.b16 %v2094, %v2087
          %v2655 = vpack.c.b16 %v2095, %v2088
          %v2656 = vpack.c.b16 %v2096, %v2089
          %v2657 = vpack.c.b16 %v2104, %v2097
          %v2658 = vpack.c.b16 %v2105, %v2098
          %v2659 = vpack.c.b16 %v2106, %v2099
          %v2660 = vpack.c.b16 %v2107, %v2100
          %v2661 = vpack.c.b16 %v2108, %v2101
          %v2662 = vpack.c.b16 %v2109, %v2102
          %v2663 = vpack.c.b16 %v2110, %v2103
          %v2664 = vpack.c.b16 %v2118, %v2111
          %v2665 = vpack.c.b16 %v2119, %v2112
          %v2666 = vpack.c.b16 %v2120, %v2113
          %v2667 = vpack.c.b16 %v2121, %v2114
          %v2668 = vpack.c.b16 %v2122, %v2115
          %v2669 = vpack.c.b16 %v2123, %v2116
          %v2670 = vpack.c.b16 %v2124, %v2117
          %v2671 = vpack.c.b16 %v2132, %v2125
          %v2672 = vpack.c.b16 %v2133, %v2126
          %v2673 = vpack.c.b16 %v2134, %v2127
          %v2674 = vpack.c.b16 %v2135, %v2128
          %v2675 = vpack.c.b16 %v2136, %v2129
          %v2676 = vpack.c.b16 %v2137, %v2130
          %v2677 = vpack.c.b16 %v2138, %v2131
          %v2678 = vpack.c.b16 %v2146, %v2139
          %v2679 = vpack.c.b16 %v2147, %v2140
          %v2680 = vpack.c.b16 %v2148, %v2141
          %v2681 = vpack.c.b16 %v2149, %v2142
          %v2682 = vpack.c.b16 %v2150, %v2143
          %v2683 = vpack.c.b16 %v2151, %v2144
          %v2684 = vpack.c.b16 %v2152, %v2145
          %v2685 = vpack.c.b16 %v2160, %v2153
          %v2686 = vpack.c.b16 %v2161, %v2154
          %v2687 = vpack.c.b16 %v2162, %v2155
          %v2688 = vpack.c.b16 %v2163, %v2156
          %v2689 = vpack.c.b16 %v2164, %v2157
          %v2690 = vpack.c.b16 %v2165, %v2158
          %v2691 = vpack.c.b16 %v2166, %v2159
          %v2692 = vpack.c.b16 %v2174, %v2167
          %v2693 = vpack.c.b16 %v2175, %v2168
          %v2694 = vpack.c.b16 %v2176, %v2169
          %v2695 = vpack.c.b16 %v2177, %v2170
          %v2696 = vpack.c.b16 %v2178, %v2171
          %v2697 = vpack.c.b16 %v2179, %v2172
          %v2698 = vpack.c.b16 %v2180, %v2173
          %v2699 = vpack.c.b16 %v2188, %v2181
          %v2700 = vpack.c.b16 %v2189, %v2182
          %v2701 = vpack.c.b16 %v2190, %v2183
          %v2702 = vpack.c.b16 %v2191, %v2184
          %v2703 = vpack.c.b16 %v2192, %v2185
          %v2704 = vpack.c.b16 %v2193, %v2186
          %v2705 = vpack.c.b16 %v2194, %v2187
          %v2706 = vpack.c.b16 %v2202, %v2195
          %v2707 = vpack.c.b16 %v2203, %v2196
          %v2708 = vpack.c.b16 %v2204, %v2197
          %v2709 = vpack.c.b16 %v2205, %v2198
          %v2710 = vpack.c.b16 %v2206, %v2199
          %v2711 = vpack.c.b16 %v2207, %v2200
          %v2712 = vpack.c.b16 %v2208, %v2201
          %v2713 = vpack.c.b16 %v2216, %v2209
          %v2714 = vpack.c.b16 %v2217, %v2210
          %v2715 = vpack.c.b16 %v2218, %v2211
          %v2716 = vpack.c.b16 %v2219, %v2212
          %v2717 = vpack.c.b16 %v2220, %v2213
          %v2718 = vpack.c.b16 %v2221, %v2214
          %v2719 = vpack.c.b16 %v2222, %v2215
          %v2720 = vpack.c.b16 %v2230, %v2223
          %v2721 = vpack.c.b16 %v2231, %v2224
          %v2722 = vpack.c.b16 %v2232, %v2225
          %v2723 = vpack.c.b16 %v2233, %v2226
          %v2724 = vpack.c.b16 %v2234, %v2227
          %v2725 = vpack.c.b16 %v2235, %v2228
          %v2726 = vpack.c.b16 %v2236, %v2229
          %v2727 = vpack.c.b16 %v2244, %v2237
          %v2728 = vpack.c.b16 %v2245, %v2238
          %v2729 = vpack.c.b16 %v2246, %v2239
          %v2730 = vpack.c.b16 %v2247, %v2240
          %v2731 = vpack.c.b16 %v2248, %v2241
          %v2732 = vpack.c.b16 %v2249, %v2242
          %v2733 = vpack.c.b16 %v2250, %v2243
          %v2734 = vpack.c.b16 %v2258, %v2251
          %v2735 = vpack.c.b16 %v2259, %v2252
          %v2736 = vpack.c.b16 %v2260, %v2253
          %v2737 = vpack.c.b16 %v2261, %v2254
          %v2738 = vpack.c.b16 %v2262, %v2255
          %v2739 = vpack.c.b16 %v2263, %v2256
          %v2740 = vpack.c.b16 %v2264, %v2257
          %v2741 = vpack.c.b16 %v2272, %v2265
          %v2742 = vpack.c.b16 %v2273, %v2266
          %v2743 = vpack.c.b16 %v2274, %v2267
          %v2744 = vpack.c.b16 %v2275, %v2268
          %v2745 = vpack.c.b16 %v2276, %v2269
          %v2746 = vpack.c.b16 %v2277, %v2270
          %v2747 = vpack.c.b16 %v2278, %v2271
          %v2748 = vpack.c.b16 %v2286, %v2279
          %v2749 = vpack.c.b16 %v2287, %v2280
          %v2750 = vpack.c.b16 %v2288, %v2281
          %v2751 = vpack.c.b16 %v2289, %v2282
          %v2752 = vpack.c.b16 %v2290, %v2283
          %v2753 = vpack.c.b16 %v2291, %v2284
          %v2754 = vpack.c.b16 %v2292, %v2285
          %v2755 = vpack.c.b16 %v2300, %v2293
          %v2756 = vpack.c.b16 %v2301, %v2294
          %v2757 = vpack.c.b16 %v2302, %v2295
          %v2758 = vpack.c.b16 %v2303, %v2296
          %v2759 = vpack.c.b16 %v2304, %v2297
          %v2760 = vpack.c.b16 %v2305, %v2298
          %v2761 = vpack.c.b16 %v2306, %v2299
          %v2762 = vpack.c.b16 %v2314, %v2307
          %v2763 = vpack.c.b16 %v2315, %v2308
          %v2764 = vpack.c.b16 %v2316, %v2309
          %v2765 = vpack.c.b16 %v2317, %v2310
          %v2766 = vpack.c.b16 %v2318, %v2311
          %v2767 = vpack.c.b16 %v2319, %v2312
          %v2768 = vpack.c.b16 %v2320, %v2313
          %v2769 = vpack.c.b16 %v2328, %v2321
          %v2770 = vpack.c.b16 %v2329, %v2322
          %v2771 = vpack.c.b16 %v2330, %v2323
          %v2772 = vpack.c.b16 %v2331, %v2324
          %v2773 = vpack.c.b16 %v2332, %v2325
          %v2774 = vpack.c.b16 %v2333, %v2326
          %v2775 = vpack.c.b16 %v2334, %v2327
          %v2776 = vpack.c.b16 %v2342, %v2335
          %v2777 = vpack.c.b16 %v2343, %v2336
          %v2778 = vpack.c.b16 %v2344, %v2337
          %v2779 = vpack.c.b16 %v2345, %v2338
          %v2780 = vpack.c.b16 %v2346, %v2339
          %v2781 = vpack.c.b16 %v2347, %v2340
          %v2782 = vpack.c.b16 %v2348, %v2341
          %v2783 = vpack.c.b16 %v2356, %v2349
          %v2784 = vpack.c.b16 %v2357, %v2350
          %v2785 = vpack.c.b16 %v2358, %v2351
          %v2786 = vpack.c.b16 %v2359, %v2352
          %v2787 = vpack.c.b16 %v2360, %v2353
          %v2788 = vpack.c.b16 %v2361, %v2354
          %v2789 = vpack.c.b16 %v2362, %v2355
          %v2790 = vpack.c.b16 %v2370, %v2363
          %v2791 = vpack.c.b16 %v2371, %v2364
          %v2792 = vpack.c.b16 %v2372, %v2365
          %v2793 = vpack.c.b16 %v2373, %v2366
          %v2794 = vpack.c.b16 %v2374, %v2367
          %v2795 = vpack.c.b16 %v2375, %v2368
          %v2796 = vpack.c.b16 %v2376, %v2369
          %v2797 = vpack.c.b16 %v2384, %v2377
          %v2798 = vpack.c.b16 %v2385, %v2378
          %v2799 = vpack.c.b16 %v2386, %v2379
          %v2800 = vpack.c.b16 %v2387, %v2380
          %v2801 = vpack.c.b16 %v2388, %v2381
          %v2802 = vpack.c.b16 %v2389, %v2382
          %v2803 = vpack.c.b16 %v2390, %v2383
          %v2804 = vpack.c.b16 %v2398, %v2391
          %v2805 = vpack.c.b16 %v2399, %v2392
          %v2806 = vpack.c.b16 %v2400, %v2393
          %v2807 = vpack.c.b16 %v2401, %v2394
          %v2808 = vpack.c.b16 %v2402, %v2395
          %v2809 = vpack.c.b16 %v2403, %v2396
          %v2810 = vpack.c.b16 %v2404, %v2397
          %v2811 = vpack.c.b16 %v2412, %v2405
          %v2812 = vpack.c.b16 %v2413, %v2406
          %v2813 = vpack.c.b16 %v2414, %v2407
          %v2814 = vpack.c.b16 %v2415, %v2408
          %v2815 = vpack.c.b16 %v2416, %v2409
          %v2816 = vpack.c.b16 %v2417, %v2410
          %v2817 = vpack.c.b16 %v2418, %v2411
          %v2818 = vpack.c.b16 %v2426, %v2419
          %v2819 = vpack.c.b16 %v2427, %v2420
          %v2820 = vpack.c.b16 %v2428, %v2421
          %v2821 = vpack.c.b16 %v2429, %v2422
          %v2822 = vpack.c.b16 %v2430, %v2423
          %v2823 = vpack.c.b16 %v2431, %v2424
          %v2824 = vpack.c.b16 %v2432, %v2425
          %v2825 = vpack.c.b16 %v2440, %v2433
          %v2826 = vpack.c.b16 %v2441, %v2434
          %v2827 = vpack.c.b16 %v2442, %v2435
          %v2828 = vpack.c.b16 %v2443, %v2436
          %v2829 = vpack.c.b16 %v2444, %v2437
          %v2830 = vpack.c.b16 %v2445, %v2438
          %v2831 = vpack.c.b16 %v2446, %v2439
          %v2832 = vpack.c.b16 %v2454, %v2447
          %v2833 = vpack.c.b16 %v2455, %v2448
          %v2834 = vpack.c.b16 %v2456, %v2449
          %v2835 = vpack.c.b16 %v2457, %v2450
          %v2836 = vpack.c.b16 %v2458, %v2451
          %v2837 = vpack.c.b16 %v2459, %v2452
          %v2838 = vpack.c.b16 %v2460, %v2453
          %v2839 = vpack.c.b16 %v2468, %v2461
          %v2840 = vpack.c.b16 %v2469, %v2462
          %v2841 = vpack.c.b16 %v2470, %v2463
          %v2842 = vpack.c.b16 %v2471, %v2464
          %v2843 = vpack.c.b16 %v2472, %v2465
          %v2844 = vpack.c.b16 %v2473, %v2466
          %v2845 = vpack.c.b16 %v2474, %v2467
          %v2846 = vpack.c.b16 %v2482, %v2475
          %v2847 = vpack.c.b16 %v2483, %v2476
          %v2848 = vpack.c.b16 %v2484, %v2477
          %v2849 = vpack.c.b16 %v2485, %v2478
          %v2850 = vpack.c.b16 %v2486, %v2479
          %v2851 = vpack.c.b16 %v2487, %v2480
          %v2852 = vpack.c.b16 %v2488, %v2481
          %v2853 = vpack.c.b16 %v2496, %v2489
          %v2854 = vpack.c.b16 %v2497, %v2490
          %v2855 = vpack.c.b16 %v2498, %v2491
          %v2856 = vpack.c.b16 %v2499, %v2492
          %v2857 = vpack.c.b16 %v2500, %v2493
          %v2858 = vpack.c.b16 %v2501, %v2494
          %v2859 = vpack.c.b16 %v2502, %v2495
          %v2860 = vpack.c.b16 %v2510, %v2503
          %v2861 = vpack.c.b16 %v2511, %v2504
          %v2862 = vpack.c.b16 %v2512, %v2505
          %v2863 = vpack.c.b16 %v2513, %v2506
          %v2864 = vpack.c.b16 %v2514, %v2507
          %v2865 = vpack.c.b16 %v2515, %v2508
          %v2866 = vpack.c.b16 %v2516, %v2509
          %v2867 = vpack.c.b16 %v2524, %v2517
          %v2868 = vpack.c.b16 %v2525, %v2518
          %v2869 = vpack.c.b16 %v2526, %v2519
          %v2870 = vpack.c.b16 %v2527, %v2520
          %v2871 = vpack.c.b16 %v2528, %v2521
          %v2872 = vpack.c.b16 %v2529, %v2522
          %v2873 = vpack.c.b16 %v2530, %v2523
          %v2874 = vpack.c.b16 %v2538, %v2531
          %v2875 = vpack.c.b16 %v2539, %v2532
          %v2876 = vpack.c.b16 %v2540, %v2533
          %v2877 = vpack.c.b16 %v2541, %v2534
          %v2878 = vpack.c.b16 %v2542, %v2535
          %v2879 = vpack.c.b16 %v2543, %v2536
          %v2880 = vpack.c.b16 %v2544, %v2537
          %v2881 = vpack.c.b16 %v2552, %v2545
          %v2882 = vpack.c.b16 %v2553, %v2546
          %v2883 = vpack.c.b16 %v2554, %v2547
          %v2884 = vpack.c.b16 %v2555, %v2548
          %v2885 = vpack.c.b16 %v2556, %v2549
          %v2886 = vpack.c.b16 %v2557, %v2550
          %v2887 = vpack.c.b16 %v2558, %v2551
          %v2888 = vpack.c.b16 %v2566, %v2559
          %v2889 = vpack.c.b16 %v2567, %v2560
          %v2890 = vpack.c.b16 %v2568, %v2561
          %v2891 = vpack.c.b16 %v2569, %v2562
          %v2892 = vpack.c.b16 %v2570, %v2563
          %v2893 = vpack.c.b16 %v2571, %v2564
          %v2894 = vpack.c.b16 %v2572, %v2565
          %v2895 = vpack.c.b16 %v2580, %v2573
          %v2896 = vpack.c.b16 %v2581, %v2574
          %v2897 = vpack.c.b16 %v2582, %v2575
          %v2898 = vpack.c.b16 %v2583, %v2576
          %v2899 = vpack.c.b16 %v2584, %v2577
          %v2900 = vpack.c.b16 %v2585, %v2578
          %v2901 = vpack.c.b16 %v2586, %v2579
          %v2902 = vpack.c.b16 %v2594, %v2587
          %v2903 = vpack.c.b16 %v2595, %v2588
          %v2904 = vpack.c.b16 %v2596, %v2589
          %v2905 = vpack.c.b16 %v2597, %v2590
          %v2906 = vpack.c.b16 %v2598, %v2591
          %v2907 = vpack.c.b16 %v2599, %v2592
          %v2908 = vpack.c.b16 %v2600, %v2593
          %v2909 = vpack.c.b16 %v2608, %v2601
          %v2910 = vpack.c.b16 %v2609, %v2602
          %v2911 = vpack.c.b16 %v2610, %v2603
          %v2912 = vpack.c.b16 %v2611, %v2604
          %v2913 = vpack.c.b16 %v2612, %v2605
          %v2914 = vpack.c.b16 %v2613, %v2606
          %v2915 = vpack.c.b16 %v2614, %v2607
          %v2916 = vpack.c.b16 %v2615, %v2615
          %v2917 = vpack.c.b16 %v2616, %v2616
          %v2918 = vpack.c.b16 %v2617, %v2617
          %v2919 = vpack.c.b16 %v2618, %v2618
          %v2920 = vpack.c.b16 %v2619, %v2619
          %v2921 = vpack.c.b16 %v2620, %v2620
          %v2922 = vpack.c.b16 %v2621, %v2621
          %vm3217 = vcmask 293888
          %v3219 = vsel %vm3217, %v1330, 0
          %vm3221 = vcmask 1041408
          %v3223 = vsel %vm3221, %v2916, 0
          %v3226 = vsel %vm3221, %v2917, 0
          %v3229 = vsel %vm3221, %v2918, 0
          %v3232 = vsel %vm3221, %v2919, 0
          %v3235 = vsel %vm3221, %v2920, 0
          %v3238 = vsel %vm3221, %v2921, 0
          %v3241 = vsel %vm3221, %v2922, 0
          %3243 = vmatpush.bf16.msra.mxu0 %v2671
          %3244 = vmatpush.bf16.msra.mxu0 %v2664
          %3245 = vmatpush.bf16.msra.mxu0 %v2657
          %3246 = vmatpush.bf16.msra.mxu0 %v2650
          %3247 = vmatpush.bf16.msra.mxu0 %v2643
          %3248 = vmatpush.bf16.msra.mxu0 %v2636
          %3249 = vmatpush.bf16.msra.mxu0 %v2629
          %3250 = vmatpush.bf16.msra.mxu0 %v2622
          %3251 = vmatmul.bf16.gmra.mxu0 %v1325
          %v3252 = vpop.f32.mrf.mxu0
          %v3253 = vadd.f32 %v1673, %v3252
          %v3254 = vpop.f32.mrf.mxu0
          %3255 = vdwg.mxu0
          %3256 = vmatpush.bf16.msra.mxu0 %v2727
          %3257 = vmatpush.bf16.msra.mxu0 %v2720
          %3258 = vmatpush.bf16.msra.mxu0 %v2713
          %3259 = vmatpush.bf16.msra.mxu0 %v2706
          %3260 = vmatpush.bf16.msra.mxu0 %v2699
          %3261 = vmatpush.bf16.msra.mxu0 %v2692
          %3262 = vmatpush.bf16.msra.mxu0 %v2685
          %3263 = vmatpush.bf16.msra.mxu0 %v2678
          %3264 = vmatmul.bf16.gmra.mxu0 %v1326
          %v3265 = vpop.f32.mrf.mxu0
          %v3266 = vadd.f32 %v3253, %v3265
          %v3267 = vpop.f32.mrf.mxu0
          %3268 = vdwg.mxu0
          %3269 = vmatpush.bf16.msra.mxu0 %v2783
          %3270 = vmatpush.bf16.msra.mxu0 %v2776
          %3271 = vmatpush.bf16.msra.mxu0 %v2769
          %3272 = vmatpush.bf16.msra.mxu0 %v2762
          %3273 = vmatpush.bf16.msra.mxu0 %v2755
          %3274 = vmatpush.bf16.msra.mxu0 %v2748
          %3275 = vmatpush.bf16.msra.mxu0 %v2741
          %3276 = vmatpush.bf16.msra.mxu0 %v2734
          %3277 = vmatmul.bf16.gmra.mxu0 %v1327
          %v3278 = vpop.f32.mrf.mxu0
          %v3279 = vadd.f32 %v3266, %v3278
          %v3280 = vpop.f32.mrf.mxu0
          %3281 = vdwg.mxu0
          %3282 = vmatpush.bf16.msra.mxu0 %v2839
          %3283 = vmatpush.bf16.msra.mxu0 %v2832
          %3284 = vmatpush.bf16.msra.mxu0 %v2825
          %3285 = vmatpush.bf16.msra.mxu0 %v2818
          %3286 = vmatpush.bf16.msra.mxu0 %v2811
          %3287 = vmatpush.bf16.msra.mxu0 %v2804
          %3288 = vmatpush.bf16.msra.mxu0 %v2797
          %3289 = vmatpush.bf16.msra.mxu0 %v2790
          %3290 = vmatmul.bf16.gmra.mxu0 %v1328
          %v3291 = vpop.f32.mrf.mxu0
          %v3292 = vadd.f32 %v3279, %v3291
          %v3293 = vpop.f32.mrf.mxu0
          %3294 = vdwg.mxu0
          %3295 = vmatpush.bf16.msra.mxu0 %v2895
          %3296 = vmatpush.bf16.msra.mxu0 %v2888
          %3297 = vmatpush.bf16.msra.mxu0 %v2881
          %3298 = vmatpush.bf16.msra.mxu0 %v2874
          %3299 = vmatpush.bf16.msra.mxu0 %v2867
          %3300 = vmatpush.bf16.msra.mxu0 %v2860
          %3301 = vmatpush.bf16.msra.mxu0 %v2853
          %3302 = vmatpush.bf16.msra.mxu0 %v2846
          %3303 = vmatmul.bf16.gmra.mxu0 %v1329
          %v3304 = vpop.f32.mrf.mxu0
          %v3305 = vadd.f32 %v3292, %v3304
          %v3306 = vpop.f32.mrf.mxu0
          %3307 = vdwg.mxu0
          %3308 = vmatpush.bf16.msra.mxu0 0
          %3309 = vmatpush.bf16.msra.mxu0 0
          %3310 = vmatpush.bf16.msra.mxu0 0
          %3311 = vmatpush.bf16.msra.mxu0 0
          %3312 = vmatpush.bf16.msra.mxu0 0
          %3313 = vmatpush.bf16.msra.mxu0 %v3223
          %3314 = vmatpush.bf16.msra.mxu0 %v2909
          %3315 = vmatpush.bf16.msra.mxu0 %v2902
          %3316 = vmatmul.bf16.gmra.mxu0 %v3219
          %v3317 = vpop.f32.mrf.mxu0
          %v3318 = vadd.f32 %v3305, %v3317
          %v3319 = vpop.f32.mrf.mxu0
          %3320 = vdwg.mxu0
          %3321 = vmatpush.bf16.msra.mxu0 %v2672
          %3322 = vmatpush.bf16.msra.mxu0 %v2665
          %3323 = vmatpush.bf16.msra.mxu0 %v2658
          %3324 = vmatpush.bf16.msra.mxu0 %v2651
          %3325 = vmatpush.bf16.msra.mxu0 %v2644
          %3326 = vmatpush.bf16.msra.mxu0 %v2637
          %3327 = vmatpush.bf16.msra.mxu0 %v2630
          %3328 = vmatpush.bf16.msra.mxu0 %v2623
          %3329 = vmatmul.bf16.gmra.mxu0 %v1325
          %v3330 = vpop.f32.mrf.mxu0
          %v3331 = vadd.f32 %v1674, %v3330
          %v3332 = vpop.f32.mrf.mxu0
          %3333 = vdwg.mxu0
          %3334 = vmatpush.bf16.msra.mxu0 %v2728
          %3335 = vmatpush.bf16.msra.mxu0 %v2721
          %3336 = vmatpush.bf16.msra.mxu0 %v2714
          %3337 = vmatpush.bf16.msra.mxu0 %v2707
          %3338 = vmatpush.bf16.msra.mxu0 %v2700
          %3339 = vmatpush.bf16.msra.mxu0 %v2693
          %3340 = vmatpush.bf16.msra.mxu0 %v2686
          %3341 = vmatpush.bf16.msra.mxu0 %v2679
          %3342 = vmatmul.bf16.gmra.mxu0 %v1326
          %v3343 = vpop.f32.mrf.mxu0
          %v3344 = vadd.f32 %v3331, %v3343
          %v3345 = vpop.f32.mrf.mxu0
          %3346 = vdwg.mxu0
          %3347 = vmatpush.bf16.msra.mxu0 %v2784
          %3348 = vmatpush.bf16.msra.mxu0 %v2777
          %3349 = vmatpush.bf16.msra.mxu0 %v2770
          %3350 = vmatpush.bf16.msra.mxu0 %v2763
          %3351 = vmatpush.bf16.msra.mxu0 %v2756
          %3352 = vmatpush.bf16.msra.mxu0 %v2749
          %3353 = vmatpush.bf16.msra.mxu0 %v2742
          %3354 = vmatpush.bf16.msra.mxu0 %v2735
          %3355 = vmatmul.bf16.gmra.mxu0 %v1327
          %v3356 = vpop.f32.mrf.mxu0
          %v3357 = vadd.f32 %v3344, %v3356
          %v3358 = vpop.f32.mrf.mxu0
          %3359 = vdwg.mxu0
          %3360 = vmatpush.bf16.msra.mxu0 %v2840
          %3361 = vmatpush.bf16.msra.mxu0 %v2833
          %3362 = vmatpush.bf16.msra.mxu0 %v2826
          %3363 = vmatpush.bf16.msra.mxu0 %v2819
          %3364 = vmatpush.bf16.msra.mxu0 %v2812
          %3365 = vmatpush.bf16.msra.mxu0 %v2805
          %3366 = vmatpush.bf16.msra.mxu0 %v2798
          %3367 = vmatpush.bf16.msra.mxu0 %v2791
          %3368 = vmatmul.bf16.gmra.mxu0 %v1328
          %v3369 = vpop.f32.mrf.mxu0
          %v3370 = vadd.f32 %v3357, %v3369
          %v3371 = vpop.f32.mrf.mxu0
          %3372 = vdwg.mxu0
          %3373 = vmatpush.bf16.msra.mxu0 %v2896
          %3374 = vmatpush.bf16.msra.mxu0 %v2889
          %3375 = vmatpush.bf16.msra.mxu0 %v2882
          %3376 = vmatpush.bf16.msra.mxu0 %v2875
          %3377 = vmatpush.bf16.msra.mxu0 %v2868
          %3378 = vmatpush.bf16.msra.mxu0 %v2861
          %3379 = vmatpush.bf16.msra.mxu0 %v2854
          %3380 = vmatpush.bf16.msra.mxu0 %v2847
          %3381 = vmatmul.bf16.gmra.mxu0 %v1329
          %v3382 = vpop.f32.mrf.mxu0
          %v3383 = vadd.f32 %v3370, %v3382
          %v3384 = vpop.f32.mrf.mxu0
          %3385 = vdwg.mxu0
          %3386 = vmatpush.bf16.msra.mxu0 0
          %3387 = vmatpush.bf16.msra.mxu0 0
          %3388 = vmatpush.bf16.msra.mxu0 0
          %3389 = vmatpush.bf16.msra.mxu0 0
          %3390 = vmatpush.bf16.msra.mxu0 0
          %3391 = vmatpush.bf16.msra.mxu0 %v3226
          %3392 = vmatpush.bf16.msra.mxu0 %v2910
          %3393 = vmatpush.bf16.msra.mxu0 %v2903
          %3394 = vmatmul.bf16.gmra.mxu0 %v3219
          %v3395 = vpop.f32.mrf.mxu0
          %v3396 = vadd.f32 %v3383, %v3395
          %v3397 = vpop.f32.mrf.mxu0
          %3398 = vdwg.mxu0
          %3399 = vmatpush.bf16.msra.mxu0 %v2673
          %3400 = vmatpush.bf16.msra.mxu0 %v2666
          %3401 = vmatpush.bf16.msra.mxu0 %v2659
          %3402 = vmatpush.bf16.msra.mxu0 %v2652
          %3403 = vmatpush.bf16.msra.mxu0 %v2645
          %3404 = vmatpush.bf16.msra.mxu0 %v2638
          %3405 = vmatpush.bf16.msra.mxu0 %v2631
          %3406 = vmatpush.bf16.msra.mxu0 %v2624
          %3407 = vmatmul.bf16.gmra.mxu0 %v1325
          %v3408 = vpop.f32.mrf.mxu0
          %v3409 = vadd.f32 %v1675, %v3408
          %v3410 = vpop.f32.mrf.mxu0
          %3411 = vdwg.mxu0
          %3412 = vmatpush.bf16.msra.mxu0 %v2729
          %3413 = vmatpush.bf16.msra.mxu0 %v2722
          %3414 = vmatpush.bf16.msra.mxu0 %v2715
          %3415 = vmatpush.bf16.msra.mxu0 %v2708
          %3416 = vmatpush.bf16.msra.mxu0 %v2701
          %3417 = vmatpush.bf16.msra.mxu0 %v2694
          %3418 = vmatpush.bf16.msra.mxu0 %v2687
          %3419 = vmatpush.bf16.msra.mxu0 %v2680
          %3420 = vmatmul.bf16.gmra.mxu0 %v1326
          %v3421 = vpop.f32.mrf.mxu0
          %v3422 = vadd.f32 %v3409, %v3421
          %v3423 = vpop.f32.mrf.mxu0
          %3424 = vdwg.mxu0
          %3425 = vmatpush.bf16.msra.mxu0 %v2785
          %3426 = vmatpush.bf16.msra.mxu0 %v2778
          %3427 = vmatpush.bf16.msra.mxu0 %v2771
          %3428 = vmatpush.bf16.msra.mxu0 %v2764
          %3429 = vmatpush.bf16.msra.mxu0 %v2757
          %3430 = vmatpush.bf16.msra.mxu0 %v2750
          %3431 = vmatpush.bf16.msra.mxu0 %v2743
          %3432 = vmatpush.bf16.msra.mxu0 %v2736
          %3433 = vmatmul.bf16.gmra.mxu0 %v1327
          %v3434 = vpop.f32.mrf.mxu0
          %v3435 = vadd.f32 %v3422, %v3434
          %v3436 = vpop.f32.mrf.mxu0
          %3437 = vdwg.mxu0
          %3438 = vmatpush.bf16.msra.mxu0 %v2841
          %3439 = vmatpush.bf16.msra.mxu0 %v2834
          %3440 = vmatpush.bf16.msra.mxu0 %v2827
          %3441 = vmatpush.bf16.msra.mxu0 %v2820
          %3442 = vmatpush.bf16.msra.mxu0 %v2813
          %3443 = vmatpush.bf16.msra.mxu0 %v2806
          %3444 = vmatpush.bf16.msra.mxu0 %v2799
          %3445 = vmatpush.bf16.msra.mxu0 %v2792
          %3446 = vmatmul.bf16.gmra.mxu0 %v1328
          %v3447 = vpop.f32.mrf.mxu0
          %v3448 = vadd.f32 %v3435, %v3447
          %v3449 = vpop.f32.mrf.mxu0
          %3450 = vdwg.mxu0
          %3451 = vmatpush.bf16.msra.mxu0 %v2897
          %3452 = vmatpush.bf16.msra.mxu0 %v2890
          %3453 = vmatpush.bf16.msra.mxu0 %v2883
          %3454 = vmatpush.bf16.msra.mxu0 %v2876
          %3455 = vmatpush.bf16.msra.mxu0 %v2869
          %3456 = vmatpush.bf16.msra.mxu0 %v2862
          %3457 = vmatpush.bf16.msra.mxu0 %v2855
          %3458 = vmatpush.bf16.msra.mxu0 %v2848
          %3459 = vmatmul.bf16.gmra.mxu0 %v1329
          %v3460 = vpop.f32.mrf.mxu0
          %v3461 = vadd.f32 %v3448, %v3460
          %v3462 = vpop.f32.mrf.mxu0
          %3463 = vdwg.mxu0
          %3464 = vmatpush.bf16.msra.mxu0 0
          %3465 = vmatpush.bf16.msra.mxu0 0
          %3466 = vmatpush.bf16.msra.mxu0 0
          %3467 = vmatpush.bf16.msra.mxu0 0
          %3468 = vmatpush.bf16.msra.mxu0 0
          %3469 = vmatpush.bf16.msra.mxu0 %v3229
          %3470 = vmatpush.bf16.msra.mxu0 %v2911
          %3471 = vmatpush.bf16.msra.mxu0 %v2904
          %3472 = vmatmul.bf16.gmra.mxu0 %v3219
          %v3473 = vpop.f32.mrf.mxu0
          %v3474 = vadd.f32 %v3461, %v3473
          %v3475 = vpop.f32.mrf.mxu0
          %3476 = vdwg.mxu0
          %3477 = vmatpush.bf16.msra.mxu0 %v2674
          %3478 = vmatpush.bf16.msra.mxu0 %v2667
          %3479 = vmatpush.bf16.msra.mxu0 %v2660
          %3480 = vmatpush.bf16.msra.mxu0 %v2653
          %3481 = vmatpush.bf16.msra.mxu0 %v2646
          %3482 = vmatpush.bf16.msra.mxu0 %v2639
          %3483 = vmatpush.bf16.msra.mxu0 %v2632
          %3484 = vmatpush.bf16.msra.mxu0 %v2625
          %3485 = vmatmul.bf16.gmra.mxu0 %v1325
          %v3486 = vpop.f32.mrf.mxu0
          %v3487 = vadd.f32 %v1676, %v3486
          %v3488 = vpop.f32.mrf.mxu0
          %3489 = vdwg.mxu0
          %3490 = vmatpush.bf16.msra.mxu0 %v2730
          %3491 = vmatpush.bf16.msra.mxu0 %v2723
          %3492 = vmatpush.bf16.msra.mxu0 %v2716
          %3493 = vmatpush.bf16.msra.mxu0 %v2709
          %3494 = vmatpush.bf16.msra.mxu0 %v2702
          %3495 = vmatpush.bf16.msra.mxu0 %v2695
          %3496 = vmatpush.bf16.msra.mxu0 %v2688
          %3497 = vmatpush.bf16.msra.mxu0 %v2681
          %3498 = vmatmul.bf16.gmra.mxu0 %v1326
          %v3499 = vpop.f32.mrf.mxu0
          %v3500 = vadd.f32 %v3487, %v3499
          %v3501 = vpop.f32.mrf.mxu0
          %3502 = vdwg.mxu0
          %3503 = vmatpush.bf16.msra.mxu0 %v2786
          %3504 = vmatpush.bf16.msra.mxu0 %v2779
          %3505 = vmatpush.bf16.msra.mxu0 %v2772
          %3506 = vmatpush.bf16.msra.mxu0 %v2765
          %3507 = vmatpush.bf16.msra.mxu0 %v2758
          %3508 = vmatpush.bf16.msra.mxu0 %v2751
          %3509 = vmatpush.bf16.msra.mxu0 %v2744
          %3510 = vmatpush.bf16.msra.mxu0 %v2737
          %3511 = vmatmul.bf16.gmra.mxu0 %v1327
          %v3512 = vpop.f32.mrf.mxu0
          %v3513 = vadd.f32 %v3500, %v3512
          %v3514 = vpop.f32.mrf.mxu0
          %3515 = vdwg.mxu0
          %3516 = vmatpush.bf16.msra.mxu0 %v2842
          %3517 = vmatpush.bf16.msra.mxu0 %v2835
          %3518 = vmatpush.bf16.msra.mxu0 %v2828
          %3519 = vmatpush.bf16.msra.mxu0 %v2821
          %3520 = vmatpush.bf16.msra.mxu0 %v2814
          %3521 = vmatpush.bf16.msra.mxu0 %v2807
          %3522 = vmatpush.bf16.msra.mxu0 %v2800
          %3523 = vmatpush.bf16.msra.mxu0 %v2793
          %3524 = vmatmul.bf16.gmra.mxu0 %v1328
          %v3525 = vpop.f32.mrf.mxu0
          %v3526 = vadd.f32 %v3513, %v3525
          %v3527 = vpop.f32.mrf.mxu0
          %3528 = vdwg.mxu0
          %3529 = vmatpush.bf16.msra.mxu0 %v2898
          %3530 = vmatpush.bf16.msra.mxu0 %v2891
          %3531 = vmatpush.bf16.msra.mxu0 %v2884
          %3532 = vmatpush.bf16.msra.mxu0 %v2877
          %3533 = vmatpush.bf16.msra.mxu0 %v2870
          %3534 = vmatpush.bf16.msra.mxu0 %v2863
          %3535 = vmatpush.bf16.msra.mxu0 %v2856
          %3536 = vmatpush.bf16.msra.mxu0 %v2849
          %3537 = vmatmul.bf16.gmra.mxu0 %v1329
          %v3538 = vpop.f32.mrf.mxu0
          %v3539 = vadd.f32 %v3526, %v3538
          %v3540 = vpop.f32.mrf.mxu0
          %3541 = vdwg.mxu0
          %3542 = vmatpush.bf16.msra.mxu0 0
          %3543 = vmatpush.bf16.msra.mxu0 0
          %3544 = vmatpush.bf16.msra.mxu0 0
          %3545 = vmatpush.bf16.msra.mxu0 0
          %3546 = vmatpush.bf16.msra.mxu0 0
          %3547 = vmatpush.bf16.msra.mxu0 %v3232
          %3548 = vmatpush.bf16.msra.mxu0 %v2912
          %3549 = vmatpush.bf16.msra.mxu0 %v2905
          %3550 = vmatmul.bf16.gmra.mxu0 %v3219
          %v3551 = vpop.f32.mrf.mxu0
          %v3552 = vadd.f32 %v3539, %v3551
          %v3553 = vpop.f32.mrf.mxu0
          %3554 = vdwg.mxu0
          %3555 = vmatpush.bf16.msra.mxu0 %v2675
          %3556 = vmatpush.bf16.msra.mxu0 %v2668
          %3557 = vmatpush.bf16.msra.mxu0 %v2661
          %3558 = vmatpush.bf16.msra.mxu0 %v2654
          %3559 = vmatpush.bf16.msra.mxu0 %v2647
          %3560 = vmatpush.bf16.msra.mxu0 %v2640
          %3561 = vmatpush.bf16.msra.mxu0 %v2633
          %3562 = vmatpush.bf16.msra.mxu0 %v2626
          %3563 = vmatmul.bf16.gmra.mxu0 %v1325
          %v3564 = vpop.f32.mrf.mxu0
          %v3565 = vadd.f32 %v1677, %v3564
          %v3566 = vpop.f32.mrf.mxu0
          %3567 = vdwg.mxu0
          %3568 = vmatpush.bf16.msra.mxu0 %v2731
          %3569 = vmatpush.bf16.msra.mxu0 %v2724
          %3570 = vmatpush.bf16.msra.mxu0 %v2717
          %3571 = vmatpush.bf16.msra.mxu0 %v2710
          %3572 = vmatpush.bf16.msra.mxu0 %v2703
          %3573 = vmatpush.bf16.msra.mxu0 %v2696
          %3574 = vmatpush.bf16.msra.mxu0 %v2689
          %3575 = vmatpush.bf16.msra.mxu0 %v2682
          %3576 = vmatmul.bf16.gmra.mxu0 %v1326
          %v3577 = vpop.f32.mrf.mxu0
          %v3578 = vadd.f32 %v3565, %v3577
          %v3579 = vpop.f32.mrf.mxu0
          %3580 = vdwg.mxu0
          %3581 = vmatpush.bf16.msra.mxu0 %v2787
          %3582 = vmatpush.bf16.msra.mxu0 %v2780
          %3583 = vmatpush.bf16.msra.mxu0 %v2773
          %3584 = vmatpush.bf16.msra.mxu0 %v2766
          %3585 = vmatpush.bf16.msra.mxu0 %v2759
          %3586 = vmatpush.bf16.msra.mxu0 %v2752
          %3587 = vmatpush.bf16.msra.mxu0 %v2745
          %3588 = vmatpush.bf16.msra.mxu0 %v2738
          %3589 = vmatmul.bf16.gmra.mxu0 %v1327
          %v3590 = vpop.f32.mrf.mxu0
          %v3591 = vadd.f32 %v3578, %v3590
          %v3592 = vpop.f32.mrf.mxu0
          %3593 = vdwg.mxu0
          %3594 = vmatpush.bf16.msra.mxu0 %v2843
          %3595 = vmatpush.bf16.msra.mxu0 %v2836
          %3596 = vmatpush.bf16.msra.mxu0 %v2829
          %3597 = vmatpush.bf16.msra.mxu0 %v2822
          %3598 = vmatpush.bf16.msra.mxu0 %v2815
          %3599 = vmatpush.bf16.msra.mxu0 %v2808
          %3600 = vmatpush.bf16.msra.mxu0 %v2801
          %3601 = vmatpush.bf16.msra.mxu0 %v2794
          %3602 = vmatmul.bf16.gmra.mxu0 %v1328
          %v3603 = vpop.f32.mrf.mxu0
          %v3604 = vadd.f32 %v3591, %v3603
          %v3605 = vpop.f32.mrf.mxu0
          %3606 = vdwg.mxu0
          %3607 = vmatpush.bf16.msra.mxu0 %v2899
          %3608 = vmatpush.bf16.msra.mxu0 %v2892
          %3609 = vmatpush.bf16.msra.mxu0 %v2885
          %3610 = vmatpush.bf16.msra.mxu0 %v2878
          %3611 = vmatpush.bf16.msra.mxu0 %v2871
          %3612 = vmatpush.bf16.msra.mxu0 %v2864
          %3613 = vmatpush.bf16.msra.mxu0 %v2857
          %3614 = vmatpush.bf16.msra.mxu0 %v2850
          %3615 = vmatmul.bf16.gmra.mxu0 %v1329
          %v3616 = vpop.f32.mrf.mxu0
          %v3617 = vadd.f32 %v3604, %v3616
          %v3618 = vpop.f32.mrf.mxu0
          %3619 = vdwg.mxu0
          %3620 = vmatpush.bf16.msra.mxu0 0
          %3621 = vmatpush.bf16.msra.mxu0 0
          %3622 = vmatpush.bf16.msra.mxu0 0
          %3623 = vmatpush.bf16.msra.mxu0 0
          %3624 = vmatpush.bf16.msra.mxu0 0
          %3625 = vmatpush.bf16.msra.mxu0 %v3235
          %3626 = vmatpush.bf16.msra.mxu0 %v2913
          %3627 = vmatpush.bf16.msra.mxu0 %v2906
          %3628 = vmatmul.bf16.gmra.mxu0 %v3219
          %v3629 = vpop.f32.mrf.mxu0
          %v3630 = vadd.f32 %v3617, %v3629
          %v3631 = vpop.f32.mrf.mxu0
          %3632 = vdwg.mxu0
          %3633 = vmatpush.bf16.msra.mxu0 %v2676
          %3634 = vmatpush.bf16.msra.mxu0 %v2669
          %3635 = vmatpush.bf16.msra.mxu0 %v2662
          %3636 = vmatpush.bf16.msra.mxu0 %v2655
          %3637 = vmatpush.bf16.msra.mxu0 %v2648
          %3638 = vmatpush.bf16.msra.mxu0 %v2641
          %3639 = vmatpush.bf16.msra.mxu0 %v2634
          %3640 = vmatpush.bf16.msra.mxu0 %v2627
          %3641 = vmatmul.bf16.gmra.mxu0 %v1325
          %v3642 = vpop.f32.mrf.mxu0
          %v3643 = vadd.f32 %v1678, %v3642
          %v3644 = vpop.f32.mrf.mxu0
          %3645 = vdwg.mxu0
          %3646 = vmatpush.bf16.msra.mxu0 %v2732
          %3647 = vmatpush.bf16.msra.mxu0 %v2725
          %3648 = vmatpush.bf16.msra.mxu0 %v2718
          %3649 = vmatpush.bf16.msra.mxu0 %v2711
          %3650 = vmatpush.bf16.msra.mxu0 %v2704
          %3651 = vmatpush.bf16.msra.mxu0 %v2697
          %3652 = vmatpush.bf16.msra.mxu0 %v2690
          %3653 = vmatpush.bf16.msra.mxu0 %v2683
          %3654 = vmatmul.bf16.gmra.mxu0 %v1326
          %v3655 = vpop.f32.mrf.mxu0
          %v3656 = vadd.f32 %v3643, %v3655
          %v3657 = vpop.f32.mrf.mxu0
          %3658 = vdwg.mxu0
          %3659 = vmatpush.bf16.msra.mxu0 %v2788
          %3660 = vmatpush.bf16.msra.mxu0 %v2781
          %3661 = vmatpush.bf16.msra.mxu0 %v2774
          %3662 = vmatpush.bf16.msra.mxu0 %v2767
          %3663 = vmatpush.bf16.msra.mxu0 %v2760
          %3664 = vmatpush.bf16.msra.mxu0 %v2753
          %3665 = vmatpush.bf16.msra.mxu0 %v2746
          %3666 = vmatpush.bf16.msra.mxu0 %v2739
          %3667 = vmatmul.bf16.gmra.mxu0 %v1327
          %v3668 = vpop.f32.mrf.mxu0
          %v3669 = vadd.f32 %v3656, %v3668
          %v3670 = vpop.f32.mrf.mxu0
          %3671 = vdwg.mxu0
          %3672 = vmatpush.bf16.msra.mxu0 %v2844
          %3673 = vmatpush.bf16.msra.mxu0 %v2837
          %3674 = vmatpush.bf16.msra.mxu0 %v2830
          %3675 = vmatpush.bf16.msra.mxu0 %v2823
          %3676 = vmatpush.bf16.msra.mxu0 %v2816
          %3677 = vmatpush.bf16.msra.mxu0 %v2809
          %3678 = vmatpush.bf16.msra.mxu0 %v2802
          %3679 = vmatpush.bf16.msra.mxu0 %v2795
          %3680 = vmatmul.bf16.gmra.mxu0 %v1328
          %v3681 = vpop.f32.mrf.mxu0
          %v3682 = vadd.f32 %v3669, %v3681
          %v3683 = vpop.f32.mrf.mxu0
          %3684 = vdwg.mxu0
          %3685 = vmatpush.bf16.msra.mxu0 %v2900
          %3686 = vmatpush.bf16.msra.mxu0 %v2893
          %3687 = vmatpush.bf16.msra.mxu0 %v2886
          %3688 = vmatpush.bf16.msra.mxu0 %v2879
          %3689 = vmatpush.bf16.msra.mxu0 %v2872
          %3690 = vmatpush.bf16.msra.mxu0 %v2865
          %3691 = vmatpush.bf16.msra.mxu0 %v2858
          %3692 = vmatpush.bf16.msra.mxu0 %v2851
          %3693 = vmatmul.bf16.gmra.mxu0 %v1329
          %v3694 = vpop.f32.mrf.mxu0
          %v3695 = vadd.f32 %v3682, %v3694
          %v3696 = vpop.f32.mrf.mxu0
          %3697 = vdwg.mxu0
          %3698 = vmatpush.bf16.msra.mxu0 0
          %3699 = vmatpush.bf16.msra.mxu0 0
          %3700 = vmatpush.bf16.msra.mxu0 0
          %3701 = vmatpush.bf16.msra.mxu0 0
          %3702 = vmatpush.bf16.msra.mxu0 0
          %3703 = vmatpush.bf16.msra.mxu0 %v3238
          %3704 = vmatpush.bf16.msra.mxu0 %v2914
          %3705 = vmatpush.bf16.msra.mxu0 %v2907
          %3706 = vmatmul.bf16.gmra.mxu0 %v3219
          %v3707 = vpop.f32.mrf.mxu0
          %v3708 = vadd.f32 %v3695, %v3707
          %v3709 = vpop.f32.mrf.mxu0
          %3710 = vdwg.mxu0
          %3711 = vmatpush.bf16.msra.mxu0 %v2677
          %3712 = vmatpush.bf16.msra.mxu0 %v2670
          %3713 = vmatpush.bf16.msra.mxu0 %v2663
          %3714 = vmatpush.bf16.msra.mxu0 %v2656
          %3715 = vmatpush.bf16.msra.mxu0 %v2649
          %3716 = vmatpush.bf16.msra.mxu0 %v2642
          %3717 = vmatpush.bf16.msra.mxu0 %v2635
          %3718 = vmatpush.bf16.msra.mxu0 %v2628
          %3719 = vmatmul.bf16.gmra.mxu0 %v1325
          %v3720 = vpop.f32.mrf.mxu0
          %v3721 = vadd.f32 %v1679, %v3720
          %v3722 = vpop.f32.mrf.mxu0
          %3723 = vdwg.mxu0
          %3724 = vmatpush.bf16.msra.mxu0 %v2733
          %3725 = vmatpush.bf16.msra.mxu0 %v2726
          %3726 = vmatpush.bf16.msra.mxu0 %v2719
          %3727 = vmatpush.bf16.msra.mxu0 %v2712
          %3728 = vmatpush.bf16.msra.mxu0 %v2705
          %3729 = vmatpush.bf16.msra.mxu0 %v2698
          %3730 = vmatpush.bf16.msra.mxu0 %v2691
          %3731 = vmatpush.bf16.msra.mxu0 %v2684
          %3732 = vmatmul.bf16.gmra.mxu0 %v1326
          %v3733 = vpop.f32.mrf.mxu0
          %v3734 = vadd.f32 %v3721, %v3733
          %v3735 = vpop.f32.mrf.mxu0
          %3736 = vdwg.mxu0
          %3737 = vmatpush.bf16.msra.mxu0 %v2789
          %3738 = vmatpush.bf16.msra.mxu0 %v2782
          %3739 = vmatpush.bf16.msra.mxu0 %v2775
          %3740 = vmatpush.bf16.msra.mxu0 %v2768
          %3741 = vmatpush.bf16.msra.mxu0 %v2761
          %3742 = vmatpush.bf16.msra.mxu0 %v2754
          %3743 = vmatpush.bf16.msra.mxu0 %v2747
          %3744 = vmatpush.bf16.msra.mxu0 %v2740
          %3745 = vmatmul.bf16.gmra.mxu0 %v1327
          %v3746 = vpop.f32.mrf.mxu0
          %v3747 = vadd.f32 %v3734, %v3746
          %v3748 = vpop.f32.mrf.mxu0
          %3749 = vdwg.mxu0
          %3750 = vmatpush.bf16.msra.mxu0 %v2845
          %3751 = vmatpush.bf16.msra.mxu0 %v2838
          %3752 = vmatpush.bf16.msra.mxu0 %v2831
          %3753 = vmatpush.bf16.msra.mxu0 %v2824
          %3754 = vmatpush.bf16.msra.mxu0 %v2817
          %3755 = vmatpush.bf16.msra.mxu0 %v2810
          %3756 = vmatpush.bf16.msra.mxu0 %v2803
          %3757 = vmatpush.bf16.msra.mxu0 %v2796
          %3758 = vmatmul.bf16.gmra.mxu0 %v1328
          %v3759 = vpop.f32.mrf.mxu0
          %v3760 = vadd.f32 %v3747, %v3759
          %v3761 = vpop.f32.mrf.mxu0
          %3762 = vdwg.mxu0
          %3763 = vmatpush.bf16.msra.mxu0 %v2901
          %3764 = vmatpush.bf16.msra.mxu0 %v2894
          %3765 = vmatpush.bf16.msra.mxu0 %v2887
          %3766 = vmatpush.bf16.msra.mxu0 %v2880
          %3767 = vmatpush.bf16.msra.mxu0 %v2873
          %3768 = vmatpush.bf16.msra.mxu0 %v2866
          %3769 = vmatpush.bf16.msra.mxu0 %v2859
          %3770 = vmatpush.bf16.msra.mxu0 %v2852
          %3771 = vmatmul.bf16.gmra.mxu0 %v1329
          %v3772 = vpop.f32.mrf.mxu0
          %v3773 = vadd.f32 %v3760, %v3772
          %v3774 = vpop.f32.mrf.mxu0
          %3775 = vdwg.mxu0
          %3776 = vmatpush.bf16.msra.mxu0 0
          %3777 = vmatpush.bf16.msra.mxu0 0
          %3778 = vmatpush.bf16.msra.mxu0 0
          %3779 = vmatpush.bf16.msra.mxu0 0
          %3780 = vmatpush.bf16.msra.mxu0 0
          %3781 = vmatpush.bf16.msra.mxu0 %v3241
          %3782 = vmatpush.bf16.msra.mxu0 %v2915
          %3783 = vmatpush.bf16.msra.mxu0 %v2908
          %3784 = vmatmul.bf16.gmra.mxu0 %v3219
          %v3785 = vpop.f32.mrf.mxu0
          %v3786 = vadd.f32 %v3773, %v3785
          %v3787 = vpop.f32.mrf.mxu0
          %3788 = vdwg.mxu0
          %vm3789 = vcmp.gt.f32.partialorder %v3318, 0.0
          %vm3790 = vcmp.gt.f32.partialorder %v3396, 0.0
          %vm3791 = vcmp.gt.f32.partialorder %v3474, 0.0
          %vm3792 = vcmp.gt.f32.partialorder %v3552, 0.0
          %vm3793 = vcmp.gt.f32.partialorder %v3630, 0.0
          %vm3794 = vcmp.gt.f32.partialorder %v3708, 0.0
          %vm3795 = vcmp.gt.f32.partialorder %v3786, 0.0
          %v3796 = vmul.f32 %v3318, 0.01
          %v3797 = vmul.f32 %v3396, 0.01
          %v3798 = vmul.f32 %v3474, 0.01
          %v3799 = vmul.f32 %v3552, 0.01
          %v3800 = vmul.f32 %v3630, 0.01
          %v3801 = vmul.f32 %v3708, 0.01
          %v3802 = vmul.f32 %v3786, 0.01
          %v3803 = vsel %vm3789, %v3318, %v3796
          %v3804 = vsel %vm3790, %v3396, %v3797
          %v3805 = vsel %vm3791, %v3474, %v3798
          %v3806 = vsel %vm3792, %v3552, %v3799
          %v3807 = vsel %vm3793, %v3630, %v3800
          %v3808 = vsel %vm3794, %v3708, %v3801
          %v3809 = vsel %vm3795, %v3786, %v3802
          %v3810 = vpack.c.bf16 %v3803, %v3803
          %v3811 = vpack.c.bf16 %v3804, %v3804
          %v3812 = vpack.c.bf16 %v3805, %v3805
          %v3813 = vpack.c.bf16 %v3806, %v3806
          %v3814 = vpack.c.bf16 %v3807, %v3807
          %v3815 = vpack.c.bf16 %v3808, %v3808
          %v3816 = vpack.c.bf16 %v3809, %v3809
          %v3817 = vld [vmem:[#allocation10] sm:$0xff]
          %v3818 = vld [vmem:[#allocation10 + $0x8] sm:$0xff]
          %v3819 = vld [vmem:[#allocation10 + $0x10] sm:$0xf]
          %v3820 = vld [vmem:[#allocation10 + $0x14] sm:$0xff]
          %v3821 = vld [vmem:[#allocation10 + $0x1c] sm:$0xff]
          %v3822 = vld [vmem:[#allocation10 + $0x24] sm:$0xf]
          %v3823 = vld [vmem:[#allocation10 + $0x28] sm:$0xff]
          %v3824 = vld [vmem:[#allocation10 + $0x30] sm:$0xff]
          %v3825 = vld [vmem:[#allocation10 + $0x38] sm:$0xf]
          %v3826 = vld [vmem:[#allocation10 + $0x3c] sm:$0xff]
          %v3827 = vld [vmem:[#allocation10 + $0x44] sm:$0xff]
          %v3828 = vld [vmem:[#allocation10 + $0x4c] sm:$0xf]
          %v3829 = vld [vmem:[#allocation10 + $0x50] sm:$0xff]
          %v3830 = vld [vmem:[#allocation10 + $0x58] sm:$0xff]
          %v3831 = vld [vmem:[#allocation10 + $0x60] sm:$0xf]
          %v3832 = vld [vmem:[#allocation10 + $0x64] sm:$0xff]
          %v3833 = vld [vmem:[#allocation10 + $0x6c] sm:$0xff]
          %v3834 = vld [vmem:[#allocation10 + $0x74] sm:$0xf]
          %v3835 = vld [vmem:[#allocation10 + $0x78] sm:$0xff]
          %v3836 = vld [vmem:[#allocation10 + $0x80] sm:$0xff]
          %v3837 = vld [vmem:[#allocation10 + $0x88] sm:$0xf]
          %v3838 = vld [vmem:[#allocation10 + $0x8c] sm:$0xff]
          %v3839 = vld [vmem:[#allocation10 + $0x94] sm:$0xff]
          %v3840 = vld [vmem:[#allocation10 + $0x9c] sm:$0xf]
          %v3841 = vld [vmem:[#allocation10 + $0xa0] sm:$0xff]
          %v3842 = vld [vmem:[#allocation10 + $0xa8] sm:$0xff]
          %v3843 = vld [vmem:[#allocation10 + $0xb0] sm:$0xf]
          %v3844 = vld [vmem:[#allocation10 + $0xb4] sm:$0xff]
          %v3845 = vld [vmem:[#allocation10 + $0xbc] sm:$0xff]
          %v3846 = vld [vmem:[#allocation10 + $0xc4] sm:$0xf]
          %v3847 = vld [vmem:[#allocation10 + $0xc8] sm:$0xff]
          %v3848 = vld [vmem:[#allocation10 + $0xd0] sm:$0xff]
          %v3849 = vld [vmem:[#allocation10 + $0xd8] sm:$0xf]
          %v3850 = vld [vmem:[#allocation10 + $0xdc] sm:$0xff]
          %v3851 = vld [vmem:[#allocation10 + $0xe4] sm:$0xff]
          %v3852 = vld [vmem:[#allocation10 + $0xec] sm:$0xf]
          %v3853 = vld [vmem:[#allocation10 + $0xf0] sm:$0xff]
          %v3854 = vld [vmem:[#allocation10 + $0xf8] sm:$0xff]
          %v3855 = vld [vmem:[#allocation10 + $0x100] sm:$0xf]
          %v3856 = vld [vmem:[#allocation10 + $0x104] sm:$0xff]
          %v3857 = vld [vmem:[#allocation10 + $0x10c] sm:$0xff]
          %v3858 = vld [vmem:[#allocation10 + $0x114] sm:$0xf]
          %v3859 = vld [vmem:[#allocation10 + $0x118] sm:$0xff]
          %v3860 = vld [vmem:[#allocation10 + $0x120] sm:$0xff]
          %v3861 = vld [vmem:[#allocation10 + $0x128] sm:$0xf]
          %v3862 = vld [vmem:[#allocation10 + $0x12c] sm:$0xff]
          %v3863 = vld [vmem:[#allocation10 + $0x134] sm:$0xff]
          %v3864 = vld [vmem:[#allocation10 + $0x13c] sm:$0xf]
          %v3865 = vld [vmem:[#allocation10 + $0x140] sm:$0xff]
          %v3866 = vld [vmem:[#allocation10 + $0x148] sm:$0xff]
          %v3867 = vld [vmem:[#allocation10 + $0x150] sm:$0xf]
          %v3868 = vld [vmem:[#allocation10 + $0x154] sm:$0xff]
          %v3869 = vld [vmem:[#allocation10 + $0x15c] sm:$0xff]
          %v3870 = vld [vmem:[#allocation10 + $0x164] sm:$0xf]
          %v3871 = vld [vmem:[#allocation10 + $0x168] sm:$0xff]
          %v3872 = vld [vmem:[#allocation10 + $0x170] sm:$0xff]
          %v3873 = vld [vmem:[#allocation10 + $0x178] sm:$0xf]
          %v3874 = vld [vmem:[#allocation10 + $0x17c] sm:$0xff]
          %v3875 = vld [vmem:[#allocation10 + $0x184] sm:$0xff]
          %v3876 = vld [vmem:[#allocation10 + $0x18c] sm:$0xf]
          %v3877 = vld [vmem:[#allocation10 + $0x190] sm:$0xff]
          %v3878 = vld [vmem:[#allocation10 + $0x198] sm:$0xff]
          %v3879 = vld [vmem:[#allocation10 + $0x1a0] sm:$0xf]
          %v3880 = vld [vmem:[#allocation10 + $0x1a4] sm:$0xff]
          %v3881 = vld [vmem:[#allocation10 + $0x1ac] sm:$0xff]
          %v3882 = vld [vmem:[#allocation10 + $0x1b4] sm:$0xf]
          %v3883 = vld [vmem:[#allocation10 + $0x1b8] sm:$0xff]
          %v3884 = vld [vmem:[#allocation10 + $0x1c0] sm:$0xff]
          %v3885 = vld [vmem:[#allocation10 + $0x1c8] sm:$0xf]
          %v3886 = vld [vmem:[#allocation10 + $0x1cc] sm:$0xff]
          %v3887 = vld [vmem:[#allocation10 + $0x1d4] sm:$0xff]
          %v3888 = vld [vmem:[#allocation10 + $0x1dc] sm:$0xf]
          %v3889 = vld [vmem:[#allocation10 + $0x1e0] sm:$0xff]
          %v3890 = vld [vmem:[#allocation10 + $0x1e8] sm:$0xff]
          %v3891 = vld [vmem:[#allocation10 + $0x1f0] sm:$0xf]
          %v3892 = vld [vmem:[#allocation10 + $0x1f4] sm:$0xff]
          %v3893 = vld [vmem:[#allocation10 + $0x1fc] sm:$0xff]
          %v3894 = vld [vmem:[#allocation10 + $0x204] sm:$0xf]
          %v3895 = vld [vmem:[#allocation10 + $0x208] sm:$0xff]
          %v3896 = vld [vmem:[#allocation10 + $0x210] sm:$0xff]
          %v3897 = vld [vmem:[#allocation10 + $0x218] sm:$0xf]
          %v3898 = vld [vmem:[#allocation10 + $0x21c] sm:$0xff]
          %v3899 = vld [vmem:[#allocation10 + $0x224] sm:$0xff]
          %v3900 = vld [vmem:[#allocation10 + $0x22c] sm:$0xf]
          %v3901 = vld [vmem:[#allocation10 + $0x230] sm:$0xff]
          %v3902 = vld [vmem:[#allocation10 + $0x238] sm:$0xff]
          %v3903 = vld [vmem:[#allocation10 + $0x240] sm:$0xf]
          %v3904 = vld [vmem:[#allocation10 + $0x244] sm:$0xff]
          %v3905 = vld [vmem:[#allocation10 + $0x24c] sm:$0xff]
          %v3906 = vld [vmem:[#allocation10 + $0x254] sm:$0xf]
          %v3907 = vld [vmem:[#allocation10 + $0x258] sm:$0xff]
          %v3908 = vld [vmem:[#allocation10 + $0x260] sm:$0xff]
          %v3909 = vld [vmem:[#allocation10 + $0x268] sm:$0xf]
          %v3910 = vld [vmem:[#allocation10 + $0x26c] sm:$0xff]
          %v3911 = vld [vmem:[#allocation10 + $0x274] sm:$0xff]
          %v3912 = vld [vmem:[#allocation10 + $0x27c] sm:$0xf]
          %v3913 = vld [vmem:[#allocation10 + $0x280] sm:$0xff]
          %v3914 = vld [vmem:[#allocation10 + $0x288] sm:$0xff]
          %v3915 = vld [vmem:[#allocation10 + $0x290] sm:$0xf]
          %v3916 = vld [vmem:[#allocation10 + $0x294] sm:$0xff]
          %v3917 = vld [vmem:[#allocation10 + $0x29c] sm:$0xff]
          %v3918 = vld [vmem:[#allocation10 + $0x2a4] sm:$0xf]
          %v3919 = vld [vmem:[#allocation10 + $0x2a8] sm:$0xff]
          %v3920 = vld [vmem:[#allocation10 + $0x2b0] sm:$0xff]
          %v3921 = vld [vmem:[#allocation10 + $0x2b8] sm:$0xf]
          %v3922 = vld [vmem:[#allocation10 + $0x2bc] sm:$0xff]
          %v3923 = vld [vmem:[#allocation10 + $0x2c4] sm:$0xff]
          %v3924 = vld [vmem:[#allocation10 + $0x2cc] sm:$0xf]
          %v3925 = vld [vmem:[#allocation10 + $0x2d0] sm:$0xff]
          %v3926 = vld [vmem:[#allocation10 + $0x2d8] sm:$0xff]
          %v3927 = vld [vmem:[#allocation10 + $0x2e0] sm:$0xf]
          %v3928 = vld [vmem:[#allocation10 + $0x2e4] sm:$0xff]
          %v3929 = vld [vmem:[#allocation10 + $0x2ec] sm:$0xff]
          %v3930 = vld [vmem:[#allocation10 + $0x2f4] sm:$0xf]
          %v3931 = vld [vmem:[#allocation10 + $0x2f8] sm:$0xff]
          %v3932 = vld [vmem:[#allocation10 + $0x300] sm:$0xff]
          %v3933 = vld [vmem:[#allocation10 + $0x308] sm:$0xf]
          %v3934 = vld [vmem:[#allocation10 + $0x30c] sm:$0xff]
          %v3935 = vld [vmem:[#allocation10 + $0x314] sm:$0xff]
          %v3936 = vld [vmem:[#allocation10 + $0x31c] sm:$0xf]
          %v3937 = vld [vmem:[#allocation10 + $0x320] sm:$0xff]
          %v3938 = vld [vmem:[#allocation10 + $0x328] sm:$0xff]
          %v3939 = vld [vmem:[#allocation10 + $0x330] sm:$0xf]
          %v3940 = vld [vmem:[#allocation10 + $0x334] sm:$0xff]
          %v3941 = vld [vmem:[#allocation10 + $0x33c] sm:$0xff]
          %v3942 = vld [vmem:[#allocation10 + $0x344] sm:$0xf]
          %v3943 = vld [vmem:[#allocation10 + $0x348] sm:$0xff]
          %v3944 = vld [vmem:[#allocation10 + $0x350] sm:$0xff]
          %v3945 = vld [vmem:[#allocation10 + $0x358] sm:$0xf]
          %v3946 = vld [vmem:[#allocation10 + $0x35c] sm:$0xff]
          %v3947 = vld [vmem:[#allocation10 + $0x364] sm:$0xff]
          %v3948 = vld [vmem:[#allocation10 + $0x36c] sm:$0xf]
          %v3949 = vld [vmem:[#allocation10 + $0x370] sm:$0xff]
          %v3950 = vld [vmem:[#allocation10 + $0x378] sm:$0xff]
          %v3951 = vld [vmem:[#allocation10 + $0x380] sm:$0xf]
          %v3952 = vld [vmem:[#allocation10 + $0x384] sm:$0xff]
          %v3953 = vld [vmem:[#allocation10 + $0x38c] sm:$0xff]
          %v3954 = vld [vmem:[#allocation10 + $0x394] sm:$0xf]
          %v3955 = vld [vmem:[#allocation10 + $0x398] sm:$0xff]
          %v3956 = vld [vmem:[#allocation10 + $0x3a0] sm:$0xff]
          %v3957 = vld [vmem:[#allocation10 + $0x3a8] sm:$0xf]
          %v3958 = vld [vmem:[#allocation10 + $0x3ac] sm:$0xff]
          %v3959 = vld [vmem:[#allocation10 + $0x3b4] sm:$0xff]
          %v3960 = vld [vmem:[#allocation10 + $0x3bc] sm:$0xf]
          %v3961 = vld [vmem:[#allocation10 + $0x3c0] sm:$0xff]
          %v3962 = vld [vmem:[#allocation10 + $0x3c8] sm:$0xff]
          %v3963 = vld [vmem:[#allocation10 + $0x3d0] sm:$0xf]
          %v3964 = vld [vmem:[#allocation10 + $0x3d4] sm:$0xff]
          %v3965 = vld [vmem:[#allocation10 + $0x3dc] sm:$0xff]
          %v3966 = vld [vmem:[#allocation10 + $0x3e4] sm:$0xf]
          %v3967 = vld [vmem:[#allocation10 + $0x3e8] sm:$0xff]
          %v3968 = vld [vmem:[#allocation10 + $0x3f0] sm:$0xff]
          %v3969 = vld [vmem:[#allocation10 + $0x3f8] sm:$0xf]
          %v3970 = vld [vmem:[#allocation10 + $0x3fc] sm:$0xff]
          %v3971 = vld [vmem:[#allocation10 + $0x404] sm:$0xff]
          %v3972 = vld [vmem:[#allocation10 + $0x40c] sm:$0xf]
          %v3973 = vld [vmem:[#allocation10 + $0x410] sm:$0xff]
          %v3974 = vld [vmem:[#allocation10 + $0x418] sm:$0xff]
          %v3975 = vld [vmem:[#allocation10 + $0x420] sm:$0xf]
          %v3976 = vld [vmem:[#allocation10 + $0x424] sm:$0xff]
          %v3977 = vld [vmem:[#allocation10 + $0x42c] sm:$0xff]
          %v3978 = vld [vmem:[#allocation10 + $0x434] sm:$0xf]
          %v3979 = vld [vmem:[#allocation10 + $0x438] sm:$0xff]
          %v3980 = vld [vmem:[#allocation10 + $0x440] sm:$0xff]
          %v3981 = vld [vmem:[#allocation10 + $0x448] sm:$0xf]
          %v3982 = vld [vmem:[#allocation10 + $0x44c] sm:$0xff]
          %v3983 = vld [vmem:[#allocation10 + $0x454] sm:$0xff]
          %v3984 = vld [vmem:[#allocation10 + $0x45c] sm:$0xf]
          %v3985 = vld [vmem:[#allocation10 + $0x460] sm:$0xff]
          %v3986 = vld [vmem:[#allocation10 + $0x468] sm:$0xff]
          %v3987 = vld [vmem:[#allocation10 + $0x470] sm:$0xf]
          %v3988 = vld [vmem:[#allocation10 + $0x474] sm:$0xff]
          %v3989 = vld [vmem:[#allocation10 + $0x47c] sm:$0xff]
          %v3990 = vld [vmem:[#allocation10 + $0x484] sm:$0xf]
          %v3991 = vld [vmem:[#allocation10 + $0x488] sm:$0xff]
          %v3992 = vld [vmem:[#allocation10 + $0x490] sm:$0xff]
          %v3993 = vld [vmem:[#allocation10 + $0x498] sm:$0xf]
          %v3994 = vld [vmem:[#allocation10 + $0x49c] sm:$0xff]
          %v3995 = vld [vmem:[#allocation10 + $0x4a4] sm:$0xff]
          %v3996 = vld [vmem:[#allocation10 + $0x4ac] sm:$0xf]
          %v3997 = vld [vmem:[#allocation10 + $0x4b0] sm:$0xff]
          %v3998 = vld [vmem:[#allocation10 + $0x4b8] sm:$0xff]
          %v3999 = vld [vmem:[#allocation10 + $0x4c0] sm:$0xf]
          %v4000 = vld [vmem:[#allocation10 + $0x4c4] sm:$0xff]
          %v4001 = vld [vmem:[#allocation10 + $0x4cc] sm:$0xff]
          %v4002 = vld [vmem:[#allocation10 + $0x4d4] sm:$0xf]
          %v4003 = vld [vmem:[#allocation10 + $0x4d8] sm:$0xff]
          %v4004 = vld [vmem:[#allocation10 + $0x4e0] sm:$0xff]
          %v4005 = vld [vmem:[#allocation10 + $0x4e8] sm:$0xf]
          %v4006 = vld [vmem:[#allocation10 + $0x4ec] sm:$0xff]
          %v4007 = vld [vmem:[#allocation10 + $0x4f4] sm:$0xff]
          %v4008 = vld [vmem:[#allocation10 + $0x4fc] sm:$0xf]
          %v4009 = vld [vmem:[#allocation10 + $0x500] sm:$0xff]
          %v4010 = vld [vmem:[#allocation10 + $0x508] sm:$0xff]
          %v4011 = vld [vmem:[#allocation10 + $0x510] sm:$0xf]
          %v4012 = vld [vmem:[#allocation10 + $0x514] sm:$0xff]
          %v4013 = vld [vmem:[#allocation10 + $0x51c] sm:$0xff]
          %v4014 = vld [vmem:[#allocation10 + $0x524] sm:$0xf]
          %v4015 = vld [vmem:[#allocation10 + $0x528] sm:$0xff]
          %v4016 = vld [vmem:[#allocation10 + $0x530] sm:$0xff]
          %v4017 = vld [vmem:[#allocation10 + $0x538] sm:$0xf]
          %v4018 = vld [vmem:[#allocation10 + $0x53c] sm:$0xff]
          %v4019 = vld [vmem:[#allocation10 + $0x544] sm:$0xff]
          %v4020 = vld [vmem:[#allocation10 + $0x54c] sm:$0xf]
          %v4021 = vld [vmem:[#allocation10 + $0x550] sm:$0xff]
          %v4022 = vld [vmem:[#allocation10 + $0x558] sm:$0xff]
          %v4023 = vld [vmem:[#allocation10 + $0x560] sm:$0xf]
          %v4024 = vld [vmem:[#allocation10 + $0x564] sm:$0xff]
          %v4025 = vld [vmem:[#allocation10 + $0x56c] sm:$0xff]
          %v4026 = vld [vmem:[#allocation10 + $0x574] sm:$0xf]
          %v4027 = vld [vmem:[#allocation10 + $0x578] sm:$0xff]
          %v4028 = vld [vmem:[#allocation10 + $0x580] sm:$0xff]
          %v4029 = vld [vmem:[#allocation10 + $0x588] sm:$0xf]
          %v4030 = vld [vmem:[#allocation10 + $0x58c] sm:$0xff]
          %v4031 = vld [vmem:[#allocation10 + $0x594] sm:$0xff]
          %v4032 = vld [vmem:[#allocation10 + $0x59c] sm:$0xf]
          %v4033 = vld [vmem:[#allocation10 + $0x5a0] sm:$0xff]
          %v4034 = vld [vmem:[#allocation10 + $0x5a8] sm:$0xff]
          %v4035 = vld [vmem:[#allocation10 + $0x5b0] sm:$0xf]
          %v4036 = vld [vmem:[#allocation10 + $0x5b4] sm:$0xff]
          %v4037 = vld [vmem:[#allocation10 + $0x5bc] sm:$0xff]
          %v4038 = vld [vmem:[#allocation10 + $0x5c4] sm:$0xf]
          %v4039 = vld [vmem:[#allocation10 + $0x5c8] sm:$0xff]
          %v4040 = vld [vmem:[#allocation10 + $0x5d0] sm:$0xff]
          %v4041 = vld [vmem:[#allocation10 + $0x5d8] sm:$0xf]
          %v4042 = vld [vmem:[#allocation10 + $0x5dc] sm:$0xff]
          %v4043 = vld [vmem:[#allocation10 + $0x5e4] sm:$0xff]
          %v4044 = vld [vmem:[#allocation10 + $0x5ec] sm:$0xf]
          %v4045 = vld [vmem:[#allocation10 + $0x5f0] sm:$0xff]
          %v4046 = vld [vmem:[#allocation10 + $0x5f8] sm:$0xff]
          %v4047 = vld [vmem:[#allocation10 + $0x600] sm:$0xf]
          %v4048 = vld [vmem:[#allocation10 + $0x604] sm:$0xff]
          %v4049 = vld [vmem:[#allocation10 + $0x60c] sm:$0xff]
          %v4050 = vld [vmem:[#allocation10 + $0x614] sm:$0xf]
          %v4051 = vld [vmem:[#allocation10 + $0x618] sm:$0xff]
          %v4052 = vld [vmem:[#allocation10 + $0x620] sm:$0xff]
          %v4053 = vld [vmem:[#allocation10 + $0x628] sm:$0xf]
          %v4054 = vld [vmem:[#allocation10 + $0x62c] sm:$0xff]
          %v4055 = vld [vmem:[#allocation10 + $0x634] sm:$0xff]
          %v4056 = vld [vmem:[#allocation10 + $0x63c] sm:$0xf]
          %v4057 = vld [vmem:[#allocation10 + $0x640] sm:$0xff]
          %v4058 = vld [vmem:[#allocation10 + $0x648] sm:$0xff]
          %v4059 = vld [vmem:[#allocation10 + $0x650] sm:$0xf]
          %v4060 = vld [vmem:[#allocation10 + $0x654] sm:$0xff]
          %v4061 = vld [vmem:[#allocation10 + $0x65c] sm:$0xff]
          %v4062 = vld [vmem:[#allocation10 + $0x664] sm:$0xf]
          %v4063 = vld [vmem:[#allocation10 + $0x668] sm:$0xff]
          %v4064 = vld [vmem:[#allocation10 + $0x670] sm:$0xff]
          %v4065 = vld [vmem:[#allocation10 + $0x678] sm:$0xf]
          %v4066 = vld [vmem:[#allocation10 + $0x67c] sm:$0xff]
          %v4067 = vld [vmem:[#allocation10 + $0x684] sm:$0xff]
          %v4068 = vld [vmem:[#allocation10 + $0x68c] sm:$0xf]
          %v4069 = vld [vmem:[#allocation10 + $0x690] sm:$0xff]
          %v4070 = vld [vmem:[#allocation10 + $0x698] sm:$0xff]
          %v4071 = vld [vmem:[#allocation10 + $0x6a0] sm:$0xf]
          %v4072 = vld [vmem:[#allocation10 + $0x6a4] sm:$0xff]
          %v4073 = vld [vmem:[#allocation10 + $0x6ac] sm:$0xff]
          %v4074 = vld [vmem:[#allocation10 + $0x6b4] sm:$0xf]
          %v4075 = vld [vmem:[#allocation10 + $0x6b8] sm:$0xff]
          %v4076 = vld [vmem:[#allocation10 + $0x6c0] sm:$0xff]
          %v4077 = vld [vmem:[#allocation10 + $0x6c8] sm:$0xf]
          %v4078 = vld [vmem:[#allocation10 + $0x6cc] sm:$0xff]
          %v4079 = vld [vmem:[#allocation10 + $0x6d4] sm:$0xff]
          %v4080 = vld [vmem:[#allocation10 + $0x6dc] sm:$0xf]
          %v4081 = vld [vmem:[#allocation10 + $0x6e0] sm:$0xff]
          %v4082 = vld [vmem:[#allocation10 + $0x6e8] sm:$0xff]
          %v4083 = vld [vmem:[#allocation10 + $0x6f0] sm:$0xf]
          %v4084 = vld [vmem:[#allocation10 + $0x6f4] sm:$0xff]
          %v4085 = vld [vmem:[#allocation10 + $0x6fc] sm:$0xff]
          %v4086 = vld [vmem:[#allocation10 + $0x704] sm:$0xf]
          %v4087 = vld [vmem:[#allocation10 + $0x708] sm:$0xff]
          %v4088 = vld [vmem:[#allocation10 + $0x710] sm:$0xff]
          %v4089 = vld [vmem:[#allocation10 + $0x718] sm:$0xf]
          %v4090 = vld [vmem:[#allocation10 + $0x71c] sm:$0xff]
          %v4091 = vld [vmem:[#allocation10 + $0x724] sm:$0xff]
          %v4092 = vld [vmem:[#allocation10 + $0x72c] sm:$0xf]
          %v4093 = vld [vmem:[#allocation10 + $0x730] sm:$0xff]
          %v4094 = vld [vmem:[#allocation10 + $0x738] sm:$0xff]
          %v4095 = vld [vmem:[#allocation10 + $0x740] sm:$0xf]
          %v4096 = vld [vmem:[#allocation10 + $0x744] sm:$0xff]
          %v4097 = vld [vmem:[#allocation10 + $0x74c] sm:$0xff]
          %v4098 = vld [vmem:[#allocation10 + $0x754] sm:$0xf]
          %v4099 = vld [vmem:[#allocation10 + $0x758] sm:$0xff]
          %v4100 = vld [vmem:[#allocation10 + $0x760] sm:$0xff]
          %v4101 = vld [vmem:[#allocation10 + $0x768] sm:$0xf]
          %v4102 = vld [vmem:[#allocation10 + $0x76c] sm:$0xff]
          %v4103 = vld [vmem:[#allocation10 + $0x774] sm:$0xff]
          %v4104 = vld [vmem:[#allocation10 + $0x77c] sm:$0xf]
          %v4105 = vld [vmem:[#allocation10 + $0x780] sm:$0xff]
          %v4106 = vld [vmem:[#allocation10 + $0x788] sm:$0xff]
          %v4107 = vld [vmem:[#allocation10 + $0x790] sm:$0xf]
          %v4108 = vld [vmem:[#allocation10 + $0x794] sm:$0xff]
          %v4109 = vld [vmem:[#allocation10 + $0x79c] sm:$0xff]
          %v4110 = vld [vmem:[#allocation10 + $0x7a4] sm:$0xf]
          %v4111 = vld [vmem:[#allocation10 + $0x7a8] sm:$0xff]
          %v4112 = vld [vmem:[#allocation10 + $0x7b0] sm:$0xff]
          %v4113 = vld [vmem:[#allocation10 + $0x7b8] sm:$0xf]
          %v4114 = vld [vmem:[#allocation10 + $0x7bc] sm:$0xff]
          %v4115 = vld [vmem:[#allocation10 + $0x7c4] sm:$0xff]
          %v4116 = vld [vmem:[#allocation10 + $0x7cc] sm:$0xf]
          %v4117 = vld [vmem:[#allocation12] sm:$0x1f]
          %v4119 = vperm.slane %v4117, 0
          %v4120 = vperm.slane %v4117, 1
          %v4121 = vperm.slane %v4117, 2
          %v4122 = vperm.slane %v4117, 3
          %v4123 = vperm.slane %v4117, 4
          %v4429 = vunpack.c.l.b16 %v3817
          %v4430 = vunpack.c.h.b16 %v3817
          %v4431 = vunpack.c.l.b16 %v3818
          %v4432 = vunpack.c.h.b16 %v3818
          %v4433 = vunpack.c.l.b16 %v3819
          %v4434 = vunpack.c.l.b16 %v3820
          %v4435 = vunpack.c.h.b16 %v3820
          %v4436 = vunpack.c.l.b16 %v3821
          %v4437 = vunpack.c.h.b16 %v3821
          %v4438 = vunpack.c.l.b16 %v3822
          %v4439 = vunpack.c.l.b16 %v3823
          %v4440 = vunpack.c.h.b16 %v3823
          %v4441 = vunpack.c.l.b16 %v3824
          %v4442 = vunpack.c.h.b16 %v3824
          %v4443 = vunpack.c.l.b16 %v3825
          %v4444 = vunpack.c.l.b16 %v3826
          %v4445 = vunpack.c.h.b16 %v3826
          %v4446 = vunpack.c.l.b16 %v3827
          %v4447 = vunpack.c.h.b16 %v3827
          %v4448 = vunpack.c.l.b16 %v3828
          %v4449 = vunpack.c.l.b16 %v3829
          %v4450 = vunpack.c.h.b16 %v3829
          %v4451 = vunpack.c.l.b16 %v3830
          %v4452 = vunpack.c.h.b16 %v3830
          %v4453 = vunpack.c.l.b16 %v3831
          %v4454 = vunpack.c.l.b16 %v3832
          %v4455 = vunpack.c.h.b16 %v3832
          %v4456 = vunpack.c.l.b16 %v3833
          %v4457 = vunpack.c.h.b16 %v3833
          %v4458 = vunpack.c.l.b16 %v3834
          %v4459 = vunpack.c.l.b16 %v3835
          %v4460 = vunpack.c.h.b16 %v3835
          %v4461 = vunpack.c.l.b16 %v3836
          %v4462 = vunpack.c.h.b16 %v3836
          %v4463 = vunpack.c.l.b16 %v3837
          %v4464 = vunpack.c.l.b16 %v3838
          %v4465 = vunpack.c.h.b16 %v3838
          %v4466 = vunpack.c.l.b16 %v3839
          %v4467 = vunpack.c.h.b16 %v3839
          %v4468 = vunpack.c.l.b16 %v3840
          %v4469 = vunpack.c.l.b16 %v3841
          %v4470 = vunpack.c.h.b16 %v3841
          %v4471 = vunpack.c.l.b16 %v3842
          %v4472 = vunpack.c.h.b16 %v3842
          %v4473 = vunpack.c.l.b16 %v3843
          %v4474 = vunpack.c.l.b16 %v3844
          %v4475 = vunpack.c.h.b16 %v3844
          %v4476 = vunpack.c.l.b16 %v3845
          %v4477 = vunpack.c.h.b16 %v3845
          %v4478 = vunpack.c.l.b16 %v3846
          %v4479 = vunpack.c.l.b16 %v3847
          %v4480 = vunpack.c.h.b16 %v3847
          %v4481 = vunpack.c.l.b16 %v3848
          %v4482 = vunpack.c.h.b16 %v3848
          %v4483 = vunpack.c.l.b16 %v3849
          %v4484 = vunpack.c.l.b16 %v3850
          %v4485 = vunpack.c.h.b16 %v3850
          %v4486 = vunpack.c.l.b16 %v3851
          %v4487 = vunpack.c.h.b16 %v3851
          %v4488 = vunpack.c.l.b16 %v3852
          %v4489 = vunpack.c.l.b16 %v3853
          %v4490 = vunpack.c.h.b16 %v3853
          %v4491 = vunpack.c.l.b16 %v3854
          %v4492 = vunpack.c.h.b16 %v3854
          %v4493 = vunpack.c.l.b16 %v3855
          %v4494 = vunpack.c.l.b16 %v3856
          %v4495 = vunpack.c.h.b16 %v3856
          %v4496 = vunpack.c.l.b16 %v3857
          %v4497 = vunpack.c.h.b16 %v3857
          %v4498 = vunpack.c.l.b16 %v3858
          %v4499 = vunpack.c.l.b16 %v3859
          %v4500 = vunpack.c.h.b16 %v3859
          %v4501 = vunpack.c.l.b16 %v3860
          %v4502 = vunpack.c.h.b16 %v3860
          %v4503 = vunpack.c.l.b16 %v3861
          %v4504 = vunpack.c.l.b16 %v3862
          %v4505 = vunpack.c.h.b16 %v3862
          %v4506 = vunpack.c.l.b16 %v3863
          %v4507 = vunpack.c.h.b16 %v3863
          %v4508 = vunpack.c.l.b16 %v3864
          %v4509 = vunpack.c.l.b16 %v3865
          %v4510 = vunpack.c.h.b16 %v3865
          %v4511 = vunpack.c.l.b16 %v3866
          %v4512 = vunpack.c.h.b16 %v3866
          %v4513 = vunpack.c.l.b16 %v3867
          %v4514 = vunpack.c.l.b16 %v3868
          %v4515 = vunpack.c.h.b16 %v3868
          %v4516 = vunpack.c.l.b16 %v3869
          %v4517 = vunpack.c.h.b16 %v3869
          %v4518 = vunpack.c.l.b16 %v3870
          %v4519 = vunpack.c.l.b16 %v3871
          %v4520 = vunpack.c.h.b16 %v3871
          %v4521 = vunpack.c.l.b16 %v3872
          %v4522 = vunpack.c.h.b16 %v3872
          %v4523 = vunpack.c.l.b16 %v3873
          %v4524 = vunpack.c.l.b16 %v3874
          %v4525 = vunpack.c.h.b16 %v3874
          %v4526 = vunpack.c.l.b16 %v3875
          %v4527 = vunpack.c.h.b16 %v3875
          %v4528 = vunpack.c.l.b16 %v3876
          %v4529 = vunpack.c.l.b16 %v3877
          %v4530 = vunpack.c.h.b16 %v3877
          %v4531 = vunpack.c.l.b16 %v3878
          %v4532 = vunpack.c.h.b16 %v3878
          %v4533 = vunpack.c.l.b16 %v3879
          %v4534 = vunpack.c.l.b16 %v3880
          %v4535 = vunpack.c.h.b16 %v3880
          %v4536 = vunpack.c.l.b16 %v3881
          %v4537 = vunpack.c.h.b16 %v3881
          %v4538 = vunpack.c.l.b16 %v3882
          %v4539 = vunpack.c.l.b16 %v3883
          %v4540 = vunpack.c.h.b16 %v3883
          %v4541 = vunpack.c.l.b16 %v3884
          %v4542 = vunpack.c.h.b16 %v3884
          %v4543 = vunpack.c.l.b16 %v3885
          %v4544 = vunpack.c.l.b16 %v3886
          %v4545 = vunpack.c.h.b16 %v3886
          %v4546 = vunpack.c.l.b16 %v3887
          %v4547 = vunpack.c.h.b16 %v3887
          %v4548 = vunpack.c.l.b16 %v3888
          %v4549 = vunpack.c.l.b16 %v3889
          %v4550 = vunpack.c.h.b16 %v3889
          %v4551 = vunpack.c.l.b16 %v3890
          %v4552 = vunpack.c.h.b16 %v3890
          %v4553 = vunpack.c.l.b16 %v3891
          %v4554 = vunpack.c.l.b16 %v3892
          %v4555 = vunpack.c.h.b16 %v3892
          %v4556 = vunpack.c.l.b16 %v3893
          %v4557 = vunpack.c.h.b16 %v3893
          %v4558 = vunpack.c.l.b16 %v3894
          %v4559 = vunpack.c.l.b16 %v3895
          %v4560 = vunpack.c.h.b16 %v3895
          %v4561 = vunpack.c.l.b16 %v3896
          %v4562 = vunpack.c.h.b16 %v3896
          %v4563 = vunpack.c.l.b16 %v3897
          %v4564 = vunpack.c.l.b16 %v3898
          %v4565 = vunpack.c.h.b16 %v3898
          %v4566 = vunpack.c.l.b16 %v3899
          %v4567 = vunpack.c.h.b16 %v3899
          %v4568 = vunpack.c.l.b16 %v3900
          %v4569 = vunpack.c.l.b16 %v3901
          %v4570 = vunpack.c.h.b16 %v3901
          %v4571 = vunpack.c.l.b16 %v3902
          %v4572 = vunpack.c.h.b16 %v3902
          %v4573 = vunpack.c.l.b16 %v3903
          %v4574 = vunpack.c.l.b16 %v3904
          %v4575 = vunpack.c.h.b16 %v3904
          %v4576 = vunpack.c.l.b16 %v3905
          %v4577 = vunpack.c.h.b16 %v3905
          %v4578 = vunpack.c.l.b16 %v3906
          %v4579 = vunpack.c.l.b16 %v3907
          %v4580 = vunpack.c.h.b16 %v3907
          %v4581 = vunpack.c.l.b16 %v3908
          %v4582 = vunpack.c.h.b16 %v3908
          %v4583 = vunpack.c.l.b16 %v3909
          %v4584 = vunpack.c.l.b16 %v3910
          %v4585 = vunpack.c.h.b16 %v3910
          %v4586 = vunpack.c.l.b16 %v3911
          %v4587 = vunpack.c.h.b16 %v3911
          %v4588 = vunpack.c.l.b16 %v3912
          %v4589 = vunpack.c.l.b16 %v3913
          %v4590 = vunpack.c.h.b16 %v3913
          %v4591 = vunpack.c.l.b16 %v3914
          %v4592 = vunpack.c.h.b16 %v3914
          %v4593 = vunpack.c.l.b16 %v3915
          %v4594 = vunpack.c.l.b16 %v3916
          %v4595 = vunpack.c.h.b16 %v3916
          %v4596 = vunpack.c.l.b16 %v3917
          %v4597 = vunpack.c.h.b16 %v3917
          %v4598 = vunpack.c.l.b16 %v3918
          %v4599 = vunpack.c.l.b16 %v3919
          %v4600 = vunpack.c.h.b16 %v3919
          %v4601 = vunpack.c.l.b16 %v3920
          %v4602 = vunpack.c.h.b16 %v3920
          %v4603 = vunpack.c.l.b16 %v3921
          %v4604 = vunpack.c.l.b16 %v3922
          %v4605 = vunpack.c.h.b16 %v3922
          %v4606 = vunpack.c.l.b16 %v3923
          %v4607 = vunpack.c.h.b16 %v3923
          %v4608 = vunpack.c.l.b16 %v3924
          %v4609 = vunpack.c.l.b16 %v3925
          %v4610 = vunpack.c.h.b16 %v3925
          %v4611 = vunpack.c.l.b16 %v3926
          %v4612 = vunpack.c.h.b16 %v3926
          %v4613 = vunpack.c.l.b16 %v3927
          %v4614 = vunpack.c.l.b16 %v3928
          %v4615 = vunpack.c.h.b16 %v3928
          %v4616 = vunpack.c.l.b16 %v3929
          %v4617 = vunpack.c.h.b16 %v3929
          %v4618 = vunpack.c.l.b16 %v3930
          %v4619 = vunpack.c.l.b16 %v3931
          %v4620 = vunpack.c.h.b16 %v3931
          %v4621 = vunpack.c.l.b16 %v3932
          %v4622 = vunpack.c.h.b16 %v3932
          %v4623 = vunpack.c.l.b16 %v3933
          %v4624 = vunpack.c.l.b16 %v3934
          %v4625 = vunpack.c.h.b16 %v3934
          %v4626 = vunpack.c.l.b16 %v3935
          %v4627 = vunpack.c.h.b16 %v3935
          %v4628 = vunpack.c.l.b16 %v3936
          %v4629 = vunpack.c.l.b16 %v3937
          %v4630 = vunpack.c.h.b16 %v3937
          %v4631 = vunpack.c.l.b16 %v3938
          %v4632 = vunpack.c.h.b16 %v3938
          %v4633 = vunpack.c.l.b16 %v3939
          %v4634 = vunpack.c.l.b16 %v3940
          %v4635 = vunpack.c.h.b16 %v3940
          %v4636 = vunpack.c.l.b16 %v3941
          %v4637 = vunpack.c.h.b16 %v3941
          %v4638 = vunpack.c.l.b16 %v3942
          %v4639 = vunpack.c.l.b16 %v3943
          %v4640 = vunpack.c.h.b16 %v3943
          %v4641 = vunpack.c.l.b16 %v3944
          %v4642 = vunpack.c.h.b16 %v3944
          %v4643 = vunpack.c.l.b16 %v3945
          %v4644 = vunpack.c.l.b16 %v3946
          %v4645 = vunpack.c.h.b16 %v3946
          %v4646 = vunpack.c.l.b16 %v3947
          %v4647 = vunpack.c.h.b16 %v3947
          %v4648 = vunpack.c.l.b16 %v3948
          %v4649 = vunpack.c.l.b16 %v3949
          %v4650 = vunpack.c.h.b16 %v3949
          %v4651 = vunpack.c.l.b16 %v3950
          %v4652 = vunpack.c.h.b16 %v3950
          %v4653 = vunpack.c.l.b16 %v3951
          %v4654 = vunpack.c.l.b16 %v3952
          %v4655 = vunpack.c.h.b16 %v3952
          %v4656 = vunpack.c.l.b16 %v3953
          %v4657 = vunpack.c.h.b16 %v3953
          %v4658 = vunpack.c.l.b16 %v3954
          %v4659 = vunpack.c.l.b16 %v3955
          %v4660 = vunpack.c.h.b16 %v3955
          %v4661 = vunpack.c.l.b16 %v3956
          %v4662 = vunpack.c.h.b16 %v3956
          %v4663 = vunpack.c.l.b16 %v3957
          %v4664 = vunpack.c.l.b16 %v3958
          %v4665 = vunpack.c.h.b16 %v3958
          %v4666 = vunpack.c.l.b16 %v3959
          %v4667 = vunpack.c.h.b16 %v3959
          %v4668 = vunpack.c.l.b16 %v3960
          %v4669 = vunpack.c.l.b16 %v3961
          %v4670 = vunpack.c.h.b16 %v3961
          %v4671 = vunpack.c.l.b16 %v3962
          %v4672 = vunpack.c.h.b16 %v3962
          %v4673 = vunpack.c.l.b16 %v3963
          %v4674 = vunpack.c.l.b16 %v3964
          %v4675 = vunpack.c.h.b16 %v3964
          %v4676 = vunpack.c.l.b16 %v3965
          %v4677 = vunpack.c.h.b16 %v3965
          %v4678 = vunpack.c.l.b16 %v3966
          %v4679 = vunpack.c.l.b16 %v3967
          %v4680 = vunpack.c.h.b16 %v3967
          %v4681 = vunpack.c.l.b16 %v3968
          %v4682 = vunpack.c.h.b16 %v3968
          %v4683 = vunpack.c.l.b16 %v3969
          %v4684 = vunpack.c.l.b16 %v3970
          %v4685 = vunpack.c.h.b16 %v3970
          %v4686 = vunpack.c.l.b16 %v3971
          %v4687 = vunpack.c.h.b16 %v3971
          %v4688 = vunpack.c.l.b16 %v3972
          %v4689 = vunpack.c.l.b16 %v3973
          %v4690 = vunpack.c.h.b16 %v3973
          %v4691 = vunpack.c.l.b16 %v3974
          %v4692 = vunpack.c.h.b16 %v3974
          %v4693 = vunpack.c.l.b16 %v3975
          %v4694 = vunpack.c.l.b16 %v3976
          %v4695 = vunpack.c.h.b16 %v3976
          %v4696 = vunpack.c.l.b16 %v3977
          %v4697 = vunpack.c.h.b16 %v3977
          %v4698 = vunpack.c.l.b16 %v3978
          %v4699 = vunpack.c.l.b16 %v3979
          %v4700 = vunpack.c.h.b16 %v3979
          %v4701 = vunpack.c.l.b16 %v3980
          %v4702 = vunpack.c.h.b16 %v3980
          %v4703 = vunpack.c.l.b16 %v3981
          %v4704 = vunpack.c.l.b16 %v3982
          %v4705 = vunpack.c.h.b16 %v3982
          %v4706 = vunpack.c.l.b16 %v3983
          %v4707 = vunpack.c.h.b16 %v3983
          %v4708 = vunpack.c.l.b16 %v3984
          %v4709 = vunpack.c.l.b16 %v3985
          %v4710 = vunpack.c.h.b16 %v3985
          %v4711 = vunpack.c.l.b16 %v3986
          %v4712 = vunpack.c.h.b16 %v3986
          %v4713 = vunpack.c.l.b16 %v3987
          %v4714 = vunpack.c.l.b16 %v3988
          %v4715 = vunpack.c.h.b16 %v3988
          %v4716 = vunpack.c.l.b16 %v3989
          %v4717 = vunpack.c.h.b16 %v3989
          %v4718 = vunpack.c.l.b16 %v3990
          %v4719 = vunpack.c.l.b16 %v3991
          %v4720 = vunpack.c.h.b16 %v3991
          %v4721 = vunpack.c.l.b16 %v3992
          %v4722 = vunpack.c.h.b16 %v3992
          %v4723 = vunpack.c.l.b16 %v3993
          %v4724 = vunpack.c.l.b16 %v3994
          %v4725 = vunpack.c.h.b16 %v3994
          %v4726 = vunpack.c.l.b16 %v3995
          %v4727 = vunpack.c.h.b16 %v3995
          %v4728 = vunpack.c.l.b16 %v3996
          %v4729 = vunpack.c.l.b16 %v3997
          %v4730 = vunpack.c.h.b16 %v3997
          %v4731 = vunpack.c.l.b16 %v3998
          %v4732 = vunpack.c.h.b16 %v3998
          %v4733 = vunpack.c.l.b16 %v3999
          %v4734 = vunpack.c.l.b16 %v4000
          %v4735 = vunpack.c.h.b16 %v4000
          %v4736 = vunpack.c.l.b16 %v4001
          %v4737 = vunpack.c.h.b16 %v4001
          %v4738 = vunpack.c.l.b16 %v4002
          %v4739 = vunpack.c.l.b16 %v4003
          %v4740 = vunpack.c.h.b16 %v4003
          %v4741 = vunpack.c.l.b16 %v4004
          %v4742 = vunpack.c.h.b16 %v4004
          %v4743 = vunpack.c.l.b16 %v4005
          %v4744 = vunpack.c.l.b16 %v4006
          %v4745 = vunpack.c.h.b16 %v4006
          %v4746 = vunpack.c.l.b16 %v4007
          %v4747 = vunpack.c.h.b16 %v4007
          %v4748 = vunpack.c.l.b16 %v4008
          %v4749 = vunpack.c.l.b16 %v4009
          %v4750 = vunpack.c.h.b16 %v4009
          %v4751 = vunpack.c.l.b16 %v4010
          %v4752 = vunpack.c.h.b16 %v4010
          %v4753 = vunpack.c.l.b16 %v4011
          %v4754 = vunpack.c.l.b16 %v4012
          %v4755 = vunpack.c.h.b16 %v4012
          %v4756 = vunpack.c.l.b16 %v4013
          %v4757 = vunpack.c.h.b16 %v4013
          %v4758 = vunpack.c.l.b16 %v4014
          %v4759 = vunpack.c.l.b16 %v4015
          %v4760 = vunpack.c.h.b16 %v4015
          %v4761 = vunpack.c.l.b16 %v4016
          %v4762 = vunpack.c.h.b16 %v4016
          %v4763 = vunpack.c.l.b16 %v4017
          %v4764 = vunpack.c.l.b16 %v4018
          %v4765 = vunpack.c.h.b16 %v4018
          %v4766 = vunpack.c.l.b16 %v4019
          %v4767 = vunpack.c.h.b16 %v4019
          %v4768 = vunpack.c.l.b16 %v4020
          %v4769 = vunpack.c.l.b16 %v4021
          %v4770 = vunpack.c.h.b16 %v4021
          %v4771 = vunpack.c.l.b16 %v4022
          %v4772 = vunpack.c.h.b16 %v4022
          %v4773 = vunpack.c.l.b16 %v4023
          %v4774 = vunpack.c.l.b16 %v4024
          %v4775 = vunpack.c.h.b16 %v4024
          %v4776 = vunpack.c.l.b16 %v4025
          %v4777 = vunpack.c.h.b16 %v4025
          %v4778 = vunpack.c.l.b16 %v4026
          %v4779 = vunpack.c.l.b16 %v4027
          %v4780 = vunpack.c.h.b16 %v4027
          %v4781 = vunpack.c.l.b16 %v4028
          %v4782 = vunpack.c.h.b16 %v4028
          %v4783 = vunpack.c.l.b16 %v4029
          %v4784 = vunpack.c.l.b16 %v4030
          %v4785 = vunpack.c.h.b16 %v4030
          %v4786 = vunpack.c.l.b16 %v4031
          %v4787 = vunpack.c.h.b16 %v4031
          %v4788 = vunpack.c.l.b16 %v4032
          %v4789 = vunpack.c.l.b16 %v4033
          %v4790 = vunpack.c.h.b16 %v4033
          %v4791 = vunpack.c.l.b16 %v4034
          %v4792 = vunpack.c.h.b16 %v4034
          %v4793 = vunpack.c.l.b16 %v4035
          %v4794 = vunpack.c.l.b16 %v4036
          %v4795 = vunpack.c.h.b16 %v4036
          %v4796 = vunpack.c.l.b16 %v4037
          %v4797 = vunpack.c.h.b16 %v4037
          %v4798 = vunpack.c.l.b16 %v4038
          %v4799 = vunpack.c.l.b16 %v4039
          %v4800 = vunpack.c.h.b16 %v4039
          %v4801 = vunpack.c.l.b16 %v4040
          %v4802 = vunpack.c.h.b16 %v4040
          %v4803 = vunpack.c.l.b16 %v4041
          %v4804 = vunpack.c.l.b16 %v4042
          %v4805 = vunpack.c.h.b16 %v4042
          %v4806 = vunpack.c.l.b16 %v4043
          %v4807 = vunpack.c.h.b16 %v4043
          %v4808 = vunpack.c.l.b16 %v4044
          %v4809 = vunpack.c.l.b16 %v4045
          %v4810 = vunpack.c.h.b16 %v4045
          %v4811 = vunpack.c.l.b16 %v4046
          %v4812 = vunpack.c.h.b16 %v4046
          %v4813 = vunpack.c.l.b16 %v4047
          %v4814 = vunpack.c.l.b16 %v4048
          %v4815 = vunpack.c.h.b16 %v4048
          %v4816 = vunpack.c.l.b16 %v4049
          %v4817 = vunpack.c.h.b16 %v4049
          %v4818 = vunpack.c.l.b16 %v4050
          %v4819 = vunpack.c.l.b16 %v4051
          %v4820 = vunpack.c.h.b16 %v4051
          %v4821 = vunpack.c.l.b16 %v4052
          %v4822 = vunpack.c.h.b16 %v4052
          %v4823 = vunpack.c.l.b16 %v4053
          %v4824 = vunpack.c.l.b16 %v4054
          %v4825 = vunpack.c.h.b16 %v4054
          %v4826 = vunpack.c.l.b16 %v4055
          %v4827 = vunpack.c.h.b16 %v4055
          %v4828 = vunpack.c.l.b16 %v4056
          %v4829 = vunpack.c.l.b16 %v4057
          %v4830 = vunpack.c.h.b16 %v4057
          %v4831 = vunpack.c.l.b16 %v4058
          %v4832 = vunpack.c.h.b16 %v4058
          %v4833 = vunpack.c.l.b16 %v4059
          %v4834 = vunpack.c.l.b16 %v4060
          %v4835 = vunpack.c.h.b16 %v4060
          %v4836 = vunpack.c.l.b16 %v4061
          %v4837 = vunpack.c.h.b16 %v4061
          %v4838 = vunpack.c.l.b16 %v4062
          %v4839 = vunpack.c.l.b16 %v4063
          %v4840 = vunpack.c.h.b16 %v4063
          %v4841 = vunpack.c.l.b16 %v4064
          %v4842 = vunpack.c.h.b16 %v4064
          %v4843 = vunpack.c.l.b16 %v4065
          %v4844 = vunpack.c.l.b16 %v4066
          %v4845 = vunpack.c.h.b16 %v4066
          %v4846 = vunpack.c.l.b16 %v4067
          %v4847 = vunpack.c.h.b16 %v4067
          %v4848 = vunpack.c.l.b16 %v4068
          %v4849 = vunpack.c.l.b16 %v4069
          %v4850 = vunpack.c.h.b16 %v4069
          %v4851 = vunpack.c.l.b16 %v4070
          %v4852 = vunpack.c.h.b16 %v4070
          %v4853 = vunpack.c.l.b16 %v4071
          %v4854 = vunpack.c.l.b16 %v4072
          %v4855 = vunpack.c.h.b16 %v4072
          %v4856 = vunpack.c.l.b16 %v4073
          %v4857 = vunpack.c.h.b16 %v4073
          %v4858 = vunpack.c.l.b16 %v4074
          %v4859 = vunpack.c.l.b16 %v4075
          %v4860 = vunpack.c.h.b16 %v4075
          %v4861 = vunpack.c.l.b16 %v4076
          %v4862 = vunpack.c.h.b16 %v4076
          %v4863 = vunpack.c.l.b16 %v4077
          %v4864 = vunpack.c.l.b16 %v4078
          %v4865 = vunpack.c.h.b16 %v4078
          %v4866 = vunpack.c.l.b16 %v4079
          %v4867 = vunpack.c.h.b16 %v4079
          %v4868 = vunpack.c.l.b16 %v4080
          %v4869 = vunpack.c.l.b16 %v4081
          %v4870 = vunpack.c.h.b16 %v4081
          %v4871 = vunpack.c.l.b16 %v4082
          %v4872 = vunpack.c.h.b16 %v4082
          %v4873 = vunpack.c.l.b16 %v4083
          %v4874 = vunpack.c.l.b16 %v4084
          %v4875 = vunpack.c.h.b16 %v4084
          %v4876 = vunpack.c.l.b16 %v4085
          %v4877 = vunpack.c.h.b16 %v4085
          %v4878 = vunpack.c.l.b16 %v4086
          %v4879 = vunpack.c.l.b16 %v4087
          %v4880 = vunpack.c.h.b16 %v4087
          %v4881 = vunpack.c.l.b16 %v4088
          %v4882 = vunpack.c.h.b16 %v4088
          %v4883 = vunpack.c.l.b16 %v4089
          %v4884 = vunpack.c.l.b16 %v4090
          %v4885 = vunpack.c.h.b16 %v4090
          %v4886 = vunpack.c.l.b16 %v4091
          %v4887 = vunpack.c.h.b16 %v4091
          %v4888 = vunpack.c.l.b16 %v4092
          %v4889 = vunpack.c.l.b16 %v4093
          %v4890 = vunpack.c.h.b16 %v4093
          %v4891 = vunpack.c.l.b16 %v4094
          %v4892 = vunpack.c.h.b16 %v4094
          %v4893 = vunpack.c.l.b16 %v4095
          %v4894 = vunpack.c.l.b16 %v4096
          %v4895 = vunpack.c.h.b16 %v4096
          %v4896 = vunpack.c.l.b16 %v4097
          %v4897 = vunpack.c.h.b16 %v4097
          %v4898 = vunpack.c.l.b16 %v4098
          %v4899 = vunpack.c.l.b16 %v4099
          %v4900 = vunpack.c.h.b16 %v4099
          %v4901 = vunpack.c.l.b16 %v4100
          %v4902 = vunpack.c.h.b16 %v4100
          %v4903 = vunpack.c.l.b16 %v4101
          %v4904 = vunpack.c.l.b16 %v4102
          %v4905 = vunpack.c.h.b16 %v4102
          %v4906 = vunpack.c.l.b16 %v4103
          %v4907 = vunpack.c.h.b16 %v4103
          %v4908 = vunpack.c.l.b16 %v4104
          %v4909 = vunpack.c.l.b16 %v4105
          %v4910 = vunpack.c.h.b16 %v4105
          %v4911 = vunpack.c.l.b16 %v4106
          %v4912 = vunpack.c.h.b16 %v4106
          %v4913 = vunpack.c.l.b16 %v4107
          %v4914 = vunpack.c.l.b16 %v4108
          %v4915 = vunpack.c.h.b16 %v4108
          %v4916 = vunpack.c.l.b16 %v4109
          %v4917 = vunpack.c.h.b16 %v4109
          %v4918 = vunpack.c.l.b16 %v4110
          %v4919 = vunpack.c.l.b16 %v4111
          %v4920 = vunpack.c.h.b16 %v4111
          %v4921 = vunpack.c.l.b16 %v4112
          %v4922 = vunpack.c.h.b16 %v4112
          %v4923 = vunpack.c.l.b16 %v4113
          %v4924 = vunpack.c.l.b16 %v4114
          %v4925 = vunpack.c.h.b16 %v4114
          %v4926 = vunpack.c.l.b16 %v4115
          %v4927 = vunpack.c.h.b16 %v4115
          %v4928 = vunpack.c.l.b16 %v4116
          %v4929 = vpack.c.b16 %v4434, %v4429
          %v4930 = vpack.c.b16 %v4435, %v4430
          %v4931 = vpack.c.b16 %v4436, %v4431
          %v4932 = vpack.c.b16 %v4437, %v4432
          %v4933 = vpack.c.b16 %v4438, %v4433
          %v4934 = vpack.c.b16 %v4444, %v4439
          %v4935 = vpack.c.b16 %v4445, %v4440
          %v4936 = vpack.c.b16 %v4446, %v4441
          %v4937 = vpack.c.b16 %v4447, %v4442
          %v4938 = vpack.c.b16 %v4448, %v4443
          %v4939 = vpack.c.b16 %v4454, %v4449
          %v4940 = vpack.c.b16 %v4455, %v4450
          %v4941 = vpack.c.b16 %v4456, %v4451
          %v4942 = vpack.c.b16 %v4457, %v4452
          %v4943 = vpack.c.b16 %v4458, %v4453
          %v4944 = vpack.c.b16 %v4464, %v4459
          %v4945 = vpack.c.b16 %v4465, %v4460
          %v4946 = vpack.c.b16 %v4466, %v4461
          %v4947 = vpack.c.b16 %v4467, %v4462
          %v4948 = vpack.c.b16 %v4468, %v4463
          %v4949 = vpack.c.b16 %v4474, %v4469
          %v4950 = vpack.c.b16 %v4475, %v4470
          %v4951 = vpack.c.b16 %v4476, %v4471
          %v4952 = vpack.c.b16 %v4477, %v4472
          %v4953 = vpack.c.b16 %v4478, %v4473
          %v4954 = vpack.c.b16 %v4484, %v4479
          %v4955 = vpack.c.b16 %v4485, %v4480
          %v4956 = vpack.c.b16 %v4486, %v4481
          %v4957 = vpack.c.b16 %v4487, %v4482
          %v4958 = vpack.c.b16 %v4488, %v4483
          %v4959 = vpack.c.b16 %v4494, %v4489
          %v4960 = vpack.c.b16 %v4495, %v4490
          %v4961 = vpack.c.b16 %v4496, %v4491
          %v4962 = vpack.c.b16 %v4497, %v4492
          %v4963 = vpack.c.b16 %v4498, %v4493
          %v4964 = vpack.c.b16 %v4504, %v4499
          %v4965 = vpack.c.b16 %v4505, %v4500
          %v4966 = vpack.c.b16 %v4506, %v4501
          %v4967 = vpack.c.b16 %v4507, %v4502
          %v4968 = vpack.c.b16 %v4508, %v4503
          %v4969 = vpack.c.b16 %v4514, %v4509
          %v4970 = vpack.c.b16 %v4515, %v4510
          %v4971 = vpack.c.b16 %v4516, %v4511
          %v4972 = vpack.c.b16 %v4517, %v4512
          %v4973 = vpack.c.b16 %v4518, %v4513
          %v4974 = vpack.c.b16 %v4524, %v4519
          %v4975 = vpack.c.b16 %v4525, %v4520
          %v4976 = vpack.c.b16 %v4526, %v4521
          %v4977 = vpack.c.b16 %v4527, %v4522
          %v4978 = vpack.c.b16 %v4528, %v4523
          %v4979 = vpack.c.b16 %v4534, %v4529
          %v4980 = vpack.c.b16 %v4535, %v4530
          %v4981 = vpack.c.b16 %v4536, %v4531
          %v4982 = vpack.c.b16 %v4537, %v4532
          %v4983 = vpack.c.b16 %v4538, %v4533
          %v4984 = vpack.c.b16 %v4544, %v4539
          %v4985 = vpack.c.b16 %v4545, %v4540
          %v4986 = vpack.c.b16 %v4546, %v4541
          %v4987 = vpack.c.b16 %v4547, %v4542
          %v4988 = vpack.c.b16 %v4548, %v4543
          %v4989 = vpack.c.b16 %v4554, %v4549
          %v4990 = vpack.c.b16 %v4555, %v4550
          %v4991 = vpack.c.b16 %v4556, %v4551
          %v4992 = vpack.c.b16 %v4557, %v4552
          %v4993 = vpack.c.b16 %v4558, %v4553
          %v4994 = vpack.c.b16 %v4564, %v4559
          %v4995 = vpack.c.b16 %v4565, %v4560
          %v4996 = vpack.c.b16 %v4566, %v4561
          %v4997 = vpack.c.b16 %v4567, %v4562
          %v4998 = vpack.c.b16 %v4568, %v4563
          %v4999 = vpack.c.b16 %v4574, %v4569
          %v5000 = vpack.c.b16 %v4575, %v4570
          %v5001 = vpack.c.b16 %v4576, %v4571
          %v5002 = vpack.c.b16 %v4577, %v4572
          %v5003 = vpack.c.b16 %v4578, %v4573
          %v5004 = vpack.c.b16 %v4584, %v4579
          %v5005 = vpack.c.b16 %v4585, %v4580
          %v5006 = vpack.c.b16 %v4586, %v4581
          %v5007 = vpack.c.b16 %v4587, %v4582
          %v5008 = vpack.c.b16 %v4588, %v4583
          %v5009 = vpack.c.b16 %v4594, %v4589
          %v5010 = vpack.c.b16 %v4595, %v4590
          %v5011 = vpack.c.b16 %v4596, %v4591
          %v5012 = vpack.c.b16 %v4597, %v4592
          %v5013 = vpack.c.b16 %v4598, %v4593
          %v5014 = vpack.c.b16 %v4604, %v4599
          %v5015 = vpack.c.b16 %v4605, %v4600
          %v5016 = vpack.c.b16 %v4606, %v4601
          %v5017 = vpack.c.b16 %v4607, %v4602
          %v5018 = vpack.c.b16 %v4608, %v4603
          %v5019 = vpack.c.b16 %v4614, %v4609
          %v5020 = vpack.c.b16 %v4615, %v4610
          %v5021 = vpack.c.b16 %v4616, %v4611
          %v5022 = vpack.c.b16 %v4617, %v4612
          %v5023 = vpack.c.b16 %v4618, %v4613
          %v5024 = vpack.c.b16 %v4624, %v4619
          %v5025 = vpack.c.b16 %v4625, %v4620
          %v5026 = vpack.c.b16 %v4626, %v4621
          %v5027 = vpack.c.b16 %v4627, %v4622
          %v5028 = vpack.c.b16 %v4628, %v4623
          %v5029 = vpack.c.b16 %v4634, %v4629
          %v5030 = vpack.c.b16 %v4635, %v4630
          %v5031 = vpack.c.b16 %v4636, %v4631
          %v5032 = vpack.c.b16 %v4637, %v4632
          %v5033 = vpack.c.b16 %v4638, %v4633
          %v5034 = vpack.c.b16 %v4644, %v4639
          %v5035 = vpack.c.b16 %v4645, %v4640
          %v5036 = vpack.c.b16 %v4646, %v4641
          %v5037 = vpack.c.b16 %v4647, %v4642
          %v5038 = vpack.c.b16 %v4648, %v4643
          %v5039 = vpack.c.b16 %v4654, %v4649
          %v5040 = vpack.c.b16 %v4655, %v4650
          %v5041 = vpack.c.b16 %v4656, %v4651
          %v5042 = vpack.c.b16 %v4657, %v4652
          %v5043 = vpack.c.b16 %v4658, %v4653
          %v5044 = vpack.c.b16 %v4664, %v4659
          %v5045 = vpack.c.b16 %v4665, %v4660
          %v5046 = vpack.c.b16 %v4666, %v4661
          %v5047 = vpack.c.b16 %v4667, %v4662
          %v5048 = vpack.c.b16 %v4668, %v4663
          %v5049 = vpack.c.b16 %v4674, %v4669
          %v5050 = vpack.c.b16 %v4675, %v4670
          %v5051 = vpack.c.b16 %v4676, %v4671
          %v5052 = vpack.c.b16 %v4677, %v4672
          %v5053 = vpack.c.b16 %v4678, %v4673
          %v5054 = vpack.c.b16 %v4684, %v4679
          %v5055 = vpack.c.b16 %v4685, %v4680
          %v5056 = vpack.c.b16 %v4686, %v4681
          %v5057 = vpack.c.b16 %v4687, %v4682
          %v5058 = vpack.c.b16 %v4688, %v4683
          %v5059 = vpack.c.b16 %v4694, %v4689
          %v5060 = vpack.c.b16 %v4695, %v4690
          %v5061 = vpack.c.b16 %v4696, %v4691
          %v5062 = vpack.c.b16 %v4697, %v4692
          %v5063 = vpack.c.b16 %v4698, %v4693
          %v5064 = vpack.c.b16 %v4704, %v4699
          %v5065 = vpack.c.b16 %v4705, %v4700
          %v5066 = vpack.c.b16 %v4706, %v4701
          %v5067 = vpack.c.b16 %v4707, %v4702
          %v5068 = vpack.c.b16 %v4708, %v4703
          %v5069 = vpack.c.b16 %v4714, %v4709
          %v5070 = vpack.c.b16 %v4715, %v4710
          %v5071 = vpack.c.b16 %v4716, %v4711
          %v5072 = vpack.c.b16 %v4717, %v4712
          %v5073 = vpack.c.b16 %v4718, %v4713
          %v5074 = vpack.c.b16 %v4724, %v4719
          %v5075 = vpack.c.b16 %v4725, %v4720
          %v5076 = vpack.c.b16 %v4726, %v4721
          %v5077 = vpack.c.b16 %v4727, %v4722
          %v5078 = vpack.c.b16 %v4728, %v4723
          %v5079 = vpack.c.b16 %v4734, %v4729
          %v5080 = vpack.c.b16 %v4735, %v4730
          %v5081 = vpack.c.b16 %v4736, %v4731
          %v5082 = vpack.c.b16 %v4737, %v4732
          %v5083 = vpack.c.b16 %v4738, %v4733
          %v5084 = vpack.c.b16 %v4744, %v4739
          %v5085 = vpack.c.b16 %v4745, %v4740
          %v5086 = vpack.c.b16 %v4746, %v4741
          %v5087 = vpack.c.b16 %v4747, %v4742
          %v5088 = vpack.c.b16 %v4748, %v4743
          %v5089 = vpack.c.b16 %v4754, %v4749
          %v5090 = vpack.c.b16 %v4755, %v4750
          %v5091 = vpack.c.b16 %v4756, %v4751
          %v5092 = vpack.c.b16 %v4757, %v4752
          %v5093 = vpack.c.b16 %v4758, %v4753
          %v5094 = vpack.c.b16 %v4764, %v4759
          %v5095 = vpack.c.b16 %v4765, %v4760
          %v5096 = vpack.c.b16 %v4766, %v4761
          %v5097 = vpack.c.b16 %v4767, %v4762
          %v5098 = vpack.c.b16 %v4768, %v4763
          %v5099 = vpack.c.b16 %v4774, %v4769
          %v5100 = vpack.c.b16 %v4775, %v4770
          %v5101 = vpack.c.b16 %v4776, %v4771
          %v5102 = vpack.c.b16 %v4777, %v4772
          %v5103 = vpack.c.b16 %v4778, %v4773
          %v5104 = vpack.c.b16 %v4784, %v4779
          %v5105 = vpack.c.b16 %v4785, %v4780
          %v5106 = vpack.c.b16 %v4786, %v4781
          %v5107 = vpack.c.b16 %v4787, %v4782
          %v5108 = vpack.c.b16 %v4788, %v4783
          %v5109 = vpack.c.b16 %v4794, %v4789
          %v5110 = vpack.c.b16 %v4795, %v4790
          %v5111 = vpack.c.b16 %v4796, %v4791
          %v5112 = vpack.c.b16 %v4797, %v4792
          %v5113 = vpack.c.b16 %v4798, %v4793
          %v5114 = vpack.c.b16 %v4804, %v4799
          %v5115 = vpack.c.b16 %v4805, %v4800
          %v5116 = vpack.c.b16 %v4806, %v4801
          %v5117 = vpack.c.b16 %v4807, %v4802
          %v5118 = vpack.c.b16 %v4808, %v4803
          %v5119 = vpack.c.b16 %v4814, %v4809
          %v5120 = vpack.c.b16 %v4815, %v4810
          %v5121 = vpack.c.b16 %v4816, %v4811
          %v5122 = vpack.c.b16 %v4817, %v4812
          %v5123 = vpack.c.b16 %v4818, %v4813
          %v5124 = vpack.c.b16 %v4824, %v4819
          %v5125 = vpack.c.b16 %v4825, %v4820
          %v5126 = vpack.c.b16 %v4826, %v4821
          %v5127 = vpack.c.b16 %v4827, %v4822
          %v5128 = vpack.c.b16 %v4828, %v4823
          %v5129 = vpack.c.b16 %v4834, %v4829
          %v5130 = vpack.c.b16 %v4835, %v4830
          %v5131 = vpack.c.b16 %v4836, %v4831
          %v5132 = vpack.c.b16 %v4837, %v4832
          %v5133 = vpack.c.b16 %v4838, %v4833
          %v5134 = vpack.c.b16 %v4844, %v4839
          %v5135 = vpack.c.b16 %v4845, %v4840
          %v5136 = vpack.c.b16 %v4846, %v4841
          %v5137 = vpack.c.b16 %v4847, %v4842
          %v5138 = vpack.c.b16 %v4848, %v4843
          %v5139 = vpack.c.b16 %v4854, %v4849
          %v5140 = vpack.c.b16 %v4855, %v4850
          %v5141 = vpack.c.b16 %v4856, %v4851
          %v5142 = vpack.c.b16 %v4857, %v4852
          %v5143 = vpack.c.b16 %v4858, %v4853
          %v5144 = vpack.c.b16 %v4864, %v4859
          %v5145 = vpack.c.b16 %v4865, %v4860
          %v5146 = vpack.c.b16 %v4866, %v4861
          %v5147 = vpack.c.b16 %v4867, %v4862
          %v5148 = vpack.c.b16 %v4868, %v4863
          %v5149 = vpack.c.b16 %v4874, %v4869
          %v5150 = vpack.c.b16 %v4875, %v4870
          %v5151 = vpack.c.b16 %v4876, %v4871
          %v5152 = vpack.c.b16 %v4877, %v4872
          %v5153 = vpack.c.b16 %v4878, %v4873
          %v5154 = vpack.c.b16 %v4884, %v4879
          %v5155 = vpack.c.b16 %v4885, %v4880
          %v5156 = vpack.c.b16 %v4886, %v4881
          %v5157 = vpack.c.b16 %v4887, %v4882
          %v5158 = vpack.c.b16 %v4888, %v4883
          %v5159 = vpack.c.b16 %v4894, %v4889
          %v5160 = vpack.c.b16 %v4895, %v4890
          %v5161 = vpack.c.b16 %v4896, %v4891
          %v5162 = vpack.c.b16 %v4897, %v4892
          %v5163 = vpack.c.b16 %v4898, %v4893
          %v5164 = vpack.c.b16 %v4904, %v4899
          %v5165 = vpack.c.b16 %v4905, %v4900
          %v5166 = vpack.c.b16 %v4906, %v4901
          %v5167 = vpack.c.b16 %v4907, %v4902
          %v5168 = vpack.c.b16 %v4908, %v4903
          %v5169 = vpack.c.b16 %v4914, %v4909
          %v5170 = vpack.c.b16 %v4915, %v4910
          %v5171 = vpack.c.b16 %v4916, %v4911
          %v5172 = vpack.c.b16 %v4917, %v4912
          %v5173 = vpack.c.b16 %v4918, %v4913
          %v5174 = vpack.c.b16 %v4924, %v4919
          %v5175 = vpack.c.b16 %v4925, %v4920
          %v5176 = vpack.c.b16 %v4926, %v4921
          %v5177 = vpack.c.b16 %v4927, %v4922
          %v5178 = vpack.c.b16 %v4928, %v4923
          %vm5429 = vcmask 261120
          %v5431 = vsel %vm5429, %v3816, 0
          %5433 = vmatpush.bf16.msra.mxu0 %v4964
          %5434 = vmatpush.bf16.msra.mxu0 %v4959
          %5435 = vmatpush.bf16.msra.mxu0 %v4954
          %5436 = vmatpush.bf16.msra.mxu0 %v4949
          %5437 = vmatpush.bf16.msra.mxu0 %v4944
          %5438 = vmatpush.bf16.msra.mxu0 %v4939
          %5439 = vmatpush.bf16.msra.mxu0 %v4934
          %5440 = vmatpush.bf16.msra.mxu0 %v4929
          %5441 = vmatmul.bf16.gmra.mxu0 %v3810
          %v5442 = vpop.f32.mrf.mxu0
          %v5443 = vadd.f32 %v4119, %v5442
          %v5444 = vpop.f32.mrf.mxu0
          %5445 = vdwg.mxu0
          %5446 = vmatpush.bf16.msra.mxu0 %v5004
          %5447 = vmatpush.bf16.msra.mxu0 %v4999
          %5448 = vmatpush.bf16.msra.mxu0 %v4994
          %5449 = vmatpush.bf16.msra.mxu0 %v4989
          %5450 = vmatpush.bf16.msra.mxu0 %v4984
          %5451 = vmatpush.bf16.msra.mxu0 %v4979
          %5452 = vmatpush.bf16.msra.mxu0 %v4974
          %5453 = vmatpush.bf16.msra.mxu0 %v4969
          %5454 = vmatmul.bf16.gmra.mxu0 %v3811
          %v5455 = vpop.f32.mrf.mxu0
          %v5456 = vadd.f32 %v5443, %v5455
          %v5457 = vpop.f32.mrf.mxu0
          %5458 = vdwg.mxu0
          %5459 = vmatpush.bf16.msra.mxu0 %v5044
          %5460 = vmatpush.bf16.msra.mxu0 %v5039
          %5461 = vmatpush.bf16.msra.mxu0 %v5034
          %5462 = vmatpush.bf16.msra.mxu0 %v5029
          %5463 = vmatpush.bf16.msra.mxu0 %v5024
          %5464 = vmatpush.bf16.msra.mxu0 %v5019
          %5465 = vmatpush.bf16.msra.mxu0 %v5014
          %5466 = vmatpush.bf16.msra.mxu0 %v5009
          %5467 = vmatmul.bf16.gmra.mxu0 %v3812
          %v5468 = vpop.f32.mrf.mxu0
          %v5469 = vadd.f32 %v5456, %v5468
          %v5470 = vpop.f32.mrf.mxu0
          %5471 = vdwg.mxu0
          %5472 = vmatpush.bf16.msra.mxu0 %v5084
          %5473 = vmatpush.bf16.msra.mxu0 %v5079
          %5474 = vmatpush.bf16.msra.mxu0 %v5074
          %5475 = vmatpush.bf16.msra.mxu0 %v5069
          %5476 = vmatpush.bf16.msra.mxu0 %v5064
          %5477 = vmatpush.bf16.msra.mxu0 %v5059
          %5478 = vmatpush.bf16.msra.mxu0 %v5054
          %5479 = vmatpush.bf16.msra.mxu0 %v5049
          %5480 = vmatmul.bf16.gmra.mxu0 %v3813
          %v5481 = vpop.f32.mrf.mxu0
          %v5482 = vadd.f32 %v5469, %v5481
          %v5483 = vpop.f32.mrf.mxu0
          %5484 = vdwg.mxu0
          %5485 = vmatpush.bf16.msra.mxu0 %v5124
          %5486 = vmatpush.bf16.msra.mxu0 %v5119
          %5487 = vmatpush.bf16.msra.mxu0 %v5114
          %5488 = vmatpush.bf16.msra.mxu0 %v5109
          %5489 = vmatpush.bf16.msra.mxu0 %v5104
          %5490 = vmatpush.bf16.msra.mxu0 %v5099
          %5491 = vmatpush.bf16.msra.mxu0 %v5094
          %5492 = vmatpush.bf16.msra.mxu0 %v5089
          %5493 = vmatmul.bf16.gmra.mxu0 %v3814
          %v5494 = vpop.f32.mrf.mxu0
          %v5495 = vadd.f32 %v5482, %v5494
          %v5496 = vpop.f32.mrf.mxu0
          %5497 = vdwg.mxu0
          %5498 = vmatpush.bf16.msra.mxu0 %v5164
          %5499 = vmatpush.bf16.msra.mxu0 %v5159
          %5500 = vmatpush.bf16.msra.mxu0 %v5154
          %5501 = vmatpush.bf16.msra.mxu0 %v5149
          %5502 = vmatpush.bf16.msra.mxu0 %v5144
          %5503 = vmatpush.bf16.msra.mxu0 %v5139
          %5504 = vmatpush.bf16.msra.mxu0 %v5134
          %5505 = vmatpush.bf16.msra.mxu0 %v5129
          %5506 = vmatmul.bf16.gmra.mxu0 %v3815
          %v5507 = vpop.f32.mrf.mxu0
          %v5508 = vadd.f32 %v5495, %v5507
          %v5509 = vpop.f32.mrf.mxu0
          %5510 = vdwg.mxu0
          %5511 = vmatpush.bf16.msra.mxu0 0
          %5512 = vmatpush.bf16.msra.mxu0 0
          %5513 = vmatpush.bf16.msra.mxu0 0
          %5514 = vmatpush.bf16.msra.mxu0 0
          %5515 = vmatpush.bf16.msra.mxu0 0
          %5516 = vmatpush.bf16.msra.mxu0 0
          %5517 = vmatpush.bf16.msra.mxu0 %v5174
          %5518 = vmatpush.bf16.msra.mxu0 %v5169
          %5519 = vmatmul.bf16.gmra.mxu0 %v5431
          %v5520 = vpop.f32.mrf.mxu0
          %v5521 = vadd.f32 %v5508, %v5520
          %v5522 = vpop.f32.mrf.mxu0
          %5523 = vdwg.mxu0
          %5524 = vmatpush.bf16.msra.mxu0 %v4965
          %5525 = vmatpush.bf16.msra.mxu0 %v4960
          %5526 = vmatpush.bf16.msra.mxu0 %v4955
          %5527 = vmatpush.bf16.msra.mxu0 %v4950
          %5528 = vmatpush.bf16.msra.mxu0 %v4945
          %5529 = vmatpush.bf16.msra.mxu0 %v4940
          %5530 = vmatpush.bf16.msra.mxu0 %v4935
          %5531 = vmatpush.bf16.msra.mxu0 %v4930
          %5532 = vmatmul.bf16.gmra.mxu0 %v3810
          %v5533 = vpop.f32.mrf.mxu0
          %v5534 = vadd.f32 %v4120, %v5533
          %v5535 = vpop.f32.mrf.mxu0
          %5536 = vdwg.mxu0
          %5537 = vmatpush.bf16.msra.mxu0 %v5005
          %5538 = vmatpush.bf16.msra.mxu0 %v5000
          %5539 = vmatpush.bf16.msra.mxu0 %v4995
          %5540 = vmatpush.bf16.msra.mxu0 %v4990
          %5541 = vmatpush.bf16.msra.mxu0 %v4985
          %5542 = vmatpush.bf16.msra.mxu0 %v4980
          %5543 = vmatpush.bf16.msra.mxu0 %v4975
          %5544 = vmatpush.bf16.msra.mxu0 %v4970
          %5545 = vmatmul.bf16.gmra.mxu0 %v3811
          %v5546 = vpop.f32.mrf.mxu0
          %v5547 = vadd.f32 %v5534, %v5546
          %v5548 = vpop.f32.mrf.mxu0
          %5549 = vdwg.mxu0
          %5550 = vmatpush.bf16.msra.mxu0 %v5045
          %5551 = vmatpush.bf16.msra.mxu0 %v5040
          %5552 = vmatpush.bf16.msra.mxu0 %v5035
          %5553 = vmatpush.bf16.msra.mxu0 %v5030
          %5554 = vmatpush.bf16.msra.mxu0 %v5025
          %5555 = vmatpush.bf16.msra.mxu0 %v5020
          %5556 = vmatpush.bf16.msra.mxu0 %v5015
          %5557 = vmatpush.bf16.msra.mxu0 %v5010
          %5558 = vmatmul.bf16.gmra.mxu0 %v3812
          %v5559 = vpop.f32.mrf.mxu0
          %v5560 = vadd.f32 %v5547, %v5559
          %v5561 = vpop.f32.mrf.mxu0
          %5562 = vdwg.mxu0
          %5563 = vmatpush.bf16.msra.mxu0 %v5085
          %5564 = vmatpush.bf16.msra.mxu0 %v5080
          %5565 = vmatpush.bf16.msra.mxu0 %v5075
          %5566 = vmatpush.bf16.msra.mxu0 %v5070
          %5567 = vmatpush.bf16.msra.mxu0 %v5065
          %5568 = vmatpush.bf16.msra.mxu0 %v5060
          %5569 = vmatpush.bf16.msra.mxu0 %v5055
          %5570 = vmatpush.bf16.msra.mxu0 %v5050
          %5571 = vmatmul.bf16.gmra.mxu0 %v3813
          %v5572 = vpop.f32.mrf.mxu0
          %v5573 = vadd.f32 %v5560, %v5572
          %v5574 = vpop.f32.mrf.mxu0
          %5575 = vdwg.mxu0
          %5576 = vmatpush.bf16.msra.mxu0 %v5125
          %5577 = vmatpush.bf16.msra.mxu0 %v5120
          %5578 = vmatpush.bf16.msra.mxu0 %v5115
          %5579 = vmatpush.bf16.msra.mxu0 %v5110
          %5580 = vmatpush.bf16.msra.mxu0 %v5105
          %5581 = vmatpush.bf16.msra.mxu0 %v5100
          %5582 = vmatpush.bf16.msra.mxu0 %v5095
          %5583 = vmatpush.bf16.msra.mxu0 %v5090
          %5584 = vmatmul.bf16.gmra.mxu0 %v3814
          %v5585 = vpop.f32.mrf.mxu0
          %v5586 = vadd.f32 %v5573, %v5585
          %v5587 = vpop.f32.mrf.mxu0
          %5588 = vdwg.mxu0
          %5589 = vmatpush.bf16.msra.mxu0 %v5165
          %5590 = vmatpush.bf16.msra.mxu0 %v5160
          %5591 = vmatpush.bf16.msra.mxu0 %v5155
          %5592 = vmatpush.bf16.msra.mxu0 %v5150
          %5593 = vmatpush.bf16.msra.mxu0 %v5145
          %5594 = vmatpush.bf16.msra.mxu0 %v5140
          %5595 = vmatpush.bf16.msra.mxu0 %v5135
          %5596 = vmatpush.bf16.msra.mxu0 %v5130
          %5597 = vmatmul.bf16.gmra.mxu0 %v3815
          %v5598 = vpop.f32.mrf.mxu0
          %v5599 = vadd.f32 %v5586, %v5598
          %v5600 = vpop.f32.mrf.mxu0
          %5601 = vdwg.mxu0
          %5602 = vmatpush.bf16.msra.mxu0 0
          %5603 = vmatpush.bf16.msra.mxu0 0
          %5604 = vmatpush.bf16.msra.mxu0 0
          %5605 = vmatpush.bf16.msra.mxu0 0
          %5606 = vmatpush.bf16.msra.mxu0 0
          %5607 = vmatpush.bf16.msra.mxu0 0
          %5608 = vmatpush.bf16.msra.mxu0 %v5175
          %5609 = vmatpush.bf16.msra.mxu0 %v5170
          %5610 = vmatmul.bf16.gmra.mxu0 %v5431
          %v5611 = vpop.f32.mrf.mxu0
          %v5612 = vadd.f32 %v5599, %v5611
          %v5613 = vpop.f32.mrf.mxu0
          %5614 = vdwg.mxu0
          %5615 = vmatpush.bf16.msra.mxu0 %v4966
          %5616 = vmatpush.bf16.msra.mxu0 %v4961
          %5617 = vmatpush.bf16.msra.mxu0 %v4956
          %5618 = vmatpush.bf16.msra.mxu0 %v4951
          %5619 = vmatpush.bf16.msra.mxu0 %v4946
          %5620 = vmatpush.bf16.msra.mxu0 %v4941
          %5621 = vmatpush.bf16.msra.mxu0 %v4936
          %5622 = vmatpush.bf16.msra.mxu0 %v4931
          %5623 = vmatmul.bf16.gmra.mxu0 %v3810
          %v5624 = vpop.f32.mrf.mxu0
          %v5625 = vadd.f32 %v4121, %v5624
          %v5626 = vpop.f32.mrf.mxu0
          %5627 = vdwg.mxu0
          %5628 = vmatpush.bf16.msra.mxu0 %v5006
          %5629 = vmatpush.bf16.msra.mxu0 %v5001
          %5630 = vmatpush.bf16.msra.mxu0 %v4996
          %5631 = vmatpush.bf16.msra.mxu0 %v4991
          %5632 = vmatpush.bf16.msra.mxu0 %v4986
          %5633 = vmatpush.bf16.msra.mxu0 %v4981
          %5634 = vmatpush.bf16.msra.mxu0 %v4976
          %5635 = vmatpush.bf16.msra.mxu0 %v4971
          %5636 = vmatmul.bf16.gmra.mxu0 %v3811
          %v5637 = vpop.f32.mrf.mxu0
          %v5638 = vadd.f32 %v5625, %v5637
          %v5639 = vpop.f32.mrf.mxu0
          %5640 = vdwg.mxu0
          %5641 = vmatpush.bf16.msra.mxu0 %v5046
          %5642 = vmatpush.bf16.msra.mxu0 %v5041
          %5643 = vmatpush.bf16.msra.mxu0 %v5036
          %5644 = vmatpush.bf16.msra.mxu0 %v5031
          %5645 = vmatpush.bf16.msra.mxu0 %v5026
          %5646 = vmatpush.bf16.msra.mxu0 %v5021
          %5647 = vmatpush.bf16.msra.mxu0 %v5016
          %5648 = vmatpush.bf16.msra.mxu0 %v5011
          %5649 = vmatmul.bf16.gmra.mxu0 %v3812
          %v5650 = vpop.f32.mrf.mxu0
          %v5651 = vadd.f32 %v5638, %v5650
          %v5652 = vpop.f32.mrf.mxu0
          %5653 = vdwg.mxu0
          %5654 = vmatpush.bf16.msra.mxu0 %v5086
          %5655 = vmatpush.bf16.msra.mxu0 %v5081
          %5656 = vmatpush.bf16.msra.mxu0 %v5076
          %5657 = vmatpush.bf16.msra.mxu0 %v5071
          %5658 = vmatpush.bf16.msra.mxu0 %v5066
          %5659 = vmatpush.bf16.msra.mxu0 %v5061
          %5660 = vmatpush.bf16.msra.mxu0 %v5056
          %5661 = vmatpush.bf16.msra.mxu0 %v5051
          %5662 = vmatmul.bf16.gmra.mxu0 %v3813
          %v5663 = vpop.f32.mrf.mxu0
          %v5664 = vadd.f32 %v5651, %v5663
          %v5665 = vpop.f32.mrf.mxu0
          %5666 = vdwg.mxu0
          %5667 = vmatpush.bf16.msra.mxu0 %v5126
          %5668 = vmatpush.bf16.msra.mxu0 %v5121
          %5669 = vmatpush.bf16.msra.mxu0 %v5116
          %5670 = vmatpush.bf16.msra.mxu0 %v5111
          %5671 = vmatpush.bf16.msra.mxu0 %v5106
          %5672 = vmatpush.bf16.msra.mxu0 %v5101
          %5673 = vmatpush.bf16.msra.mxu0 %v5096
          %5674 = vmatpush.bf16.msra.mxu0 %v5091
          %5675 = vmatmul.bf16.gmra.mxu0 %v3814
          %v5676 = vpop.f32.mrf.mxu0
          %v5677 = vadd.f32 %v5664, %v5676
          %v5678 = vpop.f32.mrf.mxu0
          %5679 = vdwg.mxu0
          %5680 = vmatpush.bf16.msra.mxu0 %v5166
          %5681 = vmatpush.bf16.msra.mxu0 %v5161
          %5682 = vmatpush.bf16.msra.mxu0 %v5156
          %5683 = vmatpush.bf16.msra.mxu0 %v5151
          %5684 = vmatpush.bf16.msra.mxu0 %v5146
          %5685 = vmatpush.bf16.msra.mxu0 %v5141
          %5686 = vmatpush.bf16.msra.mxu0 %v5136
          %5687 = vmatpush.bf16.msra.mxu0 %v5131
          %5688 = vmatmul.bf16.gmra.mxu0 %v3815
          %v5689 = vpop.f32.mrf.mxu0
          %v5690 = vadd.f32 %v5677, %v5689
          %v5691 = vpop.f32.mrf.mxu0
          %5692 = vdwg.mxu0
          %5693 = vmatpush.bf16.msra.mxu0 0
          %5694 = vmatpush.bf16.msra.mxu0 0
          %5695 = vmatpush.bf16.msra.mxu0 0
          %5696 = vmatpush.bf16.msra.mxu0 0
          %5697 = vmatpush.bf16.msra.mxu0 0
          %5698 = vmatpush.bf16.msra.mxu0 0
          %5699 = vmatpush.bf16.msra.mxu0 %v5176
          %5700 = vmatpush.bf16.msra.mxu0 %v5171
          %5701 = vmatmul.bf16.gmra.mxu0 %v5431
          %v5702 = vpop.f32.mrf.mxu0
          %v5703 = vadd.f32 %v5690, %v5702
          %v5704 = vpop.f32.mrf.mxu0
          %5705 = vdwg.mxu0
          %5706 = vmatpush.bf16.msra.mxu0 %v4967
          %5707 = vmatpush.bf16.msra.mxu0 %v4962
          %5708 = vmatpush.bf16.msra.mxu0 %v4957
          %5709 = vmatpush.bf16.msra.mxu0 %v4952
          %5710 = vmatpush.bf16.msra.mxu0 %v4947
          %5711 = vmatpush.bf16.msra.mxu0 %v4942
          %5712 = vmatpush.bf16.msra.mxu0 %v4937
          %5713 = vmatpush.bf16.msra.mxu0 %v4932
          %5714 = vmatmul.bf16.gmra.mxu0 %v3810
          %v5715 = vpop.f32.mrf.mxu0
          %v5716 = vadd.f32 %v4122, %v5715
          %v5717 = vpop.f32.mrf.mxu0
          %5718 = vdwg.mxu0
          %5719 = vmatpush.bf16.msra.mxu0 %v5007
          %5720 = vmatpush.bf16.msra.mxu0 %v5002
          %5721 = vmatpush.bf16.msra.mxu0 %v4997
          %5722 = vmatpush.bf16.msra.mxu0 %v4992
          %5723 = vmatpush.bf16.msra.mxu0 %v4987
          %5724 = vmatpush.bf16.msra.mxu0 %v4982
          %5725 = vmatpush.bf16.msra.mxu0 %v4977
          %5726 = vmatpush.bf16.msra.mxu0 %v4972
          %5727 = vmatmul.bf16.gmra.mxu0 %v3811
          %v5728 = vpop.f32.mrf.mxu0
          %v5729 = vadd.f32 %v5716, %v5728
          %v5730 = vpop.f32.mrf.mxu0
          %5731 = vdwg.mxu0
          %5732 = vmatpush.bf16.msra.mxu0 %v5047
          %5733 = vmatpush.bf16.msra.mxu0 %v5042
          %5734 = vmatpush.bf16.msra.mxu0 %v5037
          %5735 = vmatpush.bf16.msra.mxu0 %v5032
          %5736 = vmatpush.bf16.msra.mxu0 %v5027
          %5737 = vmatpush.bf16.msra.mxu0 %v5022
          %5738 = vmatpush.bf16.msra.mxu0 %v5017
          %5739 = vmatpush.bf16.msra.mxu0 %v5012
          %5740 = vmatmul.bf16.gmra.mxu0 %v3812
          %v5741 = vpop.f32.mrf.mxu0
          %v5742 = vadd.f32 %v5729, %v5741
          %v5743 = vpop.f32.mrf.mxu0
          %5744 = vdwg.mxu0
          %5745 = vmatpush.bf16.msra.mxu0 %v5087
          %5746 = vmatpush.bf16.msra.mxu0 %v5082
          %5747 = vmatpush.bf16.msra.mxu0 %v5077
          %5748 = vmatpush.bf16.msra.mxu0 %v5072
          %5749 = vmatpush.bf16.msra.mxu0 %v5067
          %5750 = vmatpush.bf16.msra.mxu0 %v5062
          %5751 = vmatpush.bf16.msra.mxu0 %v5057
          %5752 = vmatpush.bf16.msra.mxu0 %v5052
          %5753 = vmatmul.bf16.gmra.mxu0 %v3813
          %v5754 = vpop.f32.mrf.mxu0
          %v5755 = vadd.f32 %v5742, %v5754
          %v5756 = vpop.f32.mrf.mxu0
          %5757 = vdwg.mxu0
          %5758 = vmatpush.bf16.msra.mxu0 %v5127
          %5759 = vmatpush.bf16.msra.mxu0 %v5122
          %5760 = vmatpush.bf16.msra.mxu0 %v5117
          %5761 = vmatpush.bf16.msra.mxu0 %v5112
          %5762 = vmatpush.bf16.msra.mxu0 %v5107
          %5763 = vmatpush.bf16.msra.mxu0 %v5102
          %5764 = vmatpush.bf16.msra.mxu0 %v5097
          %5765 = vmatpush.bf16.msra.mxu0 %v5092
          %5766 = vmatmul.bf16.gmra.mxu0 %v3814
          %v5767 = vpop.f32.mrf.mxu0
          %v5768 = vadd.f32 %v5755, %v5767
          %v5769 = vpop.f32.mrf.mxu0
          %5770 = vdwg.mxu0
          %5771 = vmatpush.bf16.msra.mxu0 %v5167
          %5772 = vmatpush.bf16.msra.mxu0 %v5162
          %5773 = vmatpush.bf16.msra.mxu0 %v5157
          %5774 = vmatpush.bf16.msra.mxu0 %v5152
          %5775 = vmatpush.bf16.msra.mxu0 %v5147
          %5776 = vmatpush.bf16.msra.mxu0 %v5142
          %5777 = vmatpush.bf16.msra.mxu0 %v5137
          %5778 = vmatpush.bf16.msra.mxu0 %v5132
          %5779 = vmatmul.bf16.gmra.mxu0 %v3815
          %v5780 = vpop.f32.mrf.mxu0
          %v5781 = vadd.f32 %v5768, %v5780
          %v5782 = vpop.f32.mrf.mxu0
          %5783 = vdwg.mxu0
          %5784 = vmatpush.bf16.msra.mxu0 0
          %5785 = vmatpush.bf16.msra.mxu0 0
          %5786 = vmatpush.bf16.msra.mxu0 0
          %5787 = vmatpush.bf16.msra.mxu0 0
          %5788 = vmatpush.bf16.msra.mxu0 0
          %5789 = vmatpush.bf16.msra.mxu0 0
          %5790 = vmatpush.bf16.msra.mxu0 %v5177
          %5791 = vmatpush.bf16.msra.mxu0 %v5172
          %5792 = vmatmul.bf16.gmra.mxu0 %v5431
          %v5793 = vpop.f32.mrf.mxu0
          %v5794 = vadd.f32 %v5781, %v5793
          %v5795 = vpop.f32.mrf.mxu0
          %5796 = vdwg.mxu0
          %5797 = vmatpush.bf16.msra.mxu0 %v4968
          %5798 = vmatpush.bf16.msra.mxu0 %v4963
          %5799 = vmatpush.bf16.msra.mxu0 %v4958
          %5800 = vmatpush.bf16.msra.mxu0 %v4953
          %5801 = vmatpush.bf16.msra.mxu0 %v4948
          %5802 = vmatpush.bf16.msra.mxu0 %v4943
          %5803 = vmatpush.bf16.msra.mxu0 %v4938
          %5804 = vmatpush.bf16.msra.mxu0 %v4933
          %5805 = vmatmul.bf16.gmra.mxu0 %v3810
          %v5806 = vpop.f32.mrf.mxu0
          %v5807 = vadd.f32 %v4123, %v5806
          %v5808 = vpop.f32.mrf.mxu0
          %5809 = vdwg.mxu0
          %5810 = vmatpush.bf16.msra.mxu0 %v5008
          %5811 = vmatpush.bf16.msra.mxu0 %v5003
          %5812 = vmatpush.bf16.msra.mxu0 %v4998
          %5813 = vmatpush.bf16.msra.mxu0 %v4993
          %5814 = vmatpush.bf16.msra.mxu0 %v4988
          %5815 = vmatpush.bf16.msra.mxu0 %v4983
          %5816 = vmatpush.bf16.msra.mxu0 %v4978
          %5817 = vmatpush.bf16.msra.mxu0 %v4973
          %5818 = vmatmul.bf16.gmra.mxu0 %v3811
          %v5819 = vpop.f32.mrf.mxu0
          %v5820 = vadd.f32 %v5807, %v5819
          %v5821 = vpop.f32.mrf.mxu0
          %5822 = vdwg.mxu0
          %5823 = vmatpush.bf16.msra.mxu0 %v5048
          %5824 = vmatpush.bf16.msra.mxu0 %v5043
          %5825 = vmatpush.bf16.msra.mxu0 %v5038
          %5826 = vmatpush.bf16.msra.mxu0 %v5033
          %5827 = vmatpush.bf16.msra.mxu0 %v5028
          %5828 = vmatpush.bf16.msra.mxu0 %v5023
          %5829 = vmatpush.bf16.msra.mxu0 %v5018
          %5830 = vmatpush.bf16.msra.mxu0 %v5013
          %5831 = vmatmul.bf16.gmra.mxu0 %v3812
          %v5832 = vpop.f32.mrf.mxu0
          %v5833 = vadd.f32 %v5820, %v5832
          %v5834 = vpop.f32.mrf.mxu0
          %5835 = vdwg.mxu0
          %5836 = vmatpush.bf16.msra.mxu0 %v5088
          %5837 = vmatpush.bf16.msra.mxu0 %v5083
          %5838 = vmatpush.bf16.msra.mxu0 %v5078
          %5839 = vmatpush.bf16.msra.mxu0 %v5073
          %5840 = vmatpush.bf16.msra.mxu0 %v5068
          %5841 = vmatpush.bf16.msra.mxu0 %v5063
          %5842 = vmatpush.bf16.msra.mxu0 %v5058
          %5843 = vmatpush.bf16.msra.mxu0 %v5053
          %5844 = vmatmul.bf16.gmra.mxu0 %v3813
          %v5845 = vpop.f32.mrf.mxu0
          %v5846 = vadd.f32 %v5833, %v5845
          %v5847 = vpop.f32.mrf.mxu0
          %5848 = vdwg.mxu0
          %5849 = vmatpush.bf16.msra.mxu0 %v5128
          %5850 = vmatpush.bf16.msra.mxu0 %v5123
          %5851 = vmatpush.bf16.msra.mxu0 %v5118
          %5852 = vmatpush.bf16.msra.mxu0 %v5113
          %5853 = vmatpush.bf16.msra.mxu0 %v5108
          %5854 = vmatpush.bf16.msra.mxu0 %v5103
          %5855 = vmatpush.bf16.msra.mxu0 %v5098
          %5856 = vmatpush.bf16.msra.mxu0 %v5093
          %5857 = vmatmul.bf16.gmra.mxu0 %v3814
          %v5858 = vpop.f32.mrf.mxu0
          %v5859 = vadd.f32 %v5846, %v5858
          %v5860 = vpop.f32.mrf.mxu0
          %5861 = vdwg.mxu0
          %5862 = vmatpush.bf16.msra.mxu0 %v5168
          %5863 = vmatpush.bf16.msra.mxu0 %v5163
          %5864 = vmatpush.bf16.msra.mxu0 %v5158
          %5865 = vmatpush.bf16.msra.mxu0 %v5153
          %5866 = vmatpush.bf16.msra.mxu0 %v5148
          %5867 = vmatpush.bf16.msra.mxu0 %v5143
          %5868 = vmatpush.bf16.msra.mxu0 %v5138
          %5869 = vmatpush.bf16.msra.mxu0 %v5133
          %5870 = vmatmul.bf16.gmra.mxu0 %v3815
          %v5871 = vpop.f32.mrf.mxu0
          %v5872 = vadd.f32 %v5859, %v5871
          %v5873 = vpop.f32.mrf.mxu0
          %5874 = vdwg.mxu0
          %5875 = vmatpush.bf16.msra.mxu0 0
          %5876 = vmatpush.bf16.msra.mxu0 0
          %5877 = vmatpush.bf16.msra.mxu0 0
          %5878 = vmatpush.bf16.msra.mxu0 0
          %5879 = vmatpush.bf16.msra.mxu0 0
          %5880 = vmatpush.bf16.msra.mxu0 0
          %5881 = vmatpush.bf16.msra.mxu0 %v5178
          %5882 = vmatpush.bf16.msra.mxu0 %v5173
          %5883 = vmatmul.bf16.gmra.mxu0 %v5431
          %v5884 = vpop.f32.mrf.mxu0
          %v5885 = vadd.f32 %v5872, %v5884
          %v5886 = vpop.f32.mrf.mxu0
          %5887 = vdwg.mxu0
          %vm5888 = vcmp.gt.f32.partialorder %v5521, 0.0
          %vm5889 = vcmp.gt.f32.partialorder %v5612, 0.0
          %vm5890 = vcmp.gt.f32.partialorder %v5703, 0.0
          %vm5891 = vcmp.gt.f32.partialorder %v5794, 0.0
          %vm5892 = vcmp.gt.f32.partialorder %v5885, 0.0
          %v5893 = vmul.f32 %v5521, 0.01
          %v5894 = vmul.f32 %v5612, 0.01
          %v5895 = vmul.f32 %v5703, 0.01
          %v5896 = vmul.f32 %v5794, 0.01
          %v5897 = vmul.f32 %v5885, 0.01
          %v5898 = vsel %vm5888, %v5521, %v5893
          %v5899 = vsel %vm5889, %v5612, %v5894
          %v5900 = vsel %vm5890, %v5703, %v5895
          %v5901 = vsel %vm5891, %v5794, %v5896
          %v5902 = vsel %vm5892, %v5885, %v5897
          %v5903 = vpack.c.bf16 %v5899, %v5898
          %v5904 = vpack.c.bf16 %v5901, %v5900
          %v5905 = vpack.c.bf16 %v5902, %v5902
          %v5909 = vrot.slane %v5903, 3
          %v5910 = vrot.slane %v5904, 6
          %v5911 = vrot.slane %v5904, 1
          %v5912 = vrot.slane %v5905, 4
          %v5913 = vrot.slane %v5905, 7
          %vm5914 = vcmask 1040384
          %v5917 = vsel %vm5914, %v5903, %v5909
          %v5919 = vsel %vm3221, %v5917, %v5910
          %vm5920 = vcmask 1043459
          %v5923 = vsel %vm5920, %v5911, %v5912
          %vm5924 = vcmask 1044483
          %v5926 = vsel %vm5924, %v5923, %v5913
          %vm5927 = vcmask 1042432
          %v5928 = vsel %vm5927, %v5919, %v5926
          %vm5930 = vcmask 1041409
          %vm5931 = vmor %vm5930, %vm5914
          %vm5932 = vcmask 1042434
          %vm5933 = vmor %vm5932, %vm5931
          %vm5934 = vmor %vm5920, %vm5933
          %vm5935 = vcmask 520196
          %vm5936 = vmor %vm5935, %vm5934
          %5937 = vst.msk [vmem:[#allocation2] sm:$0x1f] %vm5936, %v5928
          %vm5938 = vcmask 9216
          %5939 = vst.msk [vmem:[#allocation3] sm:$0x3] %vm5938, 0.0
        $region100: #{rawhammer_forward.1} parent=63 // pred_fallthru
          _
        %v5940 = vld [vmem:[#allocation2] sm:$0x1f]
        %v5941 = vld [vmem:[%s479] sm:$0xff]
        %v5942 = vld [vmem:[%s479 + $0x8] sm:$0xff]
        %v5943 = vld [vmem:[%s479 + $0x10] sm:$0xff]
        %v5944 = vld [vmem:[%s479 + $0x18] sm:$0xff]
        %v5945 = vld [vmem:[%s479 + $0x20] sm:$0xff]
        %v5946 = vld [vmem:[%s479 + $0x28] sm:$0xff]
        %v5947 = vld [vmem:[%s479 + $0x30] sm:$0xff]
        %v5948 = vld [vmem:[%s479 + $0x38] sm:$0xff]
        %v5949 = vld [vmem:[%s479 + $0x40] sm:$0xff]
        %v5950 = vld [vmem:[%s479 + $0x48] sm:$0xff]
        %v5951 = vld [vmem:[%s479 + $0x50] sm:$0xff]
        %v5952 = vld [vmem:[%s479 + $0x58] sm:$0xff]
        %v5953 = vld [vmem:[%s479 + $0x60] sm:$0xff]
        %v5954 = vld [vmem:[%s479 + $0x68] sm:$0xff]
        %v5955 = vld [vmem:[%s479 + $0x70] sm:$0xff]
        %v5956 = vld [vmem:[%s479 + $0x78] sm:$0xff]
        %v5957 = vld [vmem:[%s479 + $0x80] sm:$0xff]
        %v5958 = vld [vmem:[%s479 + $0x88] sm:$0xff]
        %v5959 = vld [vmem:[%s479 + $0x90] sm:$0xff]
        %v5960 = vld [vmem:[%s479 + $0x98] sm:$0xff]
        %v5961 = vld [vmem:[%s479 + $0xa0] sm:$0xff]
        %v5962 = vld [vmem:[%s479 + $0xa8] sm:$0xff]
        %v5963 = vld [vmem:[%s479 + $0xb0] sm:$0xff]
        %v5964 = vld [vmem:[%s479 + $0xb8] sm:$0xff]
        %v5965 = vld [vmem:[%s479 + $0xc0] sm:$0xff]
        %v5966 = vld [vmem:[%s479 + $0xc8] sm:$0xff]
        %v5967 = vld [vmem:[%s479 + $0xd0] sm:$0xff]
        %v5968 = vld [vmem:[%s479 + $0xd8] sm:$0xff]
        %v5969 = vld [vmem:[%s479 + $0xe0] sm:$0xff]
        %v5970 = vld [vmem:[%s479 + $0xe8] sm:$0xff]
        %v5971 = vld [vmem:[%s479 + $0xf0] sm:$0xff]
        %v5972 = vld [vmem:[%s479 + $0xf8] sm:$0xff]
        %v5973 = vld [vmem:[%s479 + $0x100] sm:$0xff]
        %v5974 = vld [vmem:[%s479 + $0x108] sm:$0xff]
        %v5975 = vld [vmem:[%s479 + $0x110] sm:$0xff]
        %v5976 = vld [vmem:[%s479 + $0x118] sm:$0xff]
        %v5977 = vld [vmem:[%s479 + $0x120] sm:$0xff]
        %v5978 = vld [vmem:[%s479 + $0x128] sm:$0xff]
        %v5979 = vld [vmem:[%s479 + $0x130] sm:$0xff]
        %v5980 = vld [vmem:[%s479 + $0x138] sm:$0xff]
        %v5981 = vld [vmem:[%s479 + $0x140] sm:$0xff]
        %v5982 = vld [vmem:[%s479 + $0x148] sm:$0xff]
        %v5983 = vld [vmem:[%s479 + $0x150] sm:$0xff]
        %v5984 = vld [vmem:[%s479 + $0x158] sm:$0xff]
        %v5985 = vld [vmem:[%s479 + $0x160] sm:$0xff]
        %v5986 = vld [vmem:[%s479 + $0x168] sm:$0xff]
        %v5987 = vld [vmem:[%s479 + $0x170] sm:$0xff]
        %v5988 = vld [vmem:[%s479 + $0x178] sm:$0xff]
        %v5989 = vld [vmem:[%s479 + $0x180] sm:$0xff]
        %v5990 = vld [vmem:[%s479 + $0x188] sm:$0xff]
        %v5991 = vld [vmem:[%s479 + $0x190] sm:$0xff]
        %v5992 = vld [vmem:[%s479 + $0x198] sm:$0xff]
        %v5993 = vld [vmem:[%s479 + $0x1a0] sm:$0xff]
        %v5994 = vld [vmem:[%s479 + $0x1a8] sm:$0xff]
        %v5995 = vld [vmem:[%s479 + $0x1b0] sm:$0xff]
        %v5996 = vld [vmem:[%s479 + $0x1b8] sm:$0xff]
        %v5997 = vld [vmem:[%s479 + $0x1c0] sm:$0xff]
        %v5998 = vld [vmem:[%s479 + $0x1c8] sm:$0xff]
        %v5999 = vld [vmem:[%s479 + $0x1d0] sm:$0xff]
        %v6000 = vld [vmem:[%s479 + $0x1d8] sm:$0xff]
        %v6001 = vld [vmem:[%s479 + $0x1e0] sm:$0xff]
        %v6002 = vld [vmem:[%s479 + $0x1e8] sm:$0xff]
        %v6003 = vld [vmem:[%s479 + $0x1f0] sm:$0xff]
        %v6004 = vld [vmem:[%s479 + $0x1f8] sm:$0xff]
        %v6005 = vld [vmem:[%s479 + $0x200] sm:$0xff]
        %v6006 = vld [vmem:[%s479 + $0x208] sm:$0xff]
        %v6007 = vld [vmem:[%s479 + $0x210] sm:$0xff]
        %v6008 = vld [vmem:[%s479 + $0x218] sm:$0xff]
        %v6009 = vld [vmem:[%s479 + $0x220] sm:$0xff]
        %v6010 = vld [vmem:[%s479 + $0x228] sm:$0xff]
        %v6011 = vld [vmem:[%s479 + $0x230] sm:$0xff]
        %v6012 = vld [vmem:[%s479 + $0x238] sm:$0xff]
        %v6013 = vld [vmem:[%s479 + $0x240] sm:$0xff]
        %v6014 = vld [vmem:[%s479 + $0x248] sm:$0xff]
        %v6015 = vld [vmem:[%s479 + $0x250] sm:$0xff]
        %v6016 = vld [vmem:[%s479 + $0x258] sm:$0xff]
        %v6017 = vld [vmem:[%s479 + $0x260] sm:$0xff]
        %v6018 = vld [vmem:[%s479 + $0x268] sm:$0xff]
        %v6019 = vld [vmem:[%s479 + $0x270] sm:$0xff]
        %v6020 = vld [vmem:[%s479 + $0x278] sm:$0xff]
        %v6021 = vld [vmem:[%s479 + $0x280] sm:$0xff]
        %v6022 = vld [vmem:[%s479 + $0x288] sm:$0xff]
        %v6023 = vld [vmem:[%s479 + $0x290] sm:$0xff]
        %v6024 = vld [vmem:[%s479 + $0x298] sm:$0xff]
        %v6025 = vld [vmem:[%s479 + $0x2a0] sm:$0xff]
        %v6026 = vld [vmem:[%s479 + $0x2a8] sm:$0xff]
        %v6027 = vld [vmem:[%s479 + $0x2b0] sm:$0xff]
        %v6028 = vld [vmem:[%s479 + $0x2b8] sm:$0xff]
        %v6029 = vld [vmem:[%s479 + $0x2c0] sm:$0xff]
        %v6030 = vld [vmem:[%s479 + $0x2c8] sm:$0xff]
        %v6031 = vld [vmem:[%s479 + $0x2d0] sm:$0xff]
        %v6032 = vld [vmem:[%s479 + $0x2d8] sm:$0xff]
        %v6033 = vld [vmem:[%s479 + $0x2e0] sm:$0xff]
        %v6034 = vld [vmem:[%s479 + $0x2e8] sm:$0xff]
        %v6035 = vld [vmem:[%s479 + $0x2f0] sm:$0xff]
        %v6036 = vld [vmem:[%s479 + $0x2f8] sm:$0xff]
        %v6037 = vld [vmem:[%s479 + $0x300] sm:$0xff]
        %v6038 = vld [vmem:[%s479 + $0x308] sm:$0xff]
        %v6039 = vld [vmem:[%s479 + $0x310] sm:$0xff]
        %v6040 = vld [vmem:[%s479 + $0x318] sm:$0xff]
        %v6041 = vld [vmem:[%s479 + $0x320] sm:$0xff]
        %v6042 = vld [vmem:[%s479 + $0x328] sm:$0xff]
        %v6043 = vld [vmem:[%s479 + $0x330] sm:$0xff]
        %v6044 = vld [vmem:[%s479 + $0x338] sm:$0xff]
        %v6045 = vld [vmem:[%s479 + $0x340] sm:$0xff]
        %v6046 = vld [vmem:[%s479 + $0x348] sm:$0xff]
        %v6047 = vld [vmem:[%s479 + $0x350] sm:$0xff]
        %v6048 = vld [vmem:[%s479 + $0x358] sm:$0xff]
        %v6049 = vld [vmem:[%s479 + $0x360] sm:$0xff]
        %v6050 = vld [vmem:[%s479 + $0x368] sm:$0xff]
        %v6051 = vld [vmem:[%s479 + $0x370] sm:$0xff]
        %v6052 = vld [vmem:[%s479 + $0x378] sm:$0xff]
        %v6053 = vld [vmem:[%s479 + $0x380] sm:$0xff]
        %v6054 = vld [vmem:[%s479 + $0x388] sm:$0xff]
        %v6055 = vld [vmem:[%s479 + $0x390] sm:$0xff]
        %v6056 = vld [vmem:[%s479 + $0x398] sm:$0xff]
        %v6057 = vld [vmem:[%s479 + $0x3a0] sm:$0xff]
        %v6058 = vld [vmem:[%s479 + $0x3a8] sm:$0xff]
        %v6059 = vld [vmem:[%s479 + $0x3b0] sm:$0xff]
        %v6060 = vld [vmem:[%s479 + $0x3b8] sm:$0xff]
        %v6061 = vld [vmem:[%s479 + $0x3c0] sm:$0xff]
        %v6062 = vld [vmem:[%s479 + $0x3c8] sm:$0xff]
        %v6063 = vld [vmem:[%s479 + $0x3d0] sm:$0xff]
        %v6064 = vld [vmem:[%s479 + $0x3d8] sm:$0xff]
        %v6065 = vld [vmem:[%s479 + $0x3e0] sm:$0xff]
        %v6066 = vld [vmem:[%s479 + $0x3e8] sm:$0xff]
        %v6067 = vld [vmem:[%s479 + $0x3f0] sm:$0xff]
        %v6068 = vld [vmem:[%s479 + $0x3f8] sm:$0xff]
        %v6069 = vld [vmem:[%s479 + $0x400] sm:$0xff]
        %v6070 = vld [vmem:[%s479 + $0x408] sm:$0xff]
        %v6071 = vld [vmem:[%s479 + $0x410] sm:$0xff]
        %v6072 = vld [vmem:[%s479 + $0x418] sm:$0xff]
        %v6073 = vld [vmem:[%s479 + $0x420] sm:$0xff]
        %v6074 = vld [vmem:[%s479 + $0x428] sm:$0xff]
        %v6075 = vld [vmem:[%s479 + $0x430] sm:$0xff]
        %v6076 = vld [vmem:[%s479 + $0x438] sm:$0xff]
        %v6077 = vld [vmem:[%s479 + $0x440] sm:$0xff]
        %v6078 = vld [vmem:[%s479 + $0x448] sm:$0xff]
        %v6079 = vld [vmem:[%s479 + $0x450] sm:$0xff]
        %v6080 = vld [vmem:[%s479 + $0x458] sm:$0xff]
        %v6081 = vld [vmem:[%s479 + $0x460] sm:$0xff]
        %v6082 = vld [vmem:[%s479 + $0x468] sm:$0xff]
        %v6083 = vld [vmem:[%s479 + $0x470] sm:$0xff]
        %v6084 = vld [vmem:[%s479 + $0x478] sm:$0xff]
        %v6085 = vld [vmem:[%s489] sm:$0xf]
        %v6087 = vperm.slane %v6085, 0
        %v6088 = vperm.slane %v6085, 1
        %v6089 = vperm.slane %v6085, 2
        %v6090 = vperm.slane %v6085, 3
        %6096 = vst [vmem:[#allocation1] ss:$9 sm:$0xff] %v5940
        %v6097 = vld [vmem:[#allocation1] sm:$0xff]
        %v6098 = vld [vmem:[#allocation1 + $0x9] sm:$0xff]
        %v6099 = vld [vmem:[#allocation1 + $0x12] sm:$0xff]
        %v6100 = vld [vmem:[#allocation1 + $0x1b] sm:$0xff]
        %v6101 = vld [vmem:[#allocation1 + $0x24] sm:$0xff]
        %v6250 = vunpack.c.l.b16 %v5941
        %v6251 = vunpack.c.h.b16 %v5941
        %v6252 = vunpack.c.l.b16 %v5942
        %v6253 = vunpack.c.h.b16 %v5942
        %v6254 = vunpack.c.l.b16 %v5943
        %v6255 = vunpack.c.h.b16 %v5943
        %v6256 = vunpack.c.l.b16 %v5944
        %v6257 = vunpack.c.h.b16 %v5944
        %v6258 = vunpack.c.l.b16 %v5945
        %v6259 = vunpack.c.h.b16 %v5945
        %v6260 = vunpack.c.l.b16 %v5946
        %v6261 = vunpack.c.h.b16 %v5946
        %v6262 = vunpack.c.l.b16 %v5947
        %v6263 = vunpack.c.h.b16 %v5947
        %v6264 = vunpack.c.l.b16 %v5948
        %v6265 = vunpack.c.h.b16 %v5948
        %v6266 = vunpack.c.l.b16 %v5949
        %v6267 = vunpack.c.h.b16 %v5949
        %v6268 = vunpack.c.l.b16 %v5950
        %v6269 = vunpack.c.h.b16 %v5950
        %v6270 = vunpack.c.l.b16 %v5951
        %v6271 = vunpack.c.h.b16 %v5951
        %v6272 = vunpack.c.l.b16 %v5952
        %v6273 = vunpack.c.h.b16 %v5952
        %v6274 = vunpack.c.l.b16 %v5953
        %v6275 = vunpack.c.h.b16 %v5953
        %v6276 = vunpack.c.l.b16 %v5954
        %v6277 = vunpack.c.h.b16 %v5954
        %v6278 = vunpack.c.l.b16 %v5955
        %v6279 = vunpack.c.h.b16 %v5955
        %v6280 = vunpack.c.l.b16 %v5956
        %v6281 = vunpack.c.h.b16 %v5956
        %v6282 = vunpack.c.l.b16 %v5957
        %v6283 = vunpack.c.h.b16 %v5957
        %v6284 = vunpack.c.l.b16 %v5958
        %v6285 = vunpack.c.h.b16 %v5958
        %v6286 = vunpack.c.l.b16 %v5959
        %v6287 = vunpack.c.h.b16 %v5959
        %v6288 = vunpack.c.l.b16 %v5960
        %v6289 = vunpack.c.h.b16 %v5960
        %v6290 = vunpack.c.l.b16 %v5961
        %v6291 = vunpack.c.h.b16 %v5961
        %v6292 = vunpack.c.l.b16 %v5962
        %v6293 = vunpack.c.h.b16 %v5962
        %v6294 = vunpack.c.l.b16 %v5963
        %v6295 = vunpack.c.h.b16 %v5963
        %v6296 = vunpack.c.l.b16 %v5964
        %v6297 = vunpack.c.h.b16 %v5964
        %v6298 = vunpack.c.l.b16 %v5965
        %v6299 = vunpack.c.h.b16 %v5965
        %v6300 = vunpack.c.l.b16 %v5966
        %v6301 = vunpack.c.h.b16 %v5966
        %v6302 = vunpack.c.l.b16 %v5967
        %v6303 = vunpack.c.h.b16 %v5967
        %v6304 = vunpack.c.l.b16 %v5968
        %v6305 = vunpack.c.h.b16 %v5968
        %v6306 = vunpack.c.l.b16 %v5969
        %v6307 = vunpack.c.h.b16 %v5969
        %v6308 = vunpack.c.l.b16 %v5970
        %v6309 = vunpack.c.h.b16 %v5970
        %v6310 = vunpack.c.l.b16 %v5971
        %v6311 = vunpack.c.h.b16 %v5971
        %v6312 = vunpack.c.l.b16 %v5972
        %v6313 = vunpack.c.h.b16 %v5972
        %v6314 = vunpack.c.l.b16 %v5973
        %v6315 = vunpack.c.h.b16 %v5973
        %v6316 = vunpack.c.l.b16 %v5974
        %v6317 = vunpack.c.h.b16 %v5974
        %v6318 = vunpack.c.l.b16 %v5975
        %v6319 = vunpack.c.h.b16 %v5975
        %v6320 = vunpack.c.l.b16 %v5976
        %v6321 = vunpack.c.h.b16 %v5976
        %v6322 = vunpack.c.l.b16 %v5977
        %v6323 = vunpack.c.h.b16 %v5977
        %v6324 = vunpack.c.l.b16 %v5978
        %v6325 = vunpack.c.h.b16 %v5978
        %v6326 = vunpack.c.l.b16 %v5979
        %v6327 = vunpack.c.h.b16 %v5979
        %v6328 = vunpack.c.l.b16 %v5980
        %v6329 = vunpack.c.h.b16 %v5980
        %v6330 = vunpack.c.l.b16 %v5981
        %v6331 = vunpack.c.h.b16 %v5981
        %v6332 = vunpack.c.l.b16 %v5982
        %v6333 = vunpack.c.h.b16 %v5982
        %v6334 = vunpack.c.l.b16 %v5983
        %v6335 = vunpack.c.h.b16 %v5983
        %v6336 = vunpack.c.l.b16 %v5984
        %v6337 = vunpack.c.h.b16 %v5984
        %v6338 = vunpack.c.l.b16 %v5985
        %v6339 = vunpack.c.h.b16 %v5985
        %v6340 = vunpack.c.l.b16 %v5986
        %v6341 = vunpack.c.h.b16 %v5986
        %v6342 = vunpack.c.l.b16 %v5987
        %v6343 = vunpack.c.h.b16 %v5987
        %v6344 = vunpack.c.l.b16 %v5988
        %v6345 = vunpack.c.h.b16 %v5988
        %v6346 = vunpack.c.l.b16 %v5989
        %v6347 = vunpack.c.h.b16 %v5989
        %v6348 = vunpack.c.l.b16 %v5990
        %v6349 = vunpack.c.h.b16 %v5990
        %v6350 = vunpack.c.l.b16 %v5991
        %v6351 = vunpack.c.h.b16 %v5991
        %v6352 = vunpack.c.l.b16 %v5992
        %v6353 = vunpack.c.h.b16 %v5992
        %v6354 = vunpack.c.l.b16 %v5993
        %v6355 = vunpack.c.h.b16 %v5993
        %v6356 = vunpack.c.l.b16 %v5994
        %v6357 = vunpack.c.h.b16 %v5994
        %v6358 = vunpack.c.l.b16 %v5995
        %v6359 = vunpack.c.h.b16 %v5995
        %v6360 = vunpack.c.l.b16 %v5996
        %v6361 = vunpack.c.h.b16 %v5996
        %v6362 = vunpack.c.l.b16 %v5997
        %v6363 = vunpack.c.h.b16 %v5997
        %v6364 = vunpack.c.l.b16 %v5998
        %v6365 = vunpack.c.h.b16 %v5998
        %v6366 = vunpack.c.l.b16 %v5999
        %v6367 = vunpack.c.h.b16 %v5999
        %v6368 = vunpack.c.l.b16 %v6000
        %v6369 = vunpack.c.h.b16 %v6000
        %v6370 = vunpack.c.l.b16 %v6001
        %v6371 = vunpack.c.h.b16 %v6001
        %v6372 = vunpack.c.l.b16 %v6002
        %v6373 = vunpack.c.h.b16 %v6002
        %v6374 = vunpack.c.l.b16 %v6003
        %v6375 = vunpack.c.h.b16 %v6003
        %v6376 = vunpack.c.l.b16 %v6004
        %v6377 = vunpack.c.h.b16 %v6004
        %v6378 = vunpack.c.l.b16 %v6005
        %v6379 = vunpack.c.h.b16 %v6005
        %v6380 = vunpack.c.l.b16 %v6006
        %v6381 = vunpack.c.h.b16 %v6006
        %v6382 = vunpack.c.l.b16 %v6007
        %v6383 = vunpack.c.h.b16 %v6007
        %v6384 = vunpack.c.l.b16 %v6008
        %v6385 = vunpack.c.h.b16 %v6008
        %v6386 = vunpack.c.l.b16 %v6009
        %v6387 = vunpack.c.h.b16 %v6009
        %v6388 = vunpack.c.l.b16 %v6010
        %v6389 = vunpack.c.h.b16 %v6010
        %v6390 = vunpack.c.l.b16 %v6011
        %v6391 = vunpack.c.h.b16 %v6011
        %v6392 = vunpack.c.l.b16 %v6012
        %v6393 = vunpack.c.h.b16 %v6012
        %v6394 = vunpack.c.l.b16 %v6013
        %v6395 = vunpack.c.h.b16 %v6013
        %v6396 = vunpack.c.l.b16 %v6014
        %v6397 = vunpack.c.h.b16 %v6014
        %v6398 = vunpack.c.l.b16 %v6015
        %v6399 = vunpack.c.h.b16 %v6015
        %v6400 = vunpack.c.l.b16 %v6016
        %v6401 = vunpack.c.h.b16 %v6016
        %v6402 = vunpack.c.l.b16 %v6017
        %v6403 = vunpack.c.h.b16 %v6017
        %v6404 = vunpack.c.l.b16 %v6018
        %v6405 = vunpack.c.h.b16 %v6018
        %v6406 = vunpack.c.l.b16 %v6019
        %v6407 = vunpack.c.h.b16 %v6019
        %v6408 = vunpack.c.l.b16 %v6020
        %v6409 = vunpack.c.h.b16 %v6020
        %v6410 = vunpack.c.l.b16 %v6021
        %v6411 = vunpack.c.h.b16 %v6021
        %v6412 = vunpack.c.l.b16 %v6022
        %v6413 = vunpack.c.h.b16 %v6022
        %v6414 = vunpack.c.l.b16 %v6023
        %v6415 = vunpack.c.h.b16 %v6023
        %v6416 = vunpack.c.l.b16 %v6024
        %v6417 = vunpack.c.h.b16 %v6024
        %v6418 = vunpack.c.l.b16 %v6025
        %v6419 = vunpack.c.h.b16 %v6025
        %v6420 = vunpack.c.l.b16 %v6026
        %v6421 = vunpack.c.h.b16 %v6026
        %v6422 = vunpack.c.l.b16 %v6027
        %v6423 = vunpack.c.h.b16 %v6027
        %v6424 = vunpack.c.l.b16 %v6028
        %v6425 = vunpack.c.h.b16 %v6028
        %v6426 = vunpack.c.l.b16 %v6029
        %v6427 = vunpack.c.h.b16 %v6029
        %v6428 = vunpack.c.l.b16 %v6030
        %v6429 = vunpack.c.h.b16 %v6030
        %v6430 = vunpack.c.l.b16 %v6031
        %v6431 = vunpack.c.h.b16 %v6031
        %v6432 = vunpack.c.l.b16 %v6032
        %v6433 = vunpack.c.h.b16 %v6032
        %v6434 = vunpack.c.l.b16 %v6033
        %v6435 = vunpack.c.h.b16 %v6033
        %v6436 = vunpack.c.l.b16 %v6034
        %v6437 = vunpack.c.h.b16 %v6034
        %v6438 = vunpack.c.l.b16 %v6035
        %v6439 = vunpack.c.h.b16 %v6035
        %v6440 = vunpack.c.l.b16 %v6036
        %v6441 = vunpack.c.h.b16 %v6036
        %v6442 = vunpack.c.l.b16 %v6037
        %v6443 = vunpack.c.h.b16 %v6037
        %v6444 = vunpack.c.l.b16 %v6038
        %v6445 = vunpack.c.h.b16 %v6038
        %v6446 = vunpack.c.l.b16 %v6039
        %v6447 = vunpack.c.h.b16 %v6039
        %v6448 = vunpack.c.l.b16 %v6040
        %v6449 = vunpack.c.h.b16 %v6040
        %v6450 = vunpack.c.l.b16 %v6041
        %v6451 = vunpack.c.h.b16 %v6041
        %v6452 = vunpack.c.l.b16 %v6042
        %v6453 = vunpack.c.h.b16 %v6042
        %v6454 = vunpack.c.l.b16 %v6043
        %v6455 = vunpack.c.h.b16 %v6043
        %v6456 = vunpack.c.l.b16 %v6044
        %v6457 = vunpack.c.h.b16 %v6044
        %v6458 = vunpack.c.l.b16 %v6045
        %v6459 = vunpack.c.h.b16 %v6045
        %v6460 = vunpack.c.l.b16 %v6046
        %v6461 = vunpack.c.h.b16 %v6046
        %v6462 = vunpack.c.l.b16 %v6047
        %v6463 = vunpack.c.h.b16 %v6047
        %v6464 = vunpack.c.l.b16 %v6048
        %v6465 = vunpack.c.h.b16 %v6048
        %v6466 = vunpack.c.l.b16 %v6049
        %v6467 = vunpack.c.h.b16 %v6049
        %v6468 = vunpack.c.l.b16 %v6050
        %v6469 = vunpack.c.h.b16 %v6050
        %v6470 = vunpack.c.l.b16 %v6051
        %v6471 = vunpack.c.h.b16 %v6051
        %v6472 = vunpack.c.l.b16 %v6052
        %v6473 = vunpack.c.h.b16 %v6052
        %v6474 = vunpack.c.l.b16 %v6053
        %v6475 = vunpack.c.h.b16 %v6053
        %v6476 = vunpack.c.l.b16 %v6054
        %v6477 = vunpack.c.h.b16 %v6054
        %v6478 = vunpack.c.l.b16 %v6055
        %v6479 = vunpack.c.h.b16 %v6055
        %v6480 = vunpack.c.l.b16 %v6056
        %v6481 = vunpack.c.h.b16 %v6056
        %v6482 = vunpack.c.l.b16 %v6057
        %v6483 = vunpack.c.h.b16 %v6057
        %v6484 = vunpack.c.l.b16 %v6058
        %v6485 = vunpack.c.h.b16 %v6058
        %v6486 = vunpack.c.l.b16 %v6059
        %v6487 = vunpack.c.h.b16 %v6059
        %v6488 = vunpack.c.l.b16 %v6060
        %v6489 = vunpack.c.h.b16 %v6060
        %v6490 = vunpack.c.l.b16 %v6061
        %v6491 = vunpack.c.h.b16 %v6061
        %v6492 = vunpack.c.l.b16 %v6062
        %v6493 = vunpack.c.h.b16 %v6062
        %v6494 = vunpack.c.l.b16 %v6063
        %v6495 = vunpack.c.h.b16 %v6063
        %v6496 = vunpack.c.l.b16 %v6064
        %v6497 = vunpack.c.h.b16 %v6064
        %v6498 = vunpack.c.l.b16 %v6065
        %v6499 = vunpack.c.h.b16 %v6065
        %v6500 = vunpack.c.l.b16 %v6066
        %v6501 = vunpack.c.h.b16 %v6066
        %v6502 = vunpack.c.l.b16 %v6067
        %v6503 = vunpack.c.h.b16 %v6067
        %v6504 = vunpack.c.l.b16 %v6068
        %v6505 = vunpack.c.h.b16 %v6068
        %v6506 = vunpack.c.l.b16 %v6069
        %v6507 = vunpack.c.h.b16 %v6069
        %v6508 = vunpack.c.l.b16 %v6070
        %v6509 = vunpack.c.h.b16 %v6070
        %v6510 = vunpack.c.l.b16 %v6071
        %v6511 = vunpack.c.h.b16 %v6071
        %v6512 = vunpack.c.l.b16 %v6072
        %v6513 = vunpack.c.h.b16 %v6072
        %v6514 = vunpack.c.l.b16 %v6073
        %v6515 = vunpack.c.h.b16 %v6073
        %v6516 = vunpack.c.l.b16 %v6074
        %v6517 = vunpack.c.h.b16 %v6074
        %v6518 = vunpack.c.l.b16 %v6075
        %v6519 = vunpack.c.h.b16 %v6075
        %v6520 = vunpack.c.l.b16 %v6076
        %v6521 = vunpack.c.h.b16 %v6076
        %v6522 = vunpack.c.l.b16 %v6077
        %v6523 = vunpack.c.h.b16 %v6077
        %v6524 = vunpack.c.l.b16 %v6078
        %v6525 = vunpack.c.h.b16 %v6078
        %v6526 = vunpack.c.l.b16 %v6079
        %v6527 = vunpack.c.h.b16 %v6079
        %v6528 = vunpack.c.l.b16 %v6080
        %v6529 = vunpack.c.h.b16 %v6080
        %v6530 = vunpack.c.l.b16 %v6081
        %v6531 = vunpack.c.h.b16 %v6081
        %v6532 = vunpack.c.l.b16 %v6082
        %v6533 = vunpack.c.h.b16 %v6082
        %v6534 = vunpack.c.l.b16 %v6083
        %v6535 = vunpack.c.h.b16 %v6083
        %v6536 = vunpack.c.l.b16 %v6084
        %v6537 = vunpack.c.h.b16 %v6084
        %v6538 = vpack.c.b16 %v6254, %v6250
        %v6539 = vpack.c.b16 %v6255, %v6251
        %v6540 = vpack.c.b16 %v6256, %v6252
        %v6541 = vpack.c.b16 %v6257, %v6253
        %v6542 = vpack.c.b16 %v6262, %v6258
        %v6543 = vpack.c.b16 %v6263, %v6259
        %v6544 = vpack.c.b16 %v6264, %v6260
        %v6545 = vpack.c.b16 %v6265, %v6261
        %v6546 = vpack.c.b16 %v6270, %v6266
        %v6547 = vpack.c.b16 %v6271, %v6267
        %v6548 = vpack.c.b16 %v6272, %v6268
        %v6549 = vpack.c.b16 %v6273, %v6269
        %v6550 = vpack.c.b16 %v6278, %v6274
        %v6551 = vpack.c.b16 %v6279, %v6275
        %v6552 = vpack.c.b16 %v6280, %v6276
        %v6553 = vpack.c.b16 %v6281, %v6277
        %v6554 = vpack.c.b16 %v6286, %v6282
        %v6555 = vpack.c.b16 %v6287, %v6283
        %v6556 = vpack.c.b16 %v6288, %v6284
        %v6557 = vpack.c.b16 %v6289, %v6285
        %v6558 = vpack.c.b16 %v6294, %v6290
        %v6559 = vpack.c.b16 %v6295, %v6291
        %v6560 = vpack.c.b16 %v6296, %v6292
        %v6561 = vpack.c.b16 %v6297, %v6293
        %v6562 = vpack.c.b16 %v6302, %v6298
        %v6563 = vpack.c.b16 %v6303, %v6299
        %v6564 = vpack.c.b16 %v6304, %v6300
        %v6565 = vpack.c.b16 %v6305, %v6301
        %v6566 = vpack.c.b16 %v6310, %v6306
        %v6567 = vpack.c.b16 %v6311, %v6307
        %v6568 = vpack.c.b16 %v6312, %v6308
        %v6569 = vpack.c.b16 %v6313, %v6309
        %v6570 = vpack.c.b16 %v6318, %v6314
        %v6571 = vpack.c.b16 %v6319, %v6315
        %v6572 = vpack.c.b16 %v6320, %v6316
        %v6573 = vpack.c.b16 %v6321, %v6317
        %v6574 = vpack.c.b16 %v6326, %v6322
        %v6575 = vpack.c.b16 %v6327, %v6323
        %v6576 = vpack.c.b16 %v6328, %v6324
        %v6577 = vpack.c.b16 %v6329, %v6325
        %v6578 = vpack.c.b16 %v6334, %v6330
        %v6579 = vpack.c.b16 %v6335, %v6331
        %v6580 = vpack.c.b16 %v6336, %v6332
        %v6581 = vpack.c.b16 %v6337, %v6333
        %v6582 = vpack.c.b16 %v6342, %v6338
        %v6583 = vpack.c.b16 %v6343, %v6339
        %v6584 = vpack.c.b16 %v6344, %v6340
        %v6585 = vpack.c.b16 %v6345, %v6341
        %v6586 = vpack.c.b16 %v6350, %v6346
        %v6587 = vpack.c.b16 %v6351, %v6347
        %v6588 = vpack.c.b16 %v6352, %v6348
        %v6589 = vpack.c.b16 %v6353, %v6349
        %v6590 = vpack.c.b16 %v6358, %v6354
        %v6591 = vpack.c.b16 %v6359, %v6355
        %v6592 = vpack.c.b16 %v6360, %v6356
        %v6593 = vpack.c.b16 %v6361, %v6357
        %v6594 = vpack.c.b16 %v6366, %v6362
        %v6595 = vpack.c.b16 %v6367, %v6363
        %v6596 = vpack.c.b16 %v6368, %v6364
        %v6597 = vpack.c.b16 %v6369, %v6365
        %v6598 = vpack.c.b16 %v6374, %v6370
        %v6599 = vpack.c.b16 %v6375, %v6371
        %v6600 = vpack.c.b16 %v6376, %v6372
        %v6601 = vpack.c.b16 %v6377, %v6373
        %v6602 = vpack.c.b16 %v6382, %v6378
        %v6603 = vpack.c.b16 %v6383, %v6379
        %v6604 = vpack.c.b16 %v6384, %v6380
        %v6605 = vpack.c.b16 %v6385, %v6381
        %v6606 = vpack.c.b16 %v6390, %v6386
        %v6607 = vpack.c.b16 %v6391, %v6387
        %v6608 = vpack.c.b16 %v6392, %v6388
        %v6609 = vpack.c.b16 %v6393, %v6389
        %v6610 = vpack.c.b16 %v6398, %v6394
        %v6611 = vpack.c.b16 %v6399, %v6395
        %v6612 = vpack.c.b16 %v6400, %v6396
        %v6613 = vpack.c.b16 %v6401, %v6397
        %v6614 = vpack.c.b16 %v6406, %v6402
        %v6615 = vpack.c.b16 %v6407, %v6403
        %v6616 = vpack.c.b16 %v6408, %v6404
        %v6617 = vpack.c.b16 %v6409, %v6405
        %v6618 = vpack.c.b16 %v6414, %v6410
        %v6619 = vpack.c.b16 %v6415, %v6411
        %v6620 = vpack.c.b16 %v6416, %v6412
        %v6621 = vpack.c.b16 %v6417, %v6413
        %v6622 = vpack.c.b16 %v6422, %v6418
        %v6623 = vpack.c.b16 %v6423, %v6419
        %v6624 = vpack.c.b16 %v6424, %v6420
        %v6625 = vpack.c.b16 %v6425, %v6421
        %v6626 = vpack.c.b16 %v6430, %v6426
        %v6627 = vpack.c.b16 %v6431, %v6427
        %v6628 = vpack.c.b16 %v6432, %v6428
        %v6629 = vpack.c.b16 %v6433, %v6429
        %v6630 = vpack.c.b16 %v6438, %v6434
        %v6631 = vpack.c.b16 %v6439, %v6435
        %v6632 = vpack.c.b16 %v6440, %v6436
        %v6633 = vpack.c.b16 %v6441, %v6437
        %v6634 = vpack.c.b16 %v6446, %v6442
        %v6635 = vpack.c.b16 %v6447, %v6443
        %v6636 = vpack.c.b16 %v6448, %v6444
        %v6637 = vpack.c.b16 %v6449, %v6445
        %v6638 = vpack.c.b16 %v6454, %v6450
        %v6639 = vpack.c.b16 %v6455, %v6451
        %v6640 = vpack.c.b16 %v6456, %v6452
        %v6641 = vpack.c.b16 %v6457, %v6453
        %v6642 = vpack.c.b16 %v6462, %v6458
        %v6643 = vpack.c.b16 %v6463, %v6459
        %v6644 = vpack.c.b16 %v6464, %v6460
        %v6645 = vpack.c.b16 %v6465, %v6461
        %v6646 = vpack.c.b16 %v6470, %v6466
        %v6647 = vpack.c.b16 %v6471, %v6467
        %v6648 = vpack.c.b16 %v6472, %v6468
        %v6649 = vpack.c.b16 %v6473, %v6469
        %v6650 = vpack.c.b16 %v6478, %v6474
        %v6651 = vpack.c.b16 %v6479, %v6475
        %v6652 = vpack.c.b16 %v6480, %v6476
        %v6653 = vpack.c.b16 %v6481, %v6477
        %v6654 = vpack.c.b16 %v6486, %v6482
        %v6655 = vpack.c.b16 %v6487, %v6483
        %v6656 = vpack.c.b16 %v6488, %v6484
        %v6657 = vpack.c.b16 %v6489, %v6485
        %v6658 = vpack.c.b16 %v6494, %v6490
        %v6659 = vpack.c.b16 %v6495, %v6491
        %v6660 = vpack.c.b16 %v6496, %v6492
        %v6661 = vpack.c.b16 %v6497, %v6493
        %v6662 = vpack.c.b16 %v6502, %v6498
        %v6663 = vpack.c.b16 %v6503, %v6499
        %v6664 = vpack.c.b16 %v6504, %v6500
        %v6665 = vpack.c.b16 %v6505, %v6501
        %v6666 = vpack.c.b16 %v6510, %v6506
        %v6667 = vpack.c.b16 %v6511, %v6507
        %v6668 = vpack.c.b16 %v6512, %v6508
        %v6669 = vpack.c.b16 %v6513, %v6509
        %v6670 = vpack.c.b16 %v6518, %v6514
        %v6671 = vpack.c.b16 %v6519, %v6515
        %v6672 = vpack.c.b16 %v6520, %v6516
        %v6673 = vpack.c.b16 %v6521, %v6517
        %v6674 = vpack.c.b16 %v6526, %v6522
        %v6675 = vpack.c.b16 %v6527, %v6523
        %v6676 = vpack.c.b16 %v6528, %v6524
        %v6677 = vpack.c.b16 %v6529, %v6525
        %v6678 = vpack.c.b16 %v6534, %v6530
        %v6679 = vpack.c.b16 %v6535, %v6531
        %v6680 = vpack.c.b16 %v6536, %v6532
        %v6681 = vpack.c.b16 %v6537, %v6533
        %vm6826 = vcmask 523264
        %v6827 = vsel %vm6826, %v6101, 0
        %6829 = vmatpush.bf16.msra.mxu0 %v6566
        %6830 = vmatpush.bf16.msra.mxu0 %v6562
        %6831 = vmatpush.bf16.msra.mxu0 %v6558
        %6832 = vmatpush.bf16.msra.mxu0 %v6554
        %6833 = vmatpush.bf16.msra.mxu0 %v6550
        %6834 = vmatpush.bf16.msra.mxu0 %v6546
        %6835 = vmatpush.bf16.msra.mxu0 %v6542
        %6836 = vmatpush.bf16.msra.mxu0 %v6538
        %6837 = vmatmul.bf16.gmra.mxu0 %v6097
        %v6838 = vpop.f32.mrf.mxu0
        %v6839 = vadd.f32 %v6087, %v6838
        %v6840 = vpop.f32.mrf.mxu0
        %6841 = vdwg.mxu0
        %6842 = vmatpush.bf16.msra.mxu0 %v6598
        %6843 = vmatpush.bf16.msra.mxu0 %v6594
        %6844 = vmatpush.bf16.msra.mxu0 %v6590
        %6845 = vmatpush.bf16.msra.mxu0 %v6586
        %6846 = vmatpush.bf16.msra.mxu0 %v6582
        %6847 = vmatpush.bf16.msra.mxu0 %v6578
        %6848 = vmatpush.bf16.msra.mxu0 %v6574
        %6849 = vmatpush.bf16.msra.mxu0 %v6570
        %6850 = vmatmul.bf16.gmra.mxu0 %v6098
        %v6851 = vpop.f32.mrf.mxu0
        %v6852 = vadd.f32 %v6839, %v6851
        %v6853 = vpop.f32.mrf.mxu0
        %6854 = vdwg.mxu0
        %6855 = vmatpush.bf16.msra.mxu0 %v6630
        %6856 = vmatpush.bf16.msra.mxu0 %v6626
        %6857 = vmatpush.bf16.msra.mxu0 %v6622
        %6858 = vmatpush.bf16.msra.mxu0 %v6618
        %6859 = vmatpush.bf16.msra.mxu0 %v6614
        %6860 = vmatpush.bf16.msra.mxu0 %v6610
        %6861 = vmatpush.bf16.msra.mxu0 %v6606
        %6862 = vmatpush.bf16.msra.mxu0 %v6602
        %6863 = vmatmul.bf16.gmra.mxu0 %v6099
        %v6864 = vpop.f32.mrf.mxu0
        %v6865 = vadd.f32 %v6852, %v6864
        %v6866 = vpop.f32.mrf.mxu0
        %6867 = vdwg.mxu0
        %6868 = vmatpush.bf16.msra.mxu0 %v6662
        %6869 = vmatpush.bf16.msra.mxu0 %v6658
        %6870 = vmatpush.bf16.msra.mxu0 %v6654
        %6871 = vmatpush.bf16.msra.mxu0 %v6650
        %6872 = vmatpush.bf16.msra.mxu0 %v6646
        %6873 = vmatpush.bf16.msra.mxu0 %v6642
        %6874 = vmatpush.bf16.msra.mxu0 %v6638
        %6875 = vmatpush.bf16.msra.mxu0 %v6634
        %6876 = vmatmul.bf16.gmra.mxu0 %v6100
        %v6877 = vpop.f32.mrf.mxu0
        %v6878 = vadd.f32 %v6865, %v6877
        %v6879 = vpop.f32.mrf.mxu0
        %6880 = vdwg.mxu0
        %6881 = vmatpush.bf16.msra.mxu0 0
        %6882 = vmatpush.bf16.msra.mxu0 0
        %6883 = vmatpush.bf16.msra.mxu0 0
        %6884 = vmatpush.bf16.msra.mxu0 0
        %6885 = vmatpush.bf16.msra.mxu0 %v6678
        %6886 = vmatpush.bf16.msra.mxu0 %v6674
        %6887 = vmatpush.bf16.msra.mxu0 %v6670
        %6888 = vmatpush.bf16.msra.mxu0 %v6666
        %6889 = vmatmul.bf16.gmra.mxu0 %v6827
        %v6890 = vpop.f32.mrf.mxu0
        %v6891 = vadd.f32 %v6878, %v6890
        %v6892 = vpop.f32.mrf.mxu0
        %6893 = vdwg.mxu0
        %6894 = vmatpush.bf16.msra.mxu0 %v6567
        %6895 = vmatpush.bf16.msra.mxu0 %v6563
        %6896 = vmatpush.bf16.msra.mxu0 %v6559
        %6897 = vmatpush.bf16.msra.mxu0 %v6555
        %6898 = vmatpush.bf16.msra.mxu0 %v6551
        %6899 = vmatpush.bf16.msra.mxu0 %v6547
        %6900 = vmatpush.bf16.msra.mxu0 %v6543
        %6901 = vmatpush.bf16.msra.mxu0 %v6539
        %6902 = vmatmul.bf16.gmra.mxu0 %v6097
        %v6903 = vpop.f32.mrf.mxu0
        %v6904 = vadd.f32 %v6088, %v6903
        %v6905 = vpop.f32.mrf.mxu0
        %6906 = vdwg.mxu0
        %6907 = vmatpush.bf16.msra.mxu0 %v6599
        %6908 = vmatpush.bf16.msra.mxu0 %v6595
        %6909 = vmatpush.bf16.msra.mxu0 %v6591
        %6910 = vmatpush.bf16.msra.mxu0 %v6587
        %6911 = vmatpush.bf16.msra.mxu0 %v6583
        %6912 = vmatpush.bf16.msra.mxu0 %v6579
        %6913 = vmatpush.bf16.msra.mxu0 %v6575
        %6914 = vmatpush.bf16.msra.mxu0 %v6571
        %6915 = vmatmul.bf16.gmra.mxu0 %v6098
        %v6916 = vpop.f32.mrf.mxu0
        %v6917 = vadd.f32 %v6904, %v6916
        %v6918 = vpop.f32.mrf.mxu0
        %6919 = vdwg.mxu0
        %6920 = vmatpush.bf16.msra.mxu0 %v6631
        %6921 = vmatpush.bf16.msra.mxu0 %v6627
        %6922 = vmatpush.bf16.msra.mxu0 %v6623
        %6923 = vmatpush.bf16.msra.mxu0 %v6619
        %6924 = vmatpush.bf16.msra.mxu0 %v6615
        %6925 = vmatpush.bf16.msra.mxu0 %v6611
        %6926 = vmatpush.bf16.msra.mxu0 %v6607
        %6927 = vmatpush.bf16.msra.mxu0 %v6603
        %6928 = vmatmul.bf16.gmra.mxu0 %v6099
        %v6929 = vpop.f32.mrf.mxu0
        %v6930 = vadd.f32 %v6917, %v6929
        %v6931 = vpop.f32.mrf.mxu0
        %6932 = vdwg.mxu0
        %6933 = vmatpush.bf16.msra.mxu0 %v6663
        %6934 = vmatpush.bf16.msra.mxu0 %v6659
        %6935 = vmatpush.bf16.msra.mxu0 %v6655
        %6936 = vmatpush.bf16.msra.mxu0 %v6651
        %6937 = vmatpush.bf16.msra.mxu0 %v6647
        %6938 = vmatpush.bf16.msra.mxu0 %v6643
        %6939 = vmatpush.bf16.msra.mxu0 %v6639
        %6940 = vmatpush.bf16.msra.mxu0 %v6635
        %6941 = vmatmul.bf16.gmra.mxu0 %v6100
        %v6942 = vpop.f32.mrf.mxu0
        %v6943 = vadd.f32 %v6930, %v6942
        %v6944 = vpop.f32.mrf.mxu0
        %6945 = vdwg.mxu0
        %6946 = vmatpush.bf16.msra.mxu0 0
        %6947 = vmatpush.bf16.msra.mxu0 0
        %6948 = vmatpush.bf16.msra.mxu0 0
        %6949 = vmatpush.bf16.msra.mxu0 0
        %6950 = vmatpush.bf16.msra.mxu0 %v6679
        %6951 = vmatpush.bf16.msra.mxu0 %v6675
        %6952 = vmatpush.bf16.msra.mxu0 %v6671
        %6953 = vmatpush.bf16.msra.mxu0 %v6667
        %6954 = vmatmul.bf16.gmra.mxu0 %v6827
        %v6955 = vpop.f32.mrf.mxu0
        %v6956 = vadd.f32 %v6943, %v6955
        %v6957 = vpop.f32.mrf.mxu0
        %6958 = vdwg.mxu0
        %6959 = vmatpush.bf16.msra.mxu0 %v6568
        %6960 = vmatpush.bf16.msra.mxu0 %v6564
        %6961 = vmatpush.bf16.msra.mxu0 %v6560
        %6962 = vmatpush.bf16.msra.mxu0 %v6556
        %6963 = vmatpush.bf16.msra.mxu0 %v6552
        %6964 = vmatpush.bf16.msra.mxu0 %v6548
        %6965 = vmatpush.bf16.msra.mxu0 %v6544
        %6966 = vmatpush.bf16.msra.mxu0 %v6540
        %6967 = vmatmul.bf16.gmra.mxu0 %v6097
        %v6968 = vpop.f32.mrf.mxu0
        %v6969 = vadd.f32 %v6089, %v6968
        %v6970 = vpop.f32.mrf.mxu0
        %6971 = vdwg.mxu0
        %6972 = vmatpush.bf16.msra.mxu0 %v6600
        %6973 = vmatpush.bf16.msra.mxu0 %v6596
        %6974 = vmatpush.bf16.msra.mxu0 %v6592
        %6975 = vmatpush.bf16.msra.mxu0 %v6588
        %6976 = vmatpush.bf16.msra.mxu0 %v6584
        %6977 = vmatpush.bf16.msra.mxu0 %v6580
        %6978 = vmatpush.bf16.msra.mxu0 %v6576
        %6979 = vmatpush.bf16.msra.mxu0 %v6572
        %6980 = vmatmul.bf16.gmra.mxu0 %v6098
        %v6981 = vpop.f32.mrf.mxu0
        %v6982 = vadd.f32 %v6969, %v6981
        %v6983 = vpop.f32.mrf.mxu0
        %6984 = vdwg.mxu0
        %6985 = vmatpush.bf16.msra.mxu0 %v6632
        %6986 = vmatpush.bf16.msra.mxu0 %v6628
        %6987 = vmatpush.bf16.msra.mxu0 %v6624
        %6988 = vmatpush.bf16.msra.mxu0 %v6620
        %6989 = vmatpush.bf16.msra.mxu0 %v6616
        %6990 = vmatpush.bf16.msra.mxu0 %v6612
        %6991 = vmatpush.bf16.msra.mxu0 %v6608
        %6992 = vmatpush.bf16.msra.mxu0 %v6604
        %6993 = vmatmul.bf16.gmra.mxu0 %v6099
        %v6994 = vpop.f32.mrf.mxu0
        %v6995 = vadd.f32 %v6982, %v6994
        %v6996 = vpop.f32.mrf.mxu0
        %6997 = vdwg.mxu0
        %6998 = vmatpush.bf16.msra.mxu0 %v6664
        %6999 = vmatpush.bf16.msra.mxu0 %v6660
        %7000 = vmatpush.bf16.msra.mxu0 %v6656
        %7001 = vmatpush.bf16.msra.mxu0 %v6652
        %7002 = vmatpush.bf16.msra.mxu0 %v6648
        %7003 = vmatpush.bf16.msra.mxu0 %v6644
        %7004 = vmatpush.bf16.msra.mxu0 %v6640
        %7005 = vmatpush.bf16.msra.mxu0 %v6636
        %7006 = vmatmul.bf16.gmra.mxu0 %v6100
        %v7007 = vpop.f32.mrf.mxu0
        %v7008 = vadd.f32 %v6995, %v7007
        %v7009 = vpop.f32.mrf.mxu0
        %7010 = vdwg.mxu0
        %7011 = vmatpush.bf16.msra.mxu0 0
        %7012 = vmatpush.bf16.msra.mxu0 0
        %7013 = vmatpush.bf16.msra.mxu0 0
        %7014 = vmatpush.bf16.msra.mxu0 0
        %7015 = vmatpush.bf16.msra.mxu0 %v6680
        %7016 = vmatpush.bf16.msra.mxu0 %v6676
        %7017 = vmatpush.bf16.msra.mxu0 %v6672
        %7018 = vmatpush.bf16.msra.mxu0 %v6668
        %7019 = vmatmul.bf16.gmra.mxu0 %v6827
        %v7020 = vpop.f32.mrf.mxu0
        %v7021 = vadd.f32 %v7008, %v7020
        %v7022 = vpop.f32.mrf.mxu0
        %7023 = vdwg.mxu0
        %7024 = vmatpush.bf16.msra.mxu0 %v6569
        %7025 = vmatpush.bf16.msra.mxu0 %v6565
        %7026 = vmatpush.bf16.msra.mxu0 %v6561
        %7027 = vmatpush.bf16.msra.mxu0 %v6557
        %7028 = vmatpush.bf16.msra.mxu0 %v6553
        %7029 = vmatpush.bf16.msra.mxu0 %v6549
        %7030 = vmatpush.bf16.msra.mxu0 %v6545
        %7031 = vmatpush.bf16.msra.mxu0 %v6541
        %7032 = vmatmul.bf16.gmra.mxu0 %v6097
        %v7033 = vpop.f32.mrf.mxu0
        %v7034 = vadd.f32 %v6090, %v7033
        %v7035 = vpop.f32.mrf.mxu0
        %7036 = vdwg.mxu0
        %7037 = vmatpush.bf16.msra.mxu0 %v6601
        %7038 = vmatpush.bf16.msra.mxu0 %v6597
        %7039 = vmatpush.bf16.msra.mxu0 %v6593
        %7040 = vmatpush.bf16.msra.mxu0 %v6589
        %7041 = vmatpush.bf16.msra.mxu0 %v6585
        %7042 = vmatpush.bf16.msra.mxu0 %v6581
        %7043 = vmatpush.bf16.msra.mxu0 %v6577
        %7044 = vmatpush.bf16.msra.mxu0 %v6573
        %7045 = vmatmul.bf16.gmra.mxu0 %v6098
        %v7046 = vpop.f32.mrf.mxu0
        %v7047 = vadd.f32 %v7034, %v7046
        %v7048 = vpop.f32.mrf.mxu0
        %7049 = vdwg.mxu0
        %7050 = vmatpush.bf16.msra.mxu0 %v6633
        %7051 = vmatpush.bf16.msra.mxu0 %v6629
        %7052 = vmatpush.bf16.msra.mxu0 %v6625
        %7053 = vmatpush.bf16.msra.mxu0 %v6621
        %7054 = vmatpush.bf16.msra.mxu0 %v6617
        %7055 = vmatpush.bf16.msra.mxu0 %v6613
        %7056 = vmatpush.bf16.msra.mxu0 %v6609
        %7057 = vmatpush.bf16.msra.mxu0 %v6605
        %7058 = vmatmul.bf16.gmra.mxu0 %v6099
        %v7059 = vpop.f32.mrf.mxu0
        %v7060 = vadd.f32 %v7047, %v7059
        %v7061 = vpop.f32.mrf.mxu0
        %7062 = vdwg.mxu0
        %7063 = vmatpush.bf16.msra.mxu0 %v6665
        %7064 = vmatpush.bf16.msra.mxu0 %v6661
        %7065 = vmatpush.bf16.msra.mxu0 %v6657
        %7066 = vmatpush.bf16.msra.mxu0 %v6653
        %7067 = vmatpush.bf16.msra.mxu0 %v6649
        %7068 = vmatpush.bf16.msra.mxu0 %v6645
        %7069 = vmatpush.bf16.msra.mxu0 %v6641
        %7070 = vmatpush.bf16.msra.mxu0 %v6637
        %7071 = vmatmul.bf16.gmra.mxu0 %v6100
        %v7072 = vpop.f32.mrf.mxu0
        %v7073 = vadd.f32 %v7060, %v7072
        %v7074 = vpop.f32.mrf.mxu0
        %7075 = vdwg.mxu0
        %7076 = vmatpush.bf16.msra.mxu0 0
        %7077 = vmatpush.bf16.msra.mxu0 0
        %7078 = vmatpush.bf16.msra.mxu0 0
        %7079 = vmatpush.bf16.msra.mxu0 0
        %7080 = vmatpush.bf16.msra.mxu0 %v6681
        %7081 = vmatpush.bf16.msra.mxu0 %v6677
        %7082 = vmatpush.bf16.msra.mxu0 %v6673
        %7083 = vmatpush.bf16.msra.mxu0 %v6669
        %7084 = vmatmul.bf16.gmra.mxu0 %v6827
        %v7085 = vpop.f32.mrf.mxu0
        %v7086 = vadd.f32 %v7073, %v7085
        %v7087 = vpop.f32.mrf.mxu0
        %7088 = vdwg.mxu0
        %vm7089 = vcmp.gt.f32.partialorder %v6891, 0.0
        %vm7090 = vcmp.gt.f32.partialorder %v6956, 0.0
        %vm7091 = vcmp.gt.f32.partialorder %v7021, 0.0
        %vm7092 = vcmp.gt.f32.partialorder %v7086, 0.0
        %v7093 = vmul.f32 %v6891, 0.01
        %v7094 = vmul.f32 %v6956, 0.01
        %v7095 = vmul.f32 %v7021, 0.01
        %v7096 = vmul.f32 %v7086, 0.01
        %v7097 = vsel %vm7089, %v6891, %v7093
        %v7098 = vsel %vm7090, %v6956, %v7094
        %v7099 = vsel %vm7091, %v7021, %v7095
        %v7100 = vsel %vm7092, %v7086, %v7096
        %v7101 = vld [vmem:[#allocation3] sm:$0x3]
        %v7102 = vpack.c.bf16 %v7097, %v7097
        %v7103 = vpack.c.bf16 %v7098, %v7098
        %v7104 = vpack.c.bf16 %v7099, %v7099
        %v7105 = vpack.c.bf16 %v7100, %v7100
        %v7106 = vld [vmem:[%s545] sm:$0xf]
        %v7107 = vld [vmem:[%s545 + $0x4] sm:$0xf]
        %v7108 = vld [vmem:[%s545 + $0x8] sm:$0xf]
        %v7109 = vld [vmem:[%s545 + $0xc] sm:$0xf]
        %v7110 = vld [vmem:[%s545 + $0x10] sm:$0xf]
        %v7111 = vld [vmem:[%s545 + $0x14] sm:$0xf]
        %v7112 = vld [vmem:[%s545 + $0x18] sm:$0xf]
        %v7113 = vld [vmem:[%s545 + $0x1c] sm:$0xf]
        %v7114 = vld [vmem:[%s545 + $0x20] sm:$0xf]
        %v7115 = vld [vmem:[%s545 + $0x24] sm:$0xf]
        %v7116 = vld [vmem:[%s545 + $0x28] sm:$0xf]
        %v7117 = vld [vmem:[%s545 + $0x2c] sm:$0xf]
        %v7118 = vld [vmem:[%s545 + $0x30] sm:$0xf]
        %v7119 = vld [vmem:[%s545 + $0x34] sm:$0xf]
        %v7120 = vld [vmem:[%s545 + $0x38] sm:$0xf]
        %v7121 = vld [vmem:[%s545 + $0x3c] sm:$0xf]
        %v7122 = vld [vmem:[%s545 + $0x40] sm:$0xf]
        %v7123 = vld [vmem:[%s545 + $0x44] sm:$0xf]
        %v7124 = vld [vmem:[%s545 + $0x48] sm:$0xf]
        %v7125 = vld [vmem:[%s545 + $0x4c] sm:$0xf]
        %v7126 = vld [vmem:[%s545 + $0x50] sm:$0xf]
        %v7127 = vld [vmem:[%s545 + $0x54] sm:$0xf]
        %v7128 = vld [vmem:[%s545 + $0x58] sm:$0xf]
        %v7129 = vld [vmem:[%s545 + $0x5c] sm:$0xf]
        %v7130 = vld [vmem:[%s545 + $0x60] sm:$0xf]
        %v7131 = vld [vmem:[%s545 + $0x64] sm:$0xf]
        %v7132 = vld [vmem:[%s545 + $0x68] sm:$0xf]
        %v7133 = vld [vmem:[%s545 + $0x6c] sm:$0xf]
        %v7134 = vld [vmem:[%s545 + $0x70] sm:$0xf]
        %v7135 = vld [vmem:[%s545 + $0x74] sm:$0xf]
        %v7136 = vld [vmem:[%s545 + $0x78] sm:$0xf]
        %v7137 = vld [vmem:[%s545 + $0x7c] sm:$0xf]
        %v7138 = vld [vmem:[%s545 + $0x80] sm:$0xf]
        %v7139 = vld [vmem:[%s545 + $0x84] sm:$0xf]
        %v7140 = vld [vmem:[%s545 + $0x88] sm:$0xf]
        %v7141 = vld [vmem:[%s545 + $0x8c] sm:$0xf]
        %v7142 = vld [vmem:[%s545 + $0x90] sm:$0xf]
        %v7143 = vld [vmem:[%s545 + $0x94] sm:$0xf]
        %v7144 = vld [vmem:[%s545 + $0x98] sm:$0xf]
        %v7145 = vld [vmem:[%s545 + $0x9c] sm:$0xf]
        %v7146 = vld [vmem:[%s545 + $0xa0] sm:$0xf]
        %v7147 = vld [vmem:[%s545 + $0xa4] sm:$0xf]
        %v7148 = vld [vmem:[%s545 + $0xa8] sm:$0xf]
        %v7149 = vld [vmem:[%s545 + $0xac] sm:$0xf]
        %v7150 = vld [vmem:[%s545 + $0xb0] sm:$0xf]
        %v7151 = vld [vmem:[%s545 + $0xb4] sm:$0xf]
        %v7152 = vld [vmem:[%s545 + $0xb8] sm:$0xf]
        %v7153 = vld [vmem:[%s545 + $0xbc] sm:$0xf]
        %v7154 = vld [vmem:[%s545 + $0xc0] sm:$0xf]
        %v7155 = vld [vmem:[%s545 + $0xc4] sm:$0xf]
        %v7156 = vld [vmem:[%s545 + $0xc8] sm:$0xf]
        %v7157 = vld [vmem:[%s545 + $0xcc] sm:$0xf]
        %v7158 = vld [vmem:[%s545 + $0xd0] sm:$0xf]
        %v7159 = vld [vmem:[%s545 + $0xd4] sm:$0xf]
        %v7160 = vld [vmem:[%s545 + $0xd8] sm:$0xf]
        %v7161 = vld [vmem:[%s545 + $0xdc] sm:$0xf]
        %v7162 = vld [vmem:[%s545 + $0xe0] sm:$0xf]
        %v7163 = vld [vmem:[%s545 + $0xe4] sm:$0xf]
        %v7164 = vld [vmem:[%s545 + $0xe8] sm:$0xf]
        %v7165 = vld [vmem:[%s545 + $0xec] sm:$0xf]
        %v7166 = vld [vmem:[%s545 + $0xf0] sm:$0xf]
        %v7167 = vld [vmem:[%s545 + $0xf4] sm:$0xf]
        %v7168 = vld [vmem:[%s545 + $0xf8] sm:$0xf]
        %v7169 = vld [vmem:[%s545 + $0xfc] sm:$0xf]
        %v7234 = vunpack.c.l.b16 %v7106
        %v7235 = vunpack.c.l.b16 %v7107
        %v7236 = vunpack.c.l.b16 %v7108
        %v7237 = vunpack.c.l.b16 %v7109
        %v7238 = vunpack.c.l.b16 %v7110
        %v7239 = vunpack.c.l.b16 %v7111
        %v7240 = vunpack.c.l.b16 %v7112
        %v7241 = vunpack.c.l.b16 %v7113
        %v7242 = vunpack.c.l.b16 %v7114
        %v7243 = vunpack.c.l.b16 %v7115
        %v7244 = vunpack.c.l.b16 %v7116
        %v7245 = vunpack.c.l.b16 %v7117
        %v7246 = vunpack.c.l.b16 %v7118
        %v7247 = vunpack.c.l.b16 %v7119
        %v7248 = vunpack.c.l.b16 %v7120
        %v7249 = vunpack.c.l.b16 %v7121
        %v7250 = vunpack.c.l.b16 %v7122
        %v7251 = vunpack.c.l.b16 %v7123
        %v7252 = vunpack.c.l.b16 %v7124
        %v7253 = vunpack.c.l.b16 %v7125
        %v7254 = vunpack.c.l.b16 %v7126
        %v7255 = vunpack.c.l.b16 %v7127
        %v7256 = vunpack.c.l.b16 %v7128
        %v7257 = vunpack.c.l.b16 %v7129
        %v7258 = vunpack.c.l.b16 %v7130
        %v7259 = vunpack.c.l.b16 %v7131
        %v7260 = vunpack.c.l.b16 %v7132
        %v7261 = vunpack.c.l.b16 %v7133
        %v7262 = vunpack.c.l.b16 %v7134
        %v7263 = vunpack.c.l.b16 %v7135
        %v7264 = vunpack.c.l.b16 %v7136
        %v7265 = vunpack.c.l.b16 %v7137
        %v7266 = vunpack.c.l.b16 %v7138
        %v7267 = vunpack.c.l.b16 %v7139
        %v7268 = vunpack.c.l.b16 %v7140
        %v7269 = vunpack.c.l.b16 %v7141
        %v7270 = vunpack.c.l.b16 %v7142
        %v7271 = vunpack.c.l.b16 %v7143
        %v7272 = vunpack.c.l.b16 %v7144
        %v7273 = vunpack.c.l.b16 %v7145
        %v7274 = vunpack.c.l.b16 %v7146
        %v7275 = vunpack.c.l.b16 %v7147
        %v7276 = vunpack.c.l.b16 %v7148
        %v7277 = vunpack.c.l.b16 %v7149
        %v7278 = vunpack.c.l.b16 %v7150
        %v7279 = vunpack.c.l.b16 %v7151
        %v7280 = vunpack.c.l.b16 %v7152
        %v7281 = vunpack.c.l.b16 %v7153
        %v7282 = vunpack.c.l.b16 %v7154
        %v7283 = vunpack.c.l.b16 %v7155
        %v7284 = vunpack.c.l.b16 %v7156
        %v7285 = vunpack.c.l.b16 %v7157
        %v7286 = vunpack.c.l.b16 %v7158
        %v7287 = vunpack.c.l.b16 %v7159
        %v7288 = vunpack.c.l.b16 %v7160
        %v7289 = vunpack.c.l.b16 %v7161
        %v7290 = vunpack.c.l.b16 %v7162
        %v7291 = vunpack.c.l.b16 %v7163
        %v7292 = vunpack.c.l.b16 %v7164
        %v7293 = vunpack.c.l.b16 %v7165
        %v7294 = vunpack.c.l.b16 %v7166
        %v7295 = vunpack.c.l.b16 %v7167
        %v7296 = vunpack.c.l.b16 %v7168
        %v7297 = vunpack.c.l.b16 %v7169
        %v7298 = vpack.c.b16 %v7235, %v7234
        %v7299 = vpack.c.b16 %v7237, %v7236
        %v7300 = vpack.c.b16 %v7239, %v7238
        %v7301 = vpack.c.b16 %v7241, %v7240
        %v7302 = vpack.c.b16 %v7243, %v7242
        %v7303 = vpack.c.b16 %v7245, %v7244
        %v7304 = vpack.c.b16 %v7247, %v7246
        %v7305 = vpack.c.b16 %v7249, %v7248
        %v7306 = vpack.c.b16 %v7251, %v7250
        %v7307 = vpack.c.b16 %v7253, %v7252
        %v7308 = vpack.c.b16 %v7255, %v7254
        %v7309 = vpack.c.b16 %v7257, %v7256
        %v7310 = vpack.c.b16 %v7259, %v7258
        %v7311 = vpack.c.b16 %v7261, %v7260
        %v7312 = vpack.c.b16 %v7263, %v7262
        %v7313 = vpack.c.b16 %v7265, %v7264
        %v7314 = vpack.c.b16 %v7267, %v7266
        %v7315 = vpack.c.b16 %v7269, %v7268
        %v7316 = vpack.c.b16 %v7271, %v7270
        %v7317 = vpack.c.b16 %v7273, %v7272
        %v7318 = vpack.c.b16 %v7275, %v7274
        %v7319 = vpack.c.b16 %v7277, %v7276
        %v7320 = vpack.c.b16 %v7279, %v7278
        %v7321 = vpack.c.b16 %v7281, %v7280
        %v7322 = vpack.c.b16 %v7283, %v7282
        %v7323 = vpack.c.b16 %v7285, %v7284
        %v7324 = vpack.c.b16 %v7287, %v7286
        %v7325 = vpack.c.b16 %v7289, %v7288
        %v7326 = vpack.c.b16 %v7291, %v7290
        %v7327 = vpack.c.b16 %v7293, %v7292
        %v7328 = vpack.c.b16 %v7295, %v7294
        %v7329 = vpack.c.b16 %v7297, %v7296
        %7362 = vmatpush.bf16.msra.mxu0 %v7305
        %7363 = vmatpush.bf16.msra.mxu0 %v7304
        %7364 = vmatpush.bf16.msra.mxu0 %v7303
        %7365 = vmatpush.bf16.msra.mxu0 %v7302
        %7366 = vmatpush.bf16.msra.mxu0 %v7301
        %7367 = vmatpush.bf16.msra.mxu0 %v7300
        %7368 = vmatpush.bf16.msra.mxu0 %v7299
        %7369 = vmatpush.bf16.msra.mxu0 %v7298
        %7370 = vmatmul.bf16.gmra.mxu0 %v7102
        %v7371 = vpop.f32.mrf.mxu0
        %v7372 = vadd.f32 0.0, %v7371
        %v7373 = vpop.f32.mrf.mxu0
        %7374 = vdwg.mxu0
        %7375 = vmatpush.bf16.msra.mxu0 %v7313
        %7376 = vmatpush.bf16.msra.mxu0 %v7312
        %7377 = vmatpush.bf16.msra.mxu0 %v7311
        %7378 = vmatpush.bf16.msra.mxu0 %v7310
        %7379 = vmatpush.bf16.msra.mxu0 %v7309
        %7380 = vmatpush.bf16.msra.mxu0 %v7308
        %7381 = vmatpush.bf16.msra.mxu0 %v7307
        %7382 = vmatpush.bf16.msra.mxu0 %v7306
        %7383 = vmatmul.bf16.gmra.mxu0 %v7103
        %v7384 = vpop.f32.mrf.mxu0
        %v7385 = vadd.f32 %v7372, %v7384
        %v7386 = vpop.f32.mrf.mxu0
        %7387 = vdwg.mxu0
        %7388 = vmatpush.bf16.msra.mxu0 %v7321
        %7389 = vmatpush.bf16.msra.mxu0 %v7320
        %7390 = vmatpush.bf16.msra.mxu0 %v7319
        %7391 = vmatpush.bf16.msra.mxu0 %v7318
        %7392 = vmatpush.bf16.msra.mxu0 %v7317
        %7393 = vmatpush.bf16.msra.mxu0 %v7316
        %7394 = vmatpush.bf16.msra.mxu0 %v7315
        %7395 = vmatpush.bf16.msra.mxu0 %v7314
        %7396 = vmatmul.bf16.gmra.mxu0 %v7104
        %v7397 = vpop.f32.mrf.mxu0
        %v7398 = vadd.f32 %v7385, %v7397
        %v7399 = vpop.f32.mrf.mxu0
        %7400 = vdwg.mxu0
        %7401 = vmatpush.bf16.msra.mxu0 %v7329
        %7402 = vmatpush.bf16.msra.mxu0 %v7328
        %7403 = vmatpush.bf16.msra.mxu0 %v7327
        %7404 = vmatpush.bf16.msra.mxu0 %v7326
        %7405 = vmatpush.bf16.msra.mxu0 %v7325
        %7406 = vmatpush.bf16.msra.mxu0 %v7324
        %7407 = vmatpush.bf16.msra.mxu0 %v7323
        %7408 = vmatpush.bf16.msra.mxu0 %v7322
        %7409 = vmatmul.bf16.gmra.mxu0 %v7105
        %v7410 = vpop.f32.mrf.mxu0
        %v7411 = vadd.f32 %v7398, %v7410
        %v7412 = vpop.f32.mrf.mxu0
        %7413 = vdwg.mxu0
        %v7414 = vadd.f32 %v7101, %v7411
        %vm7415 = vcmask 9216
        %7416 = vst.msk [vmem:[#allocation3] sm:$0x3] %vm7415, %v7414
        %p7417 = scmp.eq.s32.totalorder %s30, 3
        // Predicated region
        $region101: #{rawhammer_forward.1} parent=63 // pred_check
          %p7418 = pneg %p7417
        $region102: #{rawhammer_forward.1} parent=63 // pred_check_branch
          %7420 = sbr.rel (%p7418) target = $region104
        $region103: #{rawhammer_forward.1} parent=63 // pred_region
          %v7421 = vld [vmem:[#allocation3] sm:$0x3]
          %v7422 = vld [vmem:[#allocation16] sm:$0x1]
          %v7424 = vperm.slane %v7422, 0
          %v7426 = vadd.f32 %v7421, %v7424
          %v7427 = vsel %vm7415, %v7426, -inf
          %7428 = vmax.xlane.f32.xlu0 %v7427
          %v7429 = vpop.xlane.xlu0 %7428
          %v7430 = vsub.f32 %v7426, %v7429
          %v7431 = vmul.f32 %v7430, 1.442695
          %v7432 = vpow.pop %v7431
          %v7433 = vsel %vm7415, %v7432, 0.0
          %7434 = vadd.xlane.f32.xlu0 %v7433
          %v7435 = vpop.xlane.xlu0 %7434
          %v7436 = vrcp.pop %v7435
          %v7437 = vmul.f32 %v7435, %v7436
          %v7438 = vsub.f32 1.0, %v7437
          %v7439 = vmul.f32 %v7436, %v7438
          %v7440 = vadd.f32 %v7436, %v7439
          %vm7441 = vweird.f32 %v7435
          %vm7442 = vweird.f32 %v7436
          %vm7443 = vmor %vm7441, %vm7442
          %v7444 = vsel %vm7443, %v7436, %v7440
          %v7445 = vand.u32 2147483647, %v7435
          %vm7446 = vcmp.eq.f32.partialorder %v7445, 8.507059e+37
          %v7447 = vand.u32 %v7435, 2147483648
          %v7448 = vor.u32 1.1754944e-38, %v7447
          %v7449 = vsel %vm7446, %v7448, %v7444
          %v7450 = vmul.f32 %v7432, %v7449
          %7451 = vst.msk [vmem:[#allocation18] sm:$0x3] %vm7415, %v7450
        $region104: #{rawhammer_forward.1} parent=63 // pred_fallthru
          _
        // Predicated region
        $region105: #{rawhammer_forward.1} parent=63 // pred_check
          %p7452 = pneg %p289
        $region106: #{rawhammer_forward.1} parent=63 // pred_check_branch
          %7454 = sbr.rel (%p7452) target = $region108
        $region107: #{rawhammer_forward.1} parent=63 // pred_region
          %7456 = vsyncadd [#allocation6], 0
          %s7458 = sshll.u32 [#allocation18], 4
          %s7459 = int_to_ptr.vmem [resolvable:$true] %s7458
          %s7460 = sshll.u32 %s11, 4
          %s7461 = int_to_ptr.hbm [resolvable:$true] %s7460
          %7463 = dma.vmem_to_hbm [thread:$0]  %s7459, 32, %s7461, [#allocation6]
        $region108: #{rawhammer_forward.1} parent=63 // pred_fallthru
          _
        // Predicated region
        $region109: #{rawhammer_forward.1} parent=63 // pred_check
          %p7464 = pneg %p289
        $region110: #{rawhammer_forward.1} parent=63 // pred_check_branch
          %7466 = sbr.rel (%p7464) target = $region112
        $region111: #{rawhammer_forward.1} parent=63 // pred_region
          %7468 = dma.done [#allocation6], 32
        $region112: #{rawhammer_forward.1} parent=63 // pred_fallthru
          _
      $region64: #{rawhammer_forward.1} parent=5 // pred_fallthru
        _
      %p7469 = scmp.le.s32.totalorder 2, %s25
      // Predicated region
      $region113: #{rawhammer_forward.1} parent=5 // pred_check
        %p7470 = pneg %p7469
      $region114: #{rawhammer_forward.1} parent=5 // pred_check_branch
        %7472 = sbr.rel (%p7470) target = $region116
      $region115: #{rawhammer_forward.1} parent=5 // pred_region
        %s7473 = ssub.s32 %s25, 2
      $region116: #{rawhammer_forward.1} parent=5 // pred_fallthru
        _
    $region6: #{rawhammer_forward.1} parent=1 // loop_footer
      %s29 = sadd.s32 1, %s25
    $region7: #{rawhammer_forward.1} parent=1 // loop_footer_branch
      %24 = sbr.rel target = $region3
    $region8: #{rawhammer_forward.1} parent=1 // loop_exit
      _
    %7474 = vsyncpa [#allocation5], 1
    %s7475 = scalar_lea.sflag [#allocation5], 1
    %7476 = vsyncpa %s7475, 1
    %7477 = vsyncpa [#allocation8], 1
    %7478 = vsyncpa [#allocation11], 1
    %7479 = vsyncpa [#allocation14], 1
    %s7480 = scalar_lea.sflag [#allocation14], 1
    %7481 = vsyncpa %s7480, 1
    %7482 = vsyncpa [#allocation17], 1
    %7483 = vsyncpa [#allocation6], 1
    %s7484 = scalar_lea.sflag [#allocation6], 1
    %7485 = vsyncpa %s7484, 1

</llo_original>
